<compile_context>
chip_gen: v7x
topology: tpu7x:2x2x1
jax: 0.10.0
libtpu: 0.0.40
codegen_flags: <defaults>
</compile_context>

<pallas_src>
import functools

import jax
import jax.numpy as jnp
from jax.experimental import pallas as pl
from jax.experimental.pallas import tpu as pltpu

_VMEM_LIMIT = 32 * 1024 * 1024  # safe on v5e/v6e (128 MiB) and v7x (64 MiB)


def _round_up(a, b):
    return (a + b - 1) // b * b


# ----------------------------- Pallas kernels -----------------------------

def _gemm_fused_kernel(x_ref, w_ref, b_ref, s_ref, h_ref, o_ref, st_ref, *,
                       slope_in, m_valid, tm):
    """y = lrelu(x*s+h, slope_in) @ w + b, plus per-tile partial batch stats.

    The prologue is the identity when s=1, h=0, slope_in=1 (no-prologue case).
    """
    i = pl.program_id(0)
    t = x_ref[...] * s_ref[...] + h_ref[...]
    x = jnp.where(t >= 0, t, slope_in * t)
    y = jnp.dot(x, w_ref[...], preferred_element_type=jnp.float32) + b_ref[...]
    o_ref[...] = y
    # Fused per-tile partial sums / sums-of-squares (rows past m_valid are the
    # M-padding and are masked out of the statistics).
    row = i * tm + jax.lax.broadcasted_iota(jnp.int32, (tm, 1), 0)
    yv = jnp.where(row < m_valid, y, 0.0)
    st_ref[0, 0:1, :] = jnp.sum(yv, axis=0, keepdims=True)
    st_ref[0, 1:2, :] = jnp.sum(yv * yv, axis=0, keepdims=True)


def pallas_gemm_bn_stats(x, w, b, s_in=None, h_in=None, slope_in=1.0,
                         tile_m=512):
    """Fused GEMM: optional BN+LeakyReLU prologue, bias, and batch stats.

    x:(M,K) w:(K,N) b:(N,) -> (y:(M,N) f32, mean:(N,), biased var:(N,)).
    """
    M, K = x.shape
    N = w.shape[1]
    if s_in is None:
        s_in = jnp.ones((K,), jnp.float32)
    if h_in is None:
        h_in = jnp.zeros((K,), jnp.float32)

    tm = min(tile_m, _round_up(M, 8))
    Mp = _round_up(M, tm)
    if Mp != M:
        x = jnp.pad(x, ((0, Mp - M), (0, 0)))
    nt = Mp // tm

    y, st = pl.pallas_call(
        functools.partial(_gemm_fused_kernel, slope_in=slope_in, m_valid=M,
                          tm=tm),
        out_shape=(jax.ShapeDtypeStruct((Mp, N), jnp.float32),
                   jax.ShapeDtypeStruct((nt, 2, N), jnp.float32)),
        grid_spec=pltpu.PrefetchScalarGridSpec(
            num_scalar_prefetch=0, grid=(nt,),
            in_specs=[pl.BlockSpec((tm, K), lambda i: (i, 0)),
                      pl.BlockSpec((K, N), lambda i: (0, 0)),
                      pl.BlockSpec((1, N), lambda i: (0, 0)),
                      pl.BlockSpec((1, K), lambda i: (0, 0)),
                      pl.BlockSpec((1, K), lambda i: (0, 0))],
            out_specs=[pl.BlockSpec((tm, N), lambda i: (i, 0)),
                       pl.BlockSpec((1, 2, N), lambda i: (i, 0, 0))]),
        compiler_params=pltpu.CompilerParams(
            dimension_semantics=("parallel",),
            vmem_limit_bytes=_VMEM_LIMIT),
    )(x, w, b.reshape(1, N), s_in.reshape(1, K), h_in.reshape(1, K))

    sums = jnp.sum(st, axis=0)                      # (2, N) tiny JAX reduce
    mean = sums[0] / M
    # E[x^2]-mean^2 in f32, clamped; fine at these magnitudes / batch sizes.
    var = jnp.maximum(sums[1] / M - mean * mean, 0.0)
    if Mp != M:
        y = y[:M]
    return y, mean, var


def _conv3x3_kernel(ph_ref, w_ref, b_ref, o_ref, st_ref, *,
                    stride, Ho, Wo, Hps):
    """3x3 conv (pad=1, given stride) on one image + bias + batch-stat partials.

    ph_ref holds the zero-padded activation, pre-split into stride*stride
    spatial phases stacked along the row axis, so every one of the 9 taps is a
    contiguous (Ho, Wo, C) window (no in-kernel strided slicing).
    """
    C = w_ref.shape[1]
    acc = jnp.zeros((Ho * Wo, C), jnp.float32)
    for di in range(3):
        for dj in range(3):
            phase = (di % stride) * stride + (dj % stride)
            r0 = phase * Hps + di // stride
            c0 = dj // stride
            win = ph_ref[0, r0:r0 + Ho, c0:c0 + Wo, :]          # (Ho, Wo, C)
            acc = acc + jnp.dot(win.reshape(Ho * Wo, C),
                                w_ref[di * 3 + dj],
                                preferred_element_type=jnp.float32)
    y = acc + b_ref[...]
    o_ref[0] = y
    st_ref[0, 0:1, :] = jnp.sum(y, axis=0, keepdims=True)
    st_ref[0, 1:2, :] = jnp.sum(y * y, axis=0, keepdims=True)


def pallas_conv3x3_stats(a1, w2, b2, stride):
    """3x3 conv, padding=1, given stride, fused batch stats.

    a1: (N,H,W,C) already activated; w2: (3,3,C,C) HWIO; b2: (C,).
    Returns (y2:(N*Ho*Wo, C), mean, var, (Ho, Wo)).
    """
    N, H, W, C = a1.shape
    s = stride
    Ho = (H + 2 - 3) // s + 1
    Wo = (W + 2 - 3) // s + 1

    # Zero-pad (conv padding) and split into s*s spatial phases so the kernel
    # only ever needs contiguous windows.  Total size ~= one copy of a1 — this
    # replaces the 9x-expanded im2col tensor of the previous version.
    a1p = jnp.pad(a1, ((0, 0), (1, 1), (1, 1), (0, 0)))
    Hp2 = _round_up(H + 2, s)
    Wp2 = _round_up(W + 2, s)
    if (Hp2, Wp2) != (H + 2, W + 2):
        a1p = jnp.pad(a1p, ((0, 0), (0, Hp2 - (H + 2)),
                            (0, Wp2 - (W + 2)), (0, 0)))
    Hps, Wps = Hp2 // s, Wp2 // s
    phases = jnp.stack(
        [a1p[:, pi::s, pj::s, :] for pi in range(s) for pj in range(s)],
        axis=1).reshape(N, s * s * Hps, Wps, C)
    w2r = w2.reshape(9, C, C)
    M2 = N * Ho * Wo

    y2, st = pl.pallas_call(
        functools.partial(_conv3x3_kernel, stride=s, Ho=Ho, Wo=Wo, Hps=Hps),
        out_shape=(jax.ShapeDtypeStruct((N, Ho * Wo, C), jnp.float32),
                   jax.ShapeDtypeStruct((N, 2, C), jnp.float32)),
        grid_spec=pltpu.PrefetchScalarGridSpec(
            num_scalar_prefetch=0, grid=(N,),
            in_specs=[pl.BlockSpec((1, s * s * Hps, Wps, C),
                                   lambda n: (n, 0, 0, 0)),
                      pl.BlockSpec((9, C, C), lambda n: (0, 0, 0)),
                      pl.BlockSpec((1, C), lambda n: (0, 0))],
            out_specs=[pl.BlockSpec((1, Ho * Wo, C), lambda n: (n, 0, 0)),
                       pl.BlockSpec((1, 2, C), lambda n: (n, 0, 0))]),
        compiler_params=pltpu.CompilerParams(
            dimension_semantics=("parallel",),
            vmem_limit_bytes=_VMEM_LIMIT),
    )(phases, w2r, b2.reshape(1, C))

    sums = jnp.sum(st, axis=0)
    mean = sums[0] / M2
    var = jnp.maximum(sums[1] / M2 - mean * mean, 0.0)
    return y2.reshape(M2, C), mean, var, (Ho, Wo)


def _residual_kernel(z_ref, zs_ref, zh_ref, x_ref, xs_ref, xh_ref, o_ref, *,
                     slope):
    y = (z_ref[...] * zs_ref[...] + zh_ref[...]
         + x_ref[...] * xs_ref[...] + xh_ref[...])
    o_ref[...] = jnp.where(y >= 0, y, slope * y)


def pallas_residual_bn_add_act(z, zs, zh, x, xs, xh, slope, tile_m=1024):
    """LeakyReLU(BN(z) + BN/identity(x)) fused; BN as per-channel scale/shift."""
    M, C = z.shape
    tm = min(tile_m, _round_up(M, 8))
    Mp = _round_up(M, tm)
    if Mp != M:
        z = jnp.pad(z, ((0, Mp - M), (0, 0)))
        x = jnp.pad(x, ((0, Mp - M), (0, 0)))
    nt = Mp // tm

    def mat():
        return pl.BlockSpec((tm, C), lambda i: (i, 0))

    def vec():
        return pl.BlockSpec((1, C), lambda i: (0, 0))

    out = pl.pallas_call(
        functools.partial(_residual_kernel, slope=slope),
        out_shape=jax.ShapeDtypeStruct((Mp, C), jnp.float32),
        grid_spec=pltpu.PrefetchScalarGridSpec(
            num_scalar_prefetch=0, grid=(nt,),
            in_specs=[mat(), vec(), vec(), mat(), vec(), vec()],
            out_specs=mat()),
        compiler_params=pltpu.CompilerParams(
            dimension_semantics=("parallel",),
            vmem_limit_bytes=_VMEM_LIMIT),
    )(z, zs.reshape(1, C), zh.reshape(1, C), x, xs.reshape(1, C),
      xh.reshape(1, C))
    return out[:M] if Mp != M else out


# ------------------------------- JAX glue ---------------------------------

def leaky(x, slope):
    return jnp.where(x >= 0, x, slope * x)


def bn_scale_shift(gamma, beta, mean, var, eps=1e-5):
    scale = gamma / jnp.sqrt(var + eps)
    shift = beta - mean * scale
    return scale, shift


def init_params(key, cin, cout, subsample):
    c4 = cout * 4
    ks = jax.random.split(key, 16)
    p = {
        'w1': 0.2 * jax.random.normal(ks[0], (cin, cout), jnp.float32),
        'b1': 0.1 * jax.random.normal(ks[1], (cout,), jnp.float32),
        'g1': 1.0 + 0.1 * jax.random.normal(ks[2], (cout,), jnp.float32),
        'be1': 0.1 * jax.random.normal(ks[3], (cout,), jnp.float32),
        'w2': 0.1 * jax.random.normal(ks[4], (3, 3, cout, cout), jnp.float32),
        'b2': 0.1 * jax.random.normal(ks[5], (cout,), jnp.float32),
        'g2': 1.0 + 0.1 * jax.random.normal(ks[6], (cout,), jnp.float32),
        'be2': 0.1 * jax.random.normal(ks[7], (cout,), jnp.float32),
        'w3': 0.2 * jax.random.normal(ks[8], (cout, c4), jnp.float32),
        'b3': 0.1 * jax.random.normal(ks[9], (c4,), jnp.float32),
        'g3': 1.0 + 0.1 * jax.random.normal(ks[10], (c4,), jnp.float32),
        'be3': 0.1 * jax.random.normal(ks[11], (c4,), jnp.float32),
    }
    if subsample:
        p['wd'] = 0.2 * jax.random.normal(ks[12], (cin, c4), jnp.float32)
        p['bd'] = 0.1 * jax.random.normal(ks[13], (c4,), jnp.float32)
        p['gd'] = 1.0 + 0.1 * jax.random.normal(ks[14], (c4,), jnp.float32)
        p['bed'] = 0.1 * jax.random.normal(ks[15], (c4,), jnp.float32)
    return p


def resblock_forward(x_nchw, p, stride, subsample):
    """Matches ResBlock.forward semantics (training-mode BatchNorm)."""
    x = jnp.transpose(x_nchw, (0, 2, 3, 1)).astype(jnp.float32)  # NCHW -> NHWC
    N, H, W, Cin = x.shape
    cout = p['w1'].shape[1]
    c4 = p['w3'].shape[1]
    if not subsample:
        # Identity skip only makes sense when shapes line up (PyTorch would
        # raise at the residual add otherwise).
        assert stride == 1 and Cin == c4, \
            "identity skip requires stride==1 and in_channels == 4*out_channels"

    # conv1 1x1 + fused batch stats (stats come out of the GEMM kernel)
    y1, m1, v1 = pallas_gemm_bn_stats(x.reshape(-1, Cin), p['w1'], p['b1'])
    s1, h1 = bn_scale_shift(p['g1'], p['be1'], m1, v1)

    # conv2 3x3 (stride, pad=1) + fused batch stats.  BN1 + LeakyReLU(0.02) is
    # applied while building the padded / phase-split conv input (one XLA
    # fusion), so a1 never takes a standalone round trip and no 9x im2col
    # tensor is materialized.
    a1 = leaky(y1 * s1 + h1, 0.02).reshape(N, H, W, cout)
    y2, m2, v2, (Ho, Wo) = pallas_conv3x3_stats(a1, p['w2'], p['b2'], stride)
    s2, h2 = bn_scale_shift(p['g2'], p['be2'], m2, v2)

    # conv3 1x1 (4x expansion): BN2 + LeakyReLU(0.02) fused as the GEMM
    # prologue; batch stats of y3 fused as a second kernel output.
    y3, m3, v3 = pallas_gemm_bn_stats(y2, p['w3'], p['b3'],
                                      s_in=s2, h_in=h2, slope_in=0.02)
    s3, h3 = bn_scale_shift(p['g3'], p['be3'], m3, v3)

    # skip path
    if subsample:
        xs = x[:, ::stride, ::stride, :].reshape(-1, Cin)  # 1x1 conv, stride
        yd, md, vd = pallas_gemm_bn_stats(xs, p['wd'], p['bd'])
        sd, hd = bn_scale_shift(p['gd'], p['bed'], md, vd)
        skip, ss, sh = yd, sd, hd
    else:
        skip = x.reshape(-1, Cin)
        ss = jnp.ones((c4,), jnp.float32)
        sh = jnp.zeros((c4,), jnp.float32)

    # fused: BN(z) + BN/identity(skip), then F.leaky_relu (slope 0.01)
    out = pallas_residual_bn_add_act(y3, s3, h3, skip, ss, sh, 0.01)
    out = out.reshape(N, Ho, Wo, c4)
    return jnp.transpose(out, (0, 3, 1, 2))  # NHWC -> NCHW


# ---------------------- pure-JAX reference for checking --------------------

def resblock_reference(x_nchw, p, stride, subsample):
    x = jnp.transpose(x_nchw, (0, 2, 3, 1)).astype(jnp.float32)

    def conv(xx, w_hwio, b, s, pad):
        y = jax.lax.conv_general_dilated(
            xx, w_hwio, (s, s), pad, dimension_numbers=('NHWC', 'HWIO', 'NHWC'))
        return y + b

    def bn(xx, g, be):
        m = jnp.mean(xx, axis=(0, 1, 2))
        v = jnp.mean((xx - m) ** 2, axis=(0, 1, 2))
        return (xx - m) / jnp.sqrt(v + 1e-5) * g + be

    def lrelu(xx, s):
        return jnp.where(xx >= 0, xx, s * xx)

    z = conv(x, p['w1'].reshape(1, 1, *p['w1'].shape), p['b1'], 1, 'VALID')
    z = lrelu(bn(z, p['g1'], p['be1']), 0.02)
    z = conv(z, p['w2'], p['b2'], stride, ((1, 1), (1, 1)))
    z = lrelu(bn(z, p['g2'], p['be2']), 0.02)
    z = conv(z, p['w3'].reshape(1, 1, *p['w3'].shape), p['b3'], 1, 'VALID')
    z = bn(z, p['g3'], p['be3'])
    if subsample:
        xs = conv(x, p['wd'].reshape(1, 1, *p['wd'].shape), p['bd'], stride,
                  'VALID')
        xs = bn(xs, p['gd'], p['bed'])
    else:
        xs = x
    out = lrelu(z + xs, 0.01)
    return jnp.transpose(out, (0, 3, 1, 2))


if __name__ == "__main__":
    key = jax.random.PRNGKey(0)
    k_x1, k_p1, k_x2, k_p2 = jax.random.split(key, 4)

    fwd = jax.jit(resblock_forward, static_argnums=(2, 3))

    # Case 1: bottleneck with downsample branch (subsample=True, stride=2)
    x1 = jax.random.normal(k_x1, (2, 4, 16, 16), jnp.float32)
    p1 = init_params(k_p1, 4, 4, True)
    out1 = jax.block_until_ready(fwd(x1, p1, 2, True))
    ref1 = resblock_reference(x1, p1, 2, True)
    assert out1.shape == (2, 16, 8, 8), out1.shape
    assert jnp.allclose(out1, ref1, atol=1e-4, rtol=1e-4), \
        float(jnp.max(jnp.abs(out1 - ref1)))

    # Case 2: identity skip (subsample=False, stride=1, in_channels == 4*out)
    x2 = jax.random.normal(k_x2, (2, 16, 8, 8), jnp.float32)
    p2 = init_params(k_p2, 16, 4, False)
    out2 = jax.block_until_ready(fwd(x2, p2, 1, False))
    ref2 = resblock_reference(x2, p2, 1, False)
    assert out2.shape == (2, 16, 8, 8), out2.shape
    assert jnp.allclose(out2, ref2, atol=1e-4, rtol=1e-4), \
        float(jnp.max(jnp.abs(out2 - ref2)))

    print("KERNEL_OK")
</pallas_src>

<mosaic_0001>
module attributes {stable_mosaic.version = 11 : i64} {
  func.func @_gemm_fused_kernel(%arg0: i32, %arg1: memref<512x4xf32, #tpu.memory_space<vmem>>, %arg2: memref<4x4xf32, #tpu.memory_space<vmem>>, %arg3: memref<1x4xf32, #tpu.memory_space<vmem>>, %arg4: memref<1x4xf32, #tpu.memory_space<vmem>>, %arg5: memref<1x4xf32, #tpu.memory_space<vmem>>, %arg6: memref<512x4xf32, #tpu.memory_space<vmem>>, %arg7: memref<1x2x4xf32, #tpu.memory_space<vmem>>) attributes {dimension_semantics = [#tpu.dimension_semantics<parallel>], iteration_bounds = array<i64: 1>, scalar_prefetch = 0 : i64, scratch_operands = 0 : i64, tpu.core_type = #tpu.core_type<tc>, window_params = [{transform_indices = @transform_0, window_bounds = array<i64: 512, 4>}, {pipeline_mode = #tpu.pipeline_mode<synchronous>, transform_indices = @transform_1, window_bounds = array<i64: 4, 4>}, {pipeline_mode = #tpu.pipeline_mode<synchronous>, transform_indices = @transform_2, window_bounds = array<i64: 1, 4>}, {pipeline_mode = #tpu.pipeline_mode<synchronous>, transform_indices = @transform_3, window_bounds = array<i64: 1, 4>}, {pipeline_mode = #tpu.pipeline_mode<synchronous>, transform_indices = @transform_4, window_bounds = array<i64: 1, 4>}, {transform_indices = @transform_5, window_bounds = array<i64: 512, 4>}, {transform_indices = @transform_6, window_bounds = array<i64: 1, 2, 4>}]} {
    %c0 = arith.constant 0 : index
    %c0_0 = arith.constant 0 : index
    %0 = vector.load %arg1[%c0, %c0_0] : memref<512x4xf32, #tpu.memory_space<vmem>>, vector<512x4xf32>
    %c0_1 = arith.constant 0 : index
    %c0_2 = arith.constant 0 : index
    %1 = vector.load %arg4[%c0_1, %c0_2] : memref<1x4xf32, #tpu.memory_space<vmem>>, vector<1x4xf32>
    %2 = vector.broadcast %1 : vector<1x4xf32> to vector<512x4xf32>
    %3 = arith.mulf %0, %2 : vector<512x4xf32>
    %c0_3 = arith.constant 0 : index
    %c0_4 = arith.constant 0 : index
    %4 = vector.load %arg5[%c0_3, %c0_4] : memref<1x4xf32, #tpu.memory_space<vmem>>, vector<1x4xf32>
    %5 = vector.broadcast %4 : vector<1x4xf32> to vector<512x4xf32>
    %6 = arith.addf %3, %5 : vector<512x4xf32>
    %cst = arith.constant 0.000000e+00 : f32
    %7 = vector.broadcast %cst : f32 to vector<512x4xf32>
    %8 = arith.cmpf oge, %6, %7 : vector<512x4xf32>
    %cst_5 = arith.constant 1.000000e+00 : f32
    %9 = vector.broadcast %cst_5 : f32 to vector<512x4xf32>
    %10 = arith.mulf %9, %6 : vector<512x4xf32>
    %11 = arith.select %8, %6, %10 : vector<512x4xi1>, vector<512x4xf32>
    %c0_6 = arith.constant 0 : index
    %c0_7 = arith.constant 0 : index
    %12 = vector.load %arg2[%c0_6, %c0_7] : memref<4x4xf32, #tpu.memory_space<vmem>>, vector<4x4xf32>
    %cst_8 = arith.constant dense<0.000000e+00> : vector<512x4xf32>
    %13 = tpu.matmul %11, %12, %cst_8 {dimension_numbers = #tpu.dot_dimension_numbers<[1], [0], [0], [1], [0, 0, 1, 1], [], []>} : vector<512x4xf32>, vector<4x4xf32>, vector<512x4xf32> -> vector<512x4xf32>
    %c0_9 = arith.constant 0 : index
    %c0_10 = arith.constant 0 : index
    %14 = vector.load %arg3[%c0_9, %c0_10] : memref<1x4xf32, #tpu.memory_space<vmem>>, vector<1x4xf32>
    %15 = vector.broadcast %14 : vector<1x4xf32> to vector<512x4xf32>
    %16 = arith.addf %13, %15 : vector<512x4xf32>
    %c0_11 = arith.constant 0 : index
    %c0_12 = arith.constant 0 : index
    %17 = vector.load %arg6[%c0_11, %c0_12] : memref<512x4xf32, #tpu.memory_space<vmem>>, vector<512x4xf32>
    tpu.vector_store %arg6[%c0_11, %c0_12], %16 {strides = array<i32>} : memref<512x4xf32, #tpu.memory_space<vmem>>, vector<512x4xf32>,
    %c512_i32 = arith.constant 512 : i32
    %18 = arith.muli %arg0, %c512_i32 : i32
    %19 = tpu.iota {dimensions = array<i32: 0>} : vector<512x1xi32>
    %20 = vector.broadcast %18 : i32 to vector<512x1xi32>
    %21 = arith.addi %20, %19 : vector<512x1xi32>
    %c512_i32_13 = arith.constant 512 : i32
    %22 = vector.broadcast %c512_i32_13 : i32 to vector<512x1xi32>
    %23 = arith.cmpi slt, %21, %22 : vector<512x1xi32>
    %cst_14 = arith.constant 0.000000e+00 : f32
    %24 = vector.shape_cast %23 : vector<512x1xi1> to vector<512x1xi1>
    %25 = vector.broadcast %24 : vector<512x1xi1> to vector<512x4xi1>
    %26 = vector.broadcast %cst_14 : f32 to vector<512x4xf32>
    %27 = arith.select %25, %16, %26 : vector<512x4xi1>, vector<512x4xf32>
    %cst_15 = arith.constant dense<0.000000e+00> : vector<4xf32>
    %28 = vector.multi_reduction <add>, %27, %cst_15 [0] : vector<512x4xf32> to vector<4xf32>
    %29 = vector.shape_cast %28 : vector<4xf32> to vector<1x4xf32>
    %c0_16 = arith.constant 0 : index
    %c0_17 = arith.constant 0 : index
    %c0_18 = arith.constant 0 : index
    %30 = vector.load %arg7[%c0_16, %c0_17, %c0_18] : memref<1x2x4xf32, #tpu.memory_space<vmem>>, vector<1x1x4xf32>
    %31 = vector.shape_cast %30 : vector<1x1x4xf32> to vector<1x4xf32>
    %32 = vector.shape_cast %29 : vector<1x4xf32> to vector<1x1x4xf32>
    tpu.vector_store %arg7[%c0_16, %c0_17, %c0_18], %32 {strides = array<i32>} : memref<1x2x4xf32, #tpu.memory_space<vmem>>, vector<1x1x4xf32>,
    %33 = arith.mulf %27, %27 : vector<512x4xf32>
    %cst_19 = arith.constant dense<0.000000e+00> : vector<4xf32>
    %34 = vector.multi_reduction <add>, %33, %cst_19 [0] : vector<512x4xf32> to vector<4xf32>
    %35 = vector.shape_cast %34 : vector<4xf32> to vector<1x4xf32>
    %c0_20 = arith.constant 0 : index
    %c1 = arith.constant 1 : index
    %c0_21 = arith.constant 0 : index
    %36 = vector.load %arg7[%c0_20, %c1, %c0_21] : memref<1x2x4xf32, #tpu.memory_space<vmem>>, vector<1x1x4xf32>
    %37 = vector.shape_cast %36 : vector<1x1x4xf32> to vector<1x4xf32>
    %38 = vector.shape_cast %35 : vector<1x4xf32> to vector<1x1x4xf32>
    tpu.vector_store %arg7[%c0_20, %c1, %c0_21], %38 {strides = array<i32>} : memref<1x2x4xf32, #tpu.memory_space<vmem>>, vector<1x1x4xf32>,
    return
  }
  func.func @transform_0(%arg0: i32) -> (i32, i32) {
    %c0_i32 = arith.constant 0 : i32
    %c0_i32_0 = arith.constant 0 : i32
    return %arg0, %c0_i32 : i32, i32
  }
  func.func @transform_1(%arg0: i32) -> (i32, i32) {
    %c0_i32 = arith.constant 0 : i32
    %c0_i32_0 = arith.constant 0 : i32
    %c0_i32_1 = arith.constant 0 : i32
    return %c0_i32, %c0_i32_0 : i32, i32
  }
  func.func @transform_2(%arg0: i32) -> (i32, i32) {
    %c0_i32 = arith.constant 0 : i32
    %c0_i32_0 = arith.constant 0 : i32
    %c0_i32_1 = arith.constant 0 : i32
    return %c0_i32, %c0_i32_0 : i32, i32
  }
  func.func @transform_3(%arg0: i32) -> (i32, i32) {
    %c0_i32 = arith.constant 0 : i32
    %c0_i32_0 = arith.constant 0 : i32
    %c0_i32_1 = arith.constant 0 : i32
    return %c0_i32, %c0_i32_0 : i32, i32
  }
  func.func @transform_4(%arg0: i32) -> (i32, i32) {
    %c0_i32 = arith.constant 0 : i32
    %c0_i32_0 = arith.constant 0 : i32
    %c0_i32_1 = arith.constant 0 : i32
    return %c0_i32, %c0_i32_0 : i32, i32
  }
  func.func @transform_5(%arg0: i32) -> (i32, i32) {
    %c0_i32 = arith.constant 0 : i32
    %c0_i32_0 = arith.constant 0 : i32
    return %arg0, %c0_i32 : i32, i32
  }
  func.func @transform_6(%arg0: i32) -> (i32, i32, i32) {
    %c0_i32 = arith.constant 0 : i32
    %c0_i32_0 = arith.constant 0 : i32
    %c0_i32_1 = arith.constant 0 : i32
    return %arg0, %c0_i32, %c0_i32_0 : i32, i32, i32
  }
}

module attributes {stable_mosaic.version = 11 : i64} {
  func.func @_conv3x3_kernel(%arg0: i32, %arg1: memref<1x36x9x4xf32, #tpu.memory_space<vmem>>, %arg2: memref<9x4x4xf32, #tpu.memory_space<vmem>>, %arg3: memref<1x4xf32, #tpu.memory_space<vmem>>, %arg4: memref<1x64x4xf32, #tpu.memory_space<vmem>>, %arg5: memref<1x2x4xf32, #tpu.memory_space<vmem>>) attributes {dimension_semantics = [#tpu.dimension_semantics<parallel>], iteration_bounds = array<i64: 2>, scalar_prefetch = 0 : i64, scratch_operands = 0 : i64, tpu.core_type = #tpu.core_type<tc>, window_params = [{transform_indices = @transform_0, window_bounds = array<i64: 1, 36, 9, 4>}, {pipeline_mode = #tpu.pipeline_mode<synchronous>, transform_indices = @transform_1, window_bounds = array<i64: 9, 4, 4>}, {pipeline_mode = #tpu.pipeline_mode<synchronous>, transform_indices = @transform_2, window_bounds = array<i64: 1, 4>}, {transform_indices = @transform_3, window_bounds = array<i64: 1, 64, 4>}, {transform_indices = @transform_4, window_bounds = array<i64: 1, 2, 4>}]} {
    %cst = arith.constant 0.000000e+00 : f32
    %0 = vector.broadcast %cst : f32 to vector<64x4xf32>
    %c0 = arith.constant 0 : index
    %c0_0 = arith.constant 0 : index
    %c0_1 = arith.constant 0 : index
    %c0_2 = arith.constant 0 : index
    %1 = vector.load %arg1[%c0, %c0_0, %c0_1, %c0_2] : memref<1x36x9x4xf32, #tpu.memory_space<vmem>>, vector<1x8x8x4xf32>
    %2 = vector.shape_cast %1 : vector<1x8x8x4xf32> to vector<8x8x4xf32>
    %3 = vector.shape_cast %2 : vector<8x8x4xf32> to vector<64x4xf32>
    %c0_3 = arith.constant 0 : index
    %c0_4 = arith.constant 0 : index
    %c0_5 = arith.constant 0 : index
    %4 = vector.load %arg2[%c0_3, %c0_4, %c0_5] : memref<9x4x4xf32, #tpu.memory_space<vmem>>, vector<1x4x4xf32>
    %5 = vector.shape_cast %4 : vector<1x4x4xf32> to vector<4x4xf32>
    %cst_6 = arith.constant dense<0.000000e+00> : vector<64x4xf32>
    %6 = tpu.matmul %3, %5, %cst_6 {dimension_numbers = #tpu.dot_dimension_numbers<[1], [0], [0], [1], [0, 0, 1, 1], [], []>} : vector<64x4xf32>, vector<4x4xf32>, vector<64x4xf32> -> vector<64x4xf32>
    %7 = arith.addf %0, %6 : vector<64x4xf32>
    %c0_7 = arith.constant 0 : index
    %c9 = arith.constant 9 : index
    %c0_8 = arith.constant 0 : index
    %c0_9 = arith.constant 0 : index
    %8 = vector.load %arg1[%c0_7, %c9, %c0_8, %c0_9] : memref<1x36x9x4xf32, #tpu.memory_space<vmem>>, vector<1x8x8x4xf32>
    %9 = vector.shape_cast %8 : vector<1x8x8x4xf32> to vector<8x8x4xf32>
    %10 = vector.shape_cast %9 : vector<8x8x4xf32> to vector<64x4xf32>
    %c1 = arith.constant 1 : index
    %c0_10 = arith.constant 0 : index
    %c0_11 = arith.constant 0 : index
    %11 = vector.load %arg2[%c1, %c0_10, %c0_11] : memref<9x4x4xf32, #tpu.memory_space<vmem>>, vector<1x4x4xf32>
    %12 = vector.shape_cast %11 : vector<1x4x4xf32> to vector<4x4xf32>
    %cst_12 = arith.constant dense<0.000000e+00> : vector<64x4xf32>
    %13 = tpu.matmul %10, %12, %cst_12 {dimension_numbers = #tpu.dot_dimension_numbers<[1], [0], [0], [1], [0, 0, 1, 1], [], []>} : vector<64x4xf32>, vector<4x4xf32>, vector<64x4xf32> -> vector<64x4xf32>
    %14 = arith.addf %7, %13 : vector<64x4xf32>
    %c0_13 = arith.constant 0 : index
    %c0_14 = arith.constant 0 : index
    %c1_15 = arith.constant 1 : index
    %c0_16 = arith.constant 0 : index
    %15 = vector.load %arg1[%c0_13, %c0_14, %c1_15, %c0_16] : memref<1x36x9x4xf32, #tpu.memory_space<vmem>>, vector<1x8x8x4xf32>
    %16 = vector.shape_cast %15 : vector<1x8x8x4xf32> to vector<8x8x4xf32>
    %17 = vector.shape_cast %16 : vector<8x8x4xf32> to vector<64x4xf32>
    %c2 = arith.constant 2 : index
    %c0_17 = arith.constant 0 : index
    %c0_18 = arith.constant 0 : index
    %18 = vector.load %arg2[%c2, %c0_17, %c0_18] : memref<9x4x4xf32, #tpu.memory_space<vmem>>, vector<1x4x4xf32>
    %19 = vector.shape_cast %18 : vector<1x4x4xf32> to vector<4x4xf32>
    %cst_19 = arith.constant dense<0.000000e+00> : vector<64x4xf32>
    %20 = tpu.matmul %17, %19, %cst_19 {dimension_numbers = #tpu.dot_dimension_numbers<[1], [0], [0], [1], [0, 0, 1, 1], [], []>} : vector<64x4xf32>, vector<4x4xf32>, vector<64x4xf32> -> vector<64x4xf32>
    %21 = arith.addf %14, %20 : vector<64x4xf32>
    %c0_20 = arith.constant 0 : index
    %c18 = arith.constant 18 : index
    %c0_21 = arith.constant 0 : index
    %c0_22 = arith.constant 0 : index
    %22 = vector.load %arg1[%c0_20, %c18, %c0_21, %c0_22] : memref<1x36x9x4xf32, #tpu.memory_space<vmem>>, vector<1x8x8x4xf32>
    %23 = vector.shape_cast %22 : vector<1x8x8x4xf32> to vector<8x8x4xf32>
    %24 = vector.shape_cast %23 : vector<8x8x4xf32> to vector<64x4xf32>
    %c3 = arith.constant 3 : index
    %c0_23 = arith.constant 0 : index
    %c0_24 = arith.constant 0 : index
    %25 = vector.load %arg2[%c3, %c0_23, %c0_24] : memref<9x4x4xf32, #tpu.memory_space<vmem>>, vector<1x4x4xf32>
    %26 = vector.shape_cast %25 : vector<1x4x4xf32> to vector<4x4xf32>
    %cst_25 = arith.constant dense<0.000000e+00> : vector<64x4xf32>
    %27 = tpu.matmul %24, %26, %cst_25 {dimension_numbers = #tpu.dot_dimension_numbers<[1], [0], [0], [1], [0, 0, 1, 1], [], []>} : vector<64x4xf32>, vector<4x4xf32>, vector<64x4xf32> -> vector<64x4xf32>
    %28 = arith.addf %21, %27 : vector<64x4xf32>
    %c0_26 = arith.constant 0 : index
    %c27 = arith.constant 27 : index
    %c0_27 = arith.constant 0 : index
    %c0_28 = arith.constant 0 : index
    %29 = vector.load %arg1[%c0_26, %c27, %c0_27, %c0_28] : memref<1x36x9x4xf32, #tpu.memory_space<vmem>>, vector<1x8x8x4xf32>
    %30 = vector.shape_cast %29 : vector<1x8x8x4xf32> to vector<8x8x4xf32>
    %31 = vector.shape_cast %30 : vector<8x8x4xf32> to vector<64x4xf32>
    %c4 = arith.constant 4 : index
    %c0_29 = arith.constant 0 : index
    %c0_30 = arith.constant 0 : index
    %32 = vector.load %arg2[%c4, %c0_29, %c0_30] : memref<9x4x4xf32, #tpu.memory_space<vmem>>, vector<1x4x4xf32>
    %33 = vector.shape_cast %32 : vector<1x4x4xf32> to vector<4x4xf32>
    %cst_31 = arith.constant dense<0.000000e+00> : vector<64x4xf32>
    %34 = tpu.matmul %31, %33, %cst_31 {dimension_numbers = #tpu.dot_dimension_numbers<[1], [0], [0], [1], [0, 0, 1, 1], [], []>} : vector<64x4xf32>, vector<4x4xf32>, vector<64x4xf32> -> vector<64x4xf32>
    %35 = arith.addf %28, %34 : vector<64x4xf32>
    %c0_32 = arith.constant 0 : index
    %c18_33 = arith.constant 18 : index
    %c1_34 = arith.constant 1 : index
    %c0_35 = arith.constant 0 : index
    %36 = vector.load %arg1[%c0_32, %c18_33, %c1_34, %c0_35] : memref<1x36x9x4xf32, #tpu.memory_space<vmem>>, vector<1x8x8x4xf32>
    %37 = vector.shape_cast %36 : vector<1x8x8x4xf32> to vector<8x8x4xf32>
    %38 = vector.shape_cast %37 : vector<8x8x4xf32> to vector<64x4xf32>
    %c5 = arith.constant 5 : index
    %c0_36 = arith.constant 0 : index
    %c0_37 = arith.constant 0 : index
    %39 = vector.load %arg2[%c5, %c0_36, %c0_37] : memref<9x4x4xf32, #tpu.memory_space<vmem>>, vector<1x4x4xf32>
    %40 = vector.shape_cast %39 : vector<1x4x4xf32> to vector<4x4xf32>
    %cst_38 = arith.constant dense<0.000000e+00> : vector<64x4xf32>
    %41 = tpu.matmul %38, %40, %cst_38 {dimension_numbers = #tpu.dot_dimension_numbers<[1], [0], [0], [1], [0, 0, 1, 1], [], []>} : vector<64x4xf32>, vector<4x4xf32>, vector<64x4xf32> -> vector<64x4xf32>
    %42 = arith.addf %35, %41 : vector<64x4xf32>
    %c0_39 = arith.constant 0 : index
    %c1_40 = arith.constant 1 : index
    %c0_41 = arith.constant 0 : index
    %c0_42 = arith.constant 0 : index
    %43 = vector.load %arg1[%c0_39, %c1_40, %c0_41, %c0_42] : memref<1x36x9x4xf32, #tpu.memory_space<vmem>>, vector<1x8x8x4xf32>
    %44 = vector.shape_cast %43 : vector<1x8x8x4xf32> to vector<8x8x4xf32>
    %45 = vector.shape_cast %44 : vector<8x8x4xf32> to vector<64x4xf32>
    %c6 = arith.constant 6 : index
    %c0_43 = arith.constant 0 : index
    %c0_44 = arith.constant 0 : index
    %46 = vector.load %arg2[%c6, %c0_43, %c0_44] : memref<9x4x4xf32, #tpu.memory_space<vmem>>, vector<1x4x4xf32>
    %47 = vector.shape_cast %46 : vector<1x4x4xf32> to vector<4x4xf32>
    %cst_45 = arith.constant dense<0.000000e+00> : vector<64x4xf32>
    %48 = tpu.matmul %45, %47, %cst_45 {dimension_numbers = #tpu.dot_dimension_numbers<[1], [0], [0], [1], [0, 0, 1, 1], [], []>} : vector<64x4xf32>, vector<4x4xf32>, vector<64x4xf32> -> vector<64x4xf32>
    %49 = arith.addf %42, %48 : vector<64x4xf32>
    %c0_46 = arith.constant 0 : index
    %c10 = arith.constant 10 : index
    %c0_47 = arith.constant 0 : index
    %c0_48 = arith.constant 0 : index
    %50 = vector.load %arg1[%c0_46, %c10, %c0_47, %c0_48] : memref<1x36x9x4xf32, #tpu.memory_space<vmem>>, vector<1x8x8x4xf32>
    %51 = vector.shape_cast %50 : vector<1x8x8x4xf32> to vector<8x8x4xf32>
    %52 = vector.shape_cast %51 : vector<8x8x4xf32> to vector<64x4xf32>
    %c7 = arith.constant 7 : index
    %c0_49 = arith.constant 0 : index
    %c0_50 = arith.constant 0 : index
    %53 = vector.load %arg2[%c7, %c0_49, %c0_50] : memref<9x4x4xf32, #tpu.memory_space<vmem>>, vector<1x4x4xf32>
    %54 = vector.shape_cast %53 : vector<1x4x4xf32> to vector<4x4xf32>
    %cst_51 = arith.constant dense<0.000000e+00> : vector<64x4xf32>
    %55 = tpu.matmul %52, %54, %cst_51 {dimension_numbers = #tpu.dot_dimension_numbers<[1], [0], [0], [1], [0, 0, 1, 1], [], []>} : vector<64x4xf32>, vector<4x4xf32>, vector<64x4xf32> -> vector<64x4xf32>
    %56 = arith.addf %49, %55 : vector<64x4xf32>
    %c0_52 = arith.constant 0 : index
    %c1_53 = arith.constant 1 : index
    %c1_54 = arith.constant 1 : index
    %c0_55 = arith.constant 0 : index
    %57 = vector.load %arg1[%c0_52, %c1_53, %c1_54, %c0_55] : memref<1x36x9x4xf32, #tpu.memory_space<vmem>>, vector<1x8x8x4xf32>
    %58 = vector.shape_cast %57 : vector<1x8x8x4xf32> to vector<8x8x4xf32>
    %59 = vector.shape_cast %58 : vector<8x8x4xf32> to vector<64x4xf32>
    %c8 = arith.constant 8 : index
    %c0_56 = arith.constant 0 : index
    %c0_57 = arith.constant 0 : index
    %60 = vector.load %arg2[%c8, %c0_56, %c0_57] : memref<9x4x4xf32, #tpu.memory_space<vmem>>, vector<1x4x4xf32>
    %61 = vector.shape_cast %60 : vector<1x4x4xf32> to vector<4x4xf32>
    %cst_58 = arith.constant dense<0.000000e+00> : vector<64x4xf32>
    %62 = tpu.matmul %59, %61, %cst_58 {dimension_numbers = #tpu.dot_dimension_numbers<[1], [0], [0], [1], [0, 0, 1, 1], [], []>} : vector<64x4xf32>, vector<4x4xf32>, vector<64x4xf32> -> vector<64x4xf32>
    %63 = arith.addf %56, %62 : vector<64x4xf32>
    %c0_59 = arith.constant 0 : index
    %c0_60 = arith.constant 0 : index
    %64 = vector.load %arg3[%c0_59, %c0_60] : memref<1x4xf32, #tpu.memory_space<vmem>>, vector<1x4xf32>
    %65 = vector.broadcast %64 : vector<1x4xf32> to vector<64x4xf32>
    %66 = arith.addf %63, %65 : vector<64x4xf32>
    %c0_61 = arith.constant 0 : index
    %c0_62 = arith.constant 0 : index
    %c0_63 = arith.constant 0 : index
    %67 = vector.load %arg4[%c0_61, %c0_62, %c0_63] : memref<1x64x4xf32, #tpu.memory_space<vmem>>, vector<1x64x4xf32>
    %68 = vector.shape_cast %67 : vector<1x64x4xf32> to vector<64x4xf32>
    %69 = vector.shape_cast %66 : vector<64x4xf32> to vector<1x64x4xf32>
    tpu.vector_store %arg4[%c0_61, %c0_62, %c0_63], %69 {strides = array<i32>} : memref<1x64x4xf32, #tpu.memory_space<vmem>>, vector<1x64x4xf32>,
    %cst_64 = arith.constant dense<0.000000e+00> : vector<4xf32>
    %70 = vector.multi_reduction <add>, %66, %cst_64 [0] : vector<64x4xf32> to vector<4xf32>
    %71 = vector.shape_cast %70 : vector<4xf32> to vector<1x4xf32>
    %c0_65 = arith.constant 0 : index
    %c0_66 = arith.constant 0 : index
    %c0_67 = arith.constant 0 : index
    %72 = vector.load %arg5[%c0_65, %c0_66, %c0_67] : memref<1x2x4xf32, #tpu.memory_space<vmem>>, vector<1x1x4xf32>
    %73 = vector.shape_cast %72 : vector<1x1x4xf32> to vector<1x4xf32>
    %74 = vector.shape_cast %71 : vector<1x4xf32> to vector<1x1x4xf32>
    tpu.vector_store %arg5[%c0_65, %c0_66, %c0_67], %74 {strides = array<i32>} : memref<1x2x4xf32, #tpu.memory_space<vmem>>, vector<1x1x4xf32>,
    %75 = arith.mulf %66, %66 : vector<64x4xf32>
    %cst_68 = arith.constant dense<0.000000e+00> : vector<4xf32>
    %76 = vector.multi_reduction <add>, %75, %cst_68 [0] : vector<64x4xf32> to vector<4xf32>
    %77 = vector.shape_cast %76 : vector<4xf32> to vector<1x4xf32>
    %c0_69 = arith.constant 0 : index
    %c1_70 = arith.constant 1 : index
    %c0_71 = arith.constant 0 : index
    %78 = vector.load %arg5[%c0_69, %c1_70, %c0_71] : memref<1x2x4xf32, #tpu.memory_space<vmem>>, vector<1x1x4xf32>
    %79 = vector.shape_cast %78 : vector<1x1x4xf32> to vector<1x4xf32>
    %80 = vector.shape_cast %77 : vector<1x4xf32> to vector<1x1x4xf32>
    tpu.vector_store %arg5[%c0_69, %c1_70, %c0_71], %80 {strides = array<i32>} : memref<1x2x4xf32, #tpu.memory_space<vmem>>, vector<1x1x4xf32>,
    return
  }
  func.func @transform_0(%arg0: i32) -> (i32, i32, i32, i32) {
    %c0_i32 = arith.constant 0 : i32
    %c0_i32_0 = arith.constant 0 : i32
    %c0_i32_1 = arith.constant 0 : i32
    %c0_i32_2 = arith.constant 0 : i32
    return %arg0, %c0_i32, %c0_i32_0, %c0_i32_1 : i32, i32, i32, i32
  }
  func.func @transform_1(%arg0: i32) -> (i32, i32, i32) {
    %c0_i32 = arith.constant 0 : i32
    %c0_i32_0 = arith.constant 0 : i32
    %c0_i32_1 = arith.constant 0 : i32
    %c0_i32_2 = arith.constant 0 : i32
    return %c0_i32, %c0_i32_0, %c0_i32_1 : i32, i32, i32
  }
  func.func @transform_2(%arg0: i32) -> (i32, i32) {
    %c0_i32 = arith.constant 0 : i32
    %c0_i32_0 = arith.constant 0 : i32
    %c0_i32_1 = arith.constant 0 : i32
    return %c0_i32, %c0_i32_0 : i32, i32
  }
  func.func @transform_3(%arg0: i32) -> (i32, i32, i32) {
    %c0_i32 = arith.constant 0 : i32
    %c0_i32_0 = arith.constant 0 : i32
    %c0_i32_1 = arith.constant 0 : i32
    return %arg0, %c0_i32, %c0_i32_0 : i32, i32, i32
  }
  func.func @transform_4(%arg0: i32) -> (i32, i32, i32) {
    %c0_i32 = arith.constant 0 : i32
    %c0_i32_0 = arith.constant 0 : i32
    %c0_i32_1 = arith.constant 0 : i32
    return %arg0, %c0_i32, %c0_i32_0 : i32, i32, i32
  }
}

module attributes {stable_mosaic.version = 11 : i64} {
  func.func @_gemm_fused_kernel(%arg0: i32, %arg1: memref<128x4xf32, #tpu.memory_space<vmem>>, %arg2: memref<4x16xf32, #tpu.memory_space<vmem>>, %arg3: memref<1x16xf32, #tpu.memory_space<vmem>>, %arg4: memref<1x4xf32, #tpu.memory_space<vmem>>, %arg5: memref<1x4xf32, #tpu.memory_space<vmem>>, %arg6: memref<128x16xf32, #tpu.memory_space<vmem>>, %arg7: memref<1x2x16xf32, #tpu.memory_space<vmem>>) attributes {dimension_semantics = [#tpu.dimension_semantics<parallel>], iteration_bounds = array<i64: 1>, scalar_prefetch = 0 : i64, scratch_operands = 0 : i64, tpu.core_type = #tpu.core_type<tc>, window_params = [{transform_indices = @transform_0, window_bounds = array<i64: 128, 4>}, {pipeline_mode = #tpu.pipeline_mode<synchronous>, transform_indices = @transform_1, window_bounds = array<i64: 4, 16>}, {pipeline_mode = #tpu.pipeline_mode<synchronous>, transform_indices = @transform_2, window_bounds = array<i64: 1, 16>}, {pipeline_mode = #tpu.pipeline_mode<synchronous>, transform_indices = @transform_3, window_bounds = array<i64: 1, 4>}, {pipeline_mode = #tpu.pipeline_mode<synchronous>, transform_indices = @transform_4, window_bounds = array<i64: 1, 4>}, {transform_indices = @transform_5, window_bounds = array<i64: 128, 16>}, {transform_indices = @transform_6, window_bounds = array<i64: 1, 2, 16>}]} {
    %c0 = arith.constant 0 : index
    %c0_0 = arith.constant 0 : index
    %0 = vector.load %arg1[%c0, %c0_0] : memref<128x4xf32, #tpu.memory_space<vmem>>, vector<128x4xf32>
    %c0_1 = arith.constant 0 : index
    %c0_2 = arith.constant 0 : index
    %1 = vector.load %arg4[%c0_1, %c0_2] : memref<1x4xf32, #tpu.memory_space<vmem>>, vector<1x4xf32>
    %2 = vector.broadcast %1 : vector<1x4xf32> to vector<128x4xf32>
    %3 = arith.mulf %0, %2 : vector<128x4xf32>
    %c0_3 = arith.constant 0 : index
    %c0_4 = arith.constant 0 : index
    %4 = vector.load %arg5[%c0_3, %c0_4] : memref<1x4xf32, #tpu.memory_space<vmem>>, vector<1x4xf32>
    %5 = vector.broadcast %4 : vector<1x4xf32> to vector<128x4xf32>
    %6 = arith.addf %3, %5 : vector<128x4xf32>
    %cst = arith.constant 0.000000e+00 : f32
    %7 = vector.broadcast %cst : f32 to vector<128x4xf32>
    %8 = arith.cmpf oge, %6, %7 : vector<128x4xf32>
    %cst_5 = arith.constant 2.000000e-02 : f32
    %9 = vector.broadcast %cst_5 : f32 to vector<128x4xf32>
    %10 = arith.mulf %9, %6 : vector<128x4xf32>
    %11 = arith.select %8, %6, %10 : vector<128x4xi1>, vector<128x4xf32>
    %c0_6 = arith.constant 0 : index
    %c0_7 = arith.constant 0 : index
    %12 = vector.load %arg2[%c0_6, %c0_7] : memref<4x16xf32, #tpu.memory_space<vmem>>, vector<4x16xf32>
    %cst_8 = arith.constant dense<0.000000e+00> : vector<128x16xf32>
    %13 = tpu.matmul %11, %12, %cst_8 {dimension_numbers = #tpu.dot_dimension_numbers<[1], [0], [0], [1], [0, 0, 1, 1], [], []>} : vector<128x4xf32>, vector<4x16xf32>, vector<128x16xf32> -> vector<128x16xf32>
    %c0_9 = arith.constant 0 : index
    %c0_10 = arith.constant 0 : index
    %14 = vector.load %arg3[%c0_9, %c0_10] : memref<1x16xf32, #tpu.memory_space<vmem>>, vector<1x16xf32>
    %15 = vector.broadcast %14 : vector<1x16xf32> to vector<128x16xf32>
    %16 = arith.addf %13, %15 : vector<128x16xf32>
    %c0_11 = arith.constant 0 : index
    %c0_12 = arith.constant 0 : index
    %17 = vector.load %arg6[%c0_11, %c0_12] : memref<128x16xf32, #tpu.memory_space<vmem>>, vector<128x16xf32>
    tpu.vector_store %arg6[%c0_11, %c0_12], %16 {strides = array<i32>} : memref<128x16xf32, #tpu.memory_space<vmem>>, vector<128x16xf32>,
    %c128_i32 = arith.constant 128 : i32
    %18 = arith.muli %arg0, %c128_i32 : i32
    %19 = tpu.iota {dimensions = array<i32: 0>} : vector<128x1xi32>
    %20 = vector.broadcast %18 : i32 to vector<128x1xi32>
    %21 = arith.addi %20, %19 : vector<128x1xi32>
    %c128_i32_13 = arith.constant 128 : i32
    %22 = vector.broadcast %c128_i32_13 : i32 to vector<128x1xi32>
    %23 = arith.cmpi slt, %21, %22 : vector<128x1xi32>
    %cst_14 = arith.constant 0.000000e+00 : f32
    %24 = vector.shape_cast %23 : vector<128x1xi1> to vector<128x1xi1>
    %25 = vector.broadcast %24 : vector<128x1xi1> to vector<128x16xi1>
    %26 = vector.broadcast %cst_14 : f32 to vector<128x16xf32>
    %27 = arith.select %25, %16, %26 : vector<128x16xi1>, vector<128x16xf32>
    %cst_15 = arith.constant dense<0.000000e+00> : vector<16xf32>
    %28 = vector.multi_reduction <add>, %27, %cst_15 [0] : vector<128x16xf32> to vector<16xf32>
    %29 = vector.shape_cast %28 : vector<16xf32> to vector<1x16xf32>
    %c0_16 = arith.constant 0 : index
    %c0_17 = arith.constant 0 : index
    %c0_18 = arith.constant 0 : index
    %30 = vector.load %arg7[%c0_16, %c0_17, %c0_18] : memref<1x2x16xf32, #tpu.memory_space<vmem>>, vector<1x1x16xf32>
    %31 = vector.shape_cast %30 : vector<1x1x16xf32> to vector<1x16xf32>
    %32 = vector.shape_cast %29 : vector<1x16xf32> to vector<1x1x16xf32>
    tpu.vector_store %arg7[%c0_16, %c0_17, %c0_18], %32 {strides = array<i32>} : memref<1x2x16xf32, #tpu.memory_space<vmem>>, vector<1x1x16xf32>,
    %33 = arith.mulf %27, %27 : vector<128x16xf32>
    %cst_19 = arith.constant dense<0.000000e+00> : vector<16xf32>
    %34 = vector.multi_reduction <add>, %33, %cst_19 [0] : vector<128x16xf32> to vector<16xf32>
    %35 = vector.shape_cast %34 : vector<16xf32> to vector<1x16xf32>
    %c0_20 = arith.constant 0 : index
    %c1 = arith.constant 1 : index
    %c0_21 = arith.constant 0 : index
    %36 = vector.load %arg7[%c0_20, %c1, %c0_21] : memref<1x2x16xf32, #tpu.memory_space<vmem>>, vector<1x1x16xf32>
    %37 = vector.shape_cast %36 : vector<1x1x16xf32> to vector<1x16xf32>
    %38 = vector.shape_cast %35 : vector<1x16xf32> to vector<1x1x16xf32>
    tpu.vector_store %arg7[%c0_20, %c1, %c0_21], %38 {strides = array<i32>} : memref<1x2x16xf32, #tpu.memory_space<vmem>>, vector<1x1x16xf32>,
    return
  }
  func.func @transform_0(%arg0: i32) -> (i32, i32) {
    %c0_i32 = arith.constant 0 : i32
    %c0_i32_0 = arith.constant 0 : i32
    return %arg0, %c0_i32 : i32, i32
  }
  func.func @transform_1(%arg0: i32) -> (i32, i32) {
    %c0_i32 = arith.constant 0 : i32
    %c0_i32_0 = arith.constant 0 : i32
    %c0_i32_1 = arith.constant 0 : i32
    return %c0_i32, %c0_i32_0 : i32, i32
  }
  func.func @transform_2(%arg0: i32) -> (i32, i32) {
    %c0_i32 = arith.constant 0 : i32
    %c0_i32_0 = arith.constant 0 : i32
    %c0_i32_1 = arith.constant 0 : i32
    return %c0_i32, %c0_i32_0 : i32, i32
  }
  func.func @transform_3(%arg0: i32) -> (i32, i32) {
    %c0_i32 = arith.constant 0 : i32
    %c0_i32_0 = arith.constant 0 : i32
    %c0_i32_1 = arith.constant 0 : i32
    return %c0_i32, %c0_i32_0 : i32, i32
  }
  func.func @transform_4(%arg0: i32) -> (i32, i32) {
    %c0_i32 = arith.constant 0 : i32
    %c0_i32_0 = arith.constant 0 : i32
    %c0_i32_1 = arith.constant 0 : i32
    return %c0_i32, %c0_i32_0 : i32, i32
  }
  func.func @transform_5(%arg0: i32) -> (i32, i32) {
    %c0_i32 = arith.constant 0 : i32
    %c0_i32_0 = arith.constant 0 : i32
    return %arg0, %c0_i32 : i32, i32
  }
  func.func @transform_6(%arg0: i32) -> (i32, i32, i32) {
    %c0_i32 = arith.constant 0 : i32
    %c0_i32_0 = arith.constant 0 : i32
    %c0_i32_1 = arith.constant 0 : i32
    return %arg0, %c0_i32, %c0_i32_0 : i32, i32, i32
  }
}

module attributes {stable_mosaic.version = 11 : i64} {
  func.func @_gemm_fused_kernel(%arg0: i32, %arg1: memref<128x4xf32, #tpu.memory_space<vmem>>, %arg2: memref<4x16xf32, #tpu.memory_space<vmem>>, %arg3: memref<1x16xf32, #tpu.memory_space<vmem>>, %arg4: memref<1x4xf32, #tpu.memory_space<vmem>>, %arg5: memref<1x4xf32, #tpu.memory_space<vmem>>, %arg6: memref<128x16xf32, #tpu.memory_space<vmem>>, %arg7: memref<1x2x16xf32, #tpu.memory_space<vmem>>) attributes {dimension_semantics = [#tpu.dimension_semantics<parallel>], iteration_bounds = array<i64: 1>, scalar_prefetch = 0 : i64, scratch_operands = 0 : i64, tpu.core_type = #tpu.core_type<tc>, window_params = [{transform_indices = @transform_0, window_bounds = array<i64: 128, 4>}, {pipeline_mode = #tpu.pipeline_mode<synchronous>, transform_indices = @transform_1, window_bounds = array<i64: 4, 16>}, {pipeline_mode = #tpu.pipeline_mode<synchronous>, transform_indices = @transform_2, window_bounds = array<i64: 1, 16>}, {pipeline_mode = #tpu.pipeline_mode<synchronous>, transform_indices = @transform_3, window_bounds = array<i64: 1, 4>}, {pipeline_mode = #tpu.pipeline_mode<synchronous>, transform_indices = @transform_4, window_bounds = array<i64: 1, 4>}, {transform_indices = @transform_5, window_bounds = array<i64: 128, 16>}, {transform_indices = @transform_6, window_bounds = array<i64: 1, 2, 16>}]} {
    %c0 = arith.constant 0 : index
    %c0_0 = arith.constant 0 : index
    %0 = vector.load %arg1[%c0, %c0_0] : memref<128x4xf32, #tpu.memory_space<vmem>>, vector<128x4xf32>
    %c0_1 = arith.constant 0 : index
    %c0_2 = arith.constant 0 : index
    %1 = vector.load %arg4[%c0_1, %c0_2] : memref<1x4xf32, #tpu.memory_space<vmem>>, vector<1x4xf32>
    %2 = vector.broadcast %1 : vector<1x4xf32> to vector<128x4xf32>
    %3 = arith.mulf %0, %2 : vector<128x4xf32>
    %c0_3 = arith.constant 0 : index
    %c0_4 = arith.constant 0 : index
    %4 = vector.load %arg5[%c0_3, %c0_4] : memref<1x4xf32, #tpu.memory_space<vmem>>, vector<1x4xf32>
    %5 = vector.broadcast %4 : vector<1x4xf32> to vector<128x4xf32>
    %6 = arith.addf %3, %5 : vector<128x4xf32>
    %cst = arith.constant 0.000000e+00 : f32
    %7 = vector.broadcast %cst : f32 to vector<128x4xf32>
    %8 = arith.cmpf oge, %6, %7 : vector<128x4xf32>
    %cst_5 = arith.constant 1.000000e+00 : f32
    %9 = vector.broadcast %cst_5 : f32 to vector<128x4xf32>
    %10 = arith.mulf %9, %6 : vector<128x4xf32>
    %11 = arith.select %8, %6, %10 : vector<128x4xi1>, vector<128x4xf32>
    %c0_6 = arith.constant 0 : index
    %c0_7 = arith.constant 0 : index
    %12 = vector.load %arg2[%c0_6, %c0_7] : memref<4x16xf32, #tpu.memory_space<vmem>>, vector<4x16xf32>
    %cst_8 = arith.constant dense<0.000000e+00> : vector<128x16xf32>
    %13 = tpu.matmul %11, %12, %cst_8 {dimension_numbers = #tpu.dot_dimension_numbers<[1], [0], [0], [1], [0, 0, 1, 1], [], []>} : vector<128x4xf32>, vector<4x16xf32>, vector<128x16xf32> -> vector<128x16xf32>
    %c0_9 = arith.constant 0 : index
    %c0_10 = arith.constant 0 : index
    %14 = vector.load %arg3[%c0_9, %c0_10] : memref<1x16xf32, #tpu.memory_space<vmem>>, vector<1x16xf32>
    %15 = vector.broadcast %14 : vector<1x16xf32> to vector<128x16xf32>
    %16 = arith.addf %13, %15 : vector<128x16xf32>
    %c0_11 = arith.constant 0 : index
    %c0_12 = arith.constant 0 : index
    %17 = vector.load %arg6[%c0_11, %c0_12] : memref<128x16xf32, #tpu.memory_space<vmem>>, vector<128x16xf32>
    tpu.vector_store %arg6[%c0_11, %c0_12], %16 {strides = array<i32>} : memref<128x16xf32, #tpu.memory_space<vmem>>, vector<128x16xf32>,
    %c128_i32 = arith.constant 128 : i32
    %18 = arith.muli %arg0, %c128_i32 : i32
    %19 = tpu.iota {dimensions = array<i32: 0>} : vector<128x1xi32>
    %20 = vector.broadcast %18 : i32 to vector<128x1xi32>
    %21 = arith.addi %20, %19 : vector<128x1xi32>
    %c128_i32_13 = arith.constant 128 : i32
    %22 = vector.broadcast %c128_i32_13 : i32 to vector<128x1xi32>
    %23 = arith.cmpi slt, %21, %22 : vector<128x1xi32>
    %cst_14 = arith.constant 0.000000e+00 : f32
    %24 = vector.shape_cast %23 : vector<128x1xi1> to vector<128x1xi1>
    %25 = vector.broadcast %24 : vector<128x1xi1> to vector<128x16xi1>
    %26 = vector.broadcast %cst_14 : f32 to vector<128x16xf32>
    %27 = arith.select %25, %16, %26 : vector<128x16xi1>, vector<128x16xf32>
    %cst_15 = arith.constant dense<0.000000e+00> : vector<16xf32>
    %28 = vector.multi_reduction <add>, %27, %cst_15 [0] : vector<128x16xf32> to vector<16xf32>
    %29 = vector.shape_cast %28 : vector<16xf32> to vector<1x16xf32>
    %c0_16 = arith.constant 0 : index
    %c0_17 = arith.constant 0 : index
    %c0_18 = arith.constant 0 : index
    %30 = vector.load %arg7[%c0_16, %c0_17, %c0_18] : memref<1x2x16xf32, #tpu.memory_space<vmem>>, vector<1x1x16xf32>
    %31 = vector.shape_cast %30 : vector<1x1x16xf32> to vector<1x16xf32>
    %32 = vector.shape_cast %29 : vector<1x16xf32> to vector<1x1x16xf32>
    tpu.vector_store %arg7[%c0_16, %c0_17, %c0_18], %32 {strides = array<i32>} : memref<1x2x16xf32, #tpu.memory_space<vmem>>, vector<1x1x16xf32>,
    %33 = arith.mulf %27, %27 : vector<128x16xf32>
    %cst_19 = arith.constant dense<0.000000e+00> : vector<16xf32>
    %34 = vector.multi_reduction <add>, %33, %cst_19 [0] : vector<128x16xf32> to vector<16xf32>
    %35 = vector.shape_cast %34 : vector<16xf32> to vector<1x16xf32>
    %c0_20 = arith.constant 0 : index
    %c1 = arith.constant 1 : index
    %c0_21 = arith.constant 0 : index
    %36 = vector.load %arg7[%c0_20, %c1, %c0_21] : memref<1x2x16xf32, #tpu.memory_space<vmem>>, vector<1x1x16xf32>
    %37 = vector.shape_cast %36 : vector<1x1x16xf32> to vector<1x16xf32>
    %38 = vector.shape_cast %35 : vector<1x16xf32> to vector<1x1x16xf32>
    tpu.vector_store %arg7[%c0_20, %c1, %c0_21], %38 {strides = array<i32>} : memref<1x2x16xf32, #tpu.memory_space<vmem>>, vector<1x1x16xf32>,
    return
  }
  func.func @transform_0(%arg0: i32) -> (i32, i32) {
    %c0_i32 = arith.constant 0 : i32
    %c0_i32_0 = arith.constant 0 : i32
    return %arg0, %c0_i32 : i32, i32
  }
  func.func @transform_1(%arg0: i32) -> (i32, i32) {
    %c0_i32 = arith.constant 0 : i32
    %c0_i32_0 = arith.constant 0 : i32
    %c0_i32_1 = arith.constant 0 : i32
    return %c0_i32, %c0_i32_0 : i32, i32
  }
  func.func @transform_2(%arg0: i32) -> (i32, i32) {
    %c0_i32 = arith.constant 0 : i32
    %c0_i32_0 = arith.constant 0 : i32
    %c0_i32_1 = arith.constant 0 : i32
    return %c0_i32, %c0_i32_0 : i32, i32
  }
  func.func @transform_3(%arg0: i32) -> (i32, i32) {
    %c0_i32 = arith.constant 0 : i32
    %c0_i32_0 = arith.constant 0 : i32
    %c0_i32_1 = arith.constant 0 : i32
    return %c0_i32, %c0_i32_0 : i32, i32
  }
  func.func @transform_4(%arg0: i32) -> (i32, i32) {
    %c0_i32 = arith.constant 0 : i32
    %c0_i32_0 = arith.constant 0 : i32
    %c0_i32_1 = arith.constant 0 : i32
    return %c0_i32, %c0_i32_0 : i32, i32
  }
  func.func @transform_5(%arg0: i32) -> (i32, i32) {
    %c0_i32 = arith.constant 0 : i32
    %c0_i32_0 = arith.constant 0 : i32
    return %arg0, %c0_i32 : i32, i32
  }
  func.func @transform_6(%arg0: i32) -> (i32, i32, i32) {
    %c0_i32 = arith.constant 0 : i32
    %c0_i32_0 = arith.constant 0 : i32
    %c0_i32_1 = arith.constant 0 : i32
    return %arg0, %c0_i32, %c0_i32_0 : i32, i32, i32
  }
}

module attributes {stable_mosaic.version = 11 : i64} {
  func.func @_residual_kernel(%arg0: i32, %arg1: memref<128x16xf32, #tpu.memory_space<vmem>>, %arg2: memref<1x16xf32, #tpu.memory_space<vmem>>, %arg3: memref<1x16xf32, #tpu.memory_space<vmem>>, %arg4: memref<128x16xf32, #tpu.memory_space<vmem>>, %arg5: memref<1x16xf32, #tpu.memory_space<vmem>>, %arg6: memref<1x16xf32, #tpu.memory_space<vmem>>, %arg7: memref<128x16xf32, #tpu.memory_space<vmem>>) attributes {dimension_semantics = [#tpu.dimension_semantics<parallel>], iteration_bounds = array<i64: 1>, scalar_prefetch = 0 : i64, scratch_operands = 0 : i64, tpu.core_type = #tpu.core_type<tc>, window_params = [{transform_indices = @transform_0, window_bounds = array<i64: 128, 16>}, {pipeline_mode = #tpu.pipeline_mode<synchronous>, transform_indices = @transform_1, window_bounds = array<i64: 1, 16>}, {pipeline_mode = #tpu.pipeline_mode<synchronous>, transform_indices = @transform_2, window_bounds = array<i64: 1, 16>}, {transform_indices = @transform_3, window_bounds = array<i64: 128, 16>}, {pipeline_mode = #tpu.pipeline_mode<synchronous>, transform_indices = @transform_4, window_bounds = array<i64: 1, 16>}, {pipeline_mode = #tpu.pipeline_mode<synchronous>, transform_indices = @transform_5, window_bounds = array<i64: 1, 16>}, {transform_indices = @transform_6, window_bounds = array<i64: 128, 16>}]} {
    %c0 = arith.constant 0 : index
    %c0_0 = arith.constant 0 : index
    %0 = vector.load %arg1[%c0, %c0_0] : memref<128x16xf32, #tpu.memory_space<vmem>>, vector<128x16xf32>
    %c0_1 = arith.constant 0 : index
    %c0_2 = arith.constant 0 : index
    %1 = vector.load %arg2[%c0_1, %c0_2] : memref<1x16xf32, #tpu.memory_space<vmem>>, vector<1x16xf32>
    %2 = vector.broadcast %1 : vector<1x16xf32> to vector<128x16xf32>
    %3 = arith.mulf %0, %2 : vector<128x16xf32>
    %c0_3 = arith.constant 0 : index
    %c0_4 = arith.constant 0 : index
    %4 = vector.load %arg3[%c0_3, %c0_4] : memref<1x16xf32, #tpu.memory_space<vmem>>, vector<1x16xf32>
    %5 = vector.broadcast %4 : vector<1x16xf32> to vector<128x16xf32>
    %6 = arith.addf %3, %5 : vector<128x16xf32>
    %c0_5 = arith.constant 0 : index
    %c0_6 = arith.constant 0 : index
    %7 = vector.load %arg4[%c0_5, %c0_6] : memref<128x16xf32, #tpu.memory_space<vmem>>, vector<128x16xf32>
    %c0_7 = arith.constant 0 : index
    %c0_8 = arith.constant 0 : index
    %8 = vector.load %arg5[%c0_7, %c0_8] : memref<1x16xf32, #tpu.memory_space<vmem>>, vector<1x16xf32>
    %9 = vector.broadcast %8 : vector<1x16xf32> to vector<128x16xf32>
    %10 = arith.mulf %7, %9 : vector<128x16xf32>
    %11 = arith.addf %6, %10 : vector<128x16xf32>
    %c0_9 = arith.constant 0 : index
    %c0_10 = arith.constant 0 : index
    %12 = vector.load %arg6[%c0_9, %c0_10] : memref<1x16xf32, #tpu.memory_space<vmem>>, vector<1x16xf32>
    %13 = vector.broadcast %12 : vector<1x16xf32> to vector<128x16xf32>
    %14 = arith.addf %11, %13 : vector<128x16xf32>
    %cst = arith.constant 0.000000e+00 : f32
    %15 = vector.broadcast %cst : f32 to vector<128x16xf32>
    %16 = arith.cmpf oge, %14, %15 : vector<128x16xf32>
    %cst_11 = arith.constant 0.00999999977 : f32
    %17 = vector.broadcast %cst_11 : f32 to vector<128x16xf32>
    %18 = arith.mulf %17, %14 : vector<128x16xf32>
    %19 = arith.select %16, %14, %18 : vector<128x16xi1>, vector<128x16xf32>
    %c0_12 = arith.constant 0 : index
    %c0_13 = arith.constant 0 : index
    %20 = vector.load %arg7[%c0_12, %c0_13] : memref<128x16xf32, #tpu.memory_space<vmem>>, vector<128x16xf32>
    tpu.vector_store %arg7[%c0_12, %c0_13], %19 {strides = array<i32>} : memref<128x16xf32, #tpu.memory_space<vmem>>, vector<128x16xf32>,
    return
  }
  func.func @transform_0(%arg0: i32) -> (i32, i32) {
    %c0_i32 = arith.constant 0 : i32
    %c0_i32_0 = arith.constant 0 : i32
    return %arg0, %c0_i32 : i32, i32
  }
  func.func @transform_1(%arg0: i32) -> (i32, i32) {
    %c0_i32 = arith.constant 0 : i32
    %c0_i32_0 = arith.constant 0 : i32
    %c0_i32_1 = arith.constant 0 : i32
    return %c0_i32, %c0_i32_0 : i32, i32
  }
  func.func @transform_2(%arg0: i32) -> (i32, i32) {
    %c0_i32 = arith.constant 0 : i32
    %c0_i32_0 = arith.constant 0 : i32
    %c0_i32_1 = arith.constant 0 : i32
    return %c0_i32, %c0_i32_0 : i32, i32
  }
  func.func @transform_3(%arg0: i32) -> (i32, i32) {
    %c0_i32 = arith.constant 0 : i32
    %c0_i32_0 = arith.constant 0 : i32
    return %arg0, %c0_i32 : i32, i32
  }
  func.func @transform_4(%arg0: i32) -> (i32, i32) {
    %c0_i32 = arith.constant 0 : i32
    %c0_i32_0 = arith.constant 0 : i32
    %c0_i32_1 = arith.constant 0 : i32
    return %c0_i32, %c0_i32_0 : i32, i32
  }
  func.func @transform_5(%arg0: i32) -> (i32, i32) {
    %c0_i32 = arith.constant 0 : i32
    %c0_i32_0 = arith.constant 0 : i32
    %c0_i32_1 = arith.constant 0 : i32
    return %c0_i32, %c0_i32_0 : i32, i32
  }
  func.func @transform_6(%arg0: i32) -> (i32, i32) {
    %c0_i32 = arith.constant 0 : i32
    %c0_i32_0 = arith.constant 0 : i32
    return %arg0, %c0_i32 : i32, i32
  }
}

</mosaic_0001>

<llo_original>
// kernel: resblock_forward.5
$region0: #{resblock_forward.5}
  #allocation0 [shape = 'u32[]', space=smem, size = 0x4, offset = 0x4, fixed_abs, tag = 'smem constant byte address 0x4 - core index']
  #allocation1 [shape = 'u32[144,128]{1,0:T(1,128)}', space=vmem, size = 0x12000, scoped, tag = 'internal scratch']
  %s0 = inlined_call_operand.vmem [shape: f32[512,4], index: 0, kind: input, shape index: {}]
  %s1 = inlined_call_operand.vmem [shape: f32[4,4], index: 1, kind: input, shape index: {}]
  %s2 = inlined_call_operand.vmem [shape: f32[1,4], index: 2, kind: input, shape index: {}]
  %s3 = inlined_call_operand.vmem [shape: f32[1,4], index: 3, kind: input, shape index: {}]
  %s4 = inlined_call_operand.vmem [shape: f32[1,4], index: 4, kind: input, shape index: {}]
  %s5 = inlined_call_operand.vmem [shape: f32[512,4], index: 5, kind: output, shape index: {0}]
  %s6 = inlined_call_operand.vmem [shape: f32[1,2,4], index: 6, kind: output, shape index: {1}]
  %7 = xla_tuple %s5, %s6
  %s8 = sld [smem:[#allocation0]]
  $region38: #{resblock_forward.5} parent=0
    _
  %s10 = ssub.s32 1, %s8
  %s11 = scalar_select 0, %s10, %s8
  // Predicated region
  $region2: #{resblock_forward.5} parent=0 // pred_check
    _
  $region3: #{resblock_forward.5} parent=0 // pred_check_branch
    %13 = sbr.rel (0) target = $region5
  $region4: #{resblock_forward.5} parent=0 // pred_region
    _
  $region5: #{resblock_forward.5} parent=0 // pred_fallthru
    _
  // Predicated region
  $region6: #{resblock_forward.5} parent=0 // pred_check
    _
  $region7: #{resblock_forward.5} parent=0 // pred_check_branch
    %15 = sbr.rel (0) target = $region9
  $region8: #{resblock_forward.5} parent=0 // pred_region
    _
  $region9: #{resblock_forward.5} parent=0 // pred_fallthru
    _
  // Predicated region
  $region10: #{resblock_forward.5} parent=0 // pred_check
    _
  $region11: #{resblock_forward.5} parent=0 // pred_check_branch
    %17 = sbr.rel (0) target = $region13
  $region12: #{resblock_forward.5} parent=0 // pred_region
    _
  $region13: #{resblock_forward.5} parent=0 // pred_fallthru
    _
  // Predicated region
  $region14: #{resblock_forward.5} parent=0 // pred_check
    _
  $region15: #{resblock_forward.5} parent=0 // pred_check_branch
    %19 = sbr.rel (0) target = $region17
  $region16: #{resblock_forward.5} parent=0 // pred_region
    _
  $region17: #{resblock_forward.5} parent=0 // pred_fallthru
    _
  // Predicated region
  $region18: #{resblock_forward.5} parent=0 // pred_check
    _
  $region19: #{resblock_forward.5} parent=0 // pred_check_branch
    %21 = sbr.rel (0) target = $region21
  $region20: #{resblock_forward.5} parent=0 // pred_region
    _
  $region21: #{resblock_forward.5} parent=0 // pred_fallthru
    _
  %v22 = vld [vmem:[%s0] sm:$0xff]
  %v23 = vld [vmem:[%s0 + $0x8] sm:$0xff]
  %v24 = vld [vmem:[%s0 + $0x10] sm:$0xff]
  %v25 = vld [vmem:[%s0 + $0x18] sm:$0xff]
  %v26 = vld [vmem:[%s0 + $0x20] sm:$0xff]
  %v27 = vld [vmem:[%s0 + $0x28] sm:$0xff]
  %v28 = vld [vmem:[%s0 + $0x30] sm:$0xff]
  %v29 = vld [vmem:[%s0 + $0x38] sm:$0xff]
  %v30 = vld [vmem:[%s0 + $0x40] sm:$0xff]
  %v31 = vld [vmem:[%s0 + $0x48] sm:$0xff]
  %v32 = vld [vmem:[%s0 + $0x50] sm:$0xff]
  %v33 = vld [vmem:[%s0 + $0x58] sm:$0xff]
  %v34 = vld [vmem:[%s0 + $0x60] sm:$0xff]
  %v35 = vld [vmem:[%s0 + $0x68] sm:$0xff]
  %v36 = vld [vmem:[%s0 + $0x70] sm:$0xff]
  %v37 = vld [vmem:[%s0 + $0x78] sm:$0xff]
  %v38 = vld [vmem:[%s0 + $0x80] sm:$0xff]
  %v39 = vld [vmem:[%s0 + $0x88] sm:$0xff]
  %v40 = vld [vmem:[%s0 + $0x90] sm:$0xff]
  %v41 = vld [vmem:[%s0 + $0x98] sm:$0xff]
  %v42 = vld [vmem:[%s0 + $0xa0] sm:$0xff]
  %v43 = vld [vmem:[%s0 + $0xa8] sm:$0xff]
  %v44 = vld [vmem:[%s0 + $0xb0] sm:$0xff]
  %v45 = vld [vmem:[%s0 + $0xb8] sm:$0xff]
  %v46 = vld [vmem:[%s0 + $0xc0] sm:$0xff]
  %v47 = vld [vmem:[%s0 + $0xc8] sm:$0xff]
  %v48 = vld [vmem:[%s0 + $0xd0] sm:$0xff]
  %v49 = vld [vmem:[%s0 + $0xd8] sm:$0xff]
  %v50 = vld [vmem:[%s0 + $0xe0] sm:$0xff]
  %v51 = vld [vmem:[%s0 + $0xe8] sm:$0xff]
  %v52 = vld [vmem:[%s0 + $0xf0] sm:$0xff]
  %v53 = vld [vmem:[%s0 + $0xf8] sm:$0xff]
  %v54 = vld [vmem:[%s0 + $0x100] sm:$0xff]
  %v55 = vld [vmem:[%s0 + $0x108] sm:$0xff]
  %v56 = vld [vmem:[%s0 + $0x110] sm:$0xff]
  %v57 = vld [vmem:[%s0 + $0x118] sm:$0xff]
  %v58 = vld [vmem:[%s0 + $0x120] sm:$0xff]
  %v59 = vld [vmem:[%s0 + $0x128] sm:$0xff]
  %v60 = vld [vmem:[%s0 + $0x130] sm:$0xff]
  %v61 = vld [vmem:[%s0 + $0x138] sm:$0xff]
  %v62 = vld [vmem:[%s0 + $0x140] sm:$0xff]
  %v63 = vld [vmem:[%s0 + $0x148] sm:$0xff]
  %v64 = vld [vmem:[%s0 + $0x150] sm:$0xff]
  %v65 = vld [vmem:[%s0 + $0x158] sm:$0xff]
  %v66 = vld [vmem:[%s0 + $0x160] sm:$0xff]
  %v67 = vld [vmem:[%s0 + $0x168] sm:$0xff]
  %v68 = vld [vmem:[%s0 + $0x170] sm:$0xff]
  %v69 = vld [vmem:[%s0 + $0x178] sm:$0xff]
  %v70 = vld [vmem:[%s0 + $0x180] sm:$0xff]
  %v71 = vld [vmem:[%s0 + $0x188] sm:$0xff]
  %v72 = vld [vmem:[%s0 + $0x190] sm:$0xff]
  %v73 = vld [vmem:[%s0 + $0x198] sm:$0xff]
  %v74 = vld [vmem:[%s0 + $0x1a0] sm:$0xff]
  %v75 = vld [vmem:[%s0 + $0x1a8] sm:$0xff]
  %v76 = vld [vmem:[%s0 + $0x1b0] sm:$0xff]
  %v77 = vld [vmem:[%s0 + $0x1b8] sm:$0xff]
  %v78 = vld [vmem:[%s0 + $0x1c0] sm:$0xff]
  %v79 = vld [vmem:[%s0 + $0x1c8] sm:$0xff]
  %v80 = vld [vmem:[%s0 + $0x1d0] sm:$0xff]
  %v81 = vld [vmem:[%s0 + $0x1d8] sm:$0xff]
  %v82 = vld [vmem:[%s0 + $0x1e0] sm:$0xff]
  %v83 = vld [vmem:[%s0 + $0x1e8] sm:$0xff]
  %v84 = vld [vmem:[%s0 + $0x1f0] sm:$0xff]
  %v85 = vld [vmem:[%s0 + $0x1f8] sm:$0xff]
  %v86 = vld [vmem:[%s3] sm:$0x1]
  %v88 = vlaneseq
  %v89 = vshrl.u32 %v88, 7
  %v90 = vsub.s32 0, %v89
  %v91 = vrot.slane %v86, %v90
  %v93 = vmul.f32 %v22, %v91
  %v94 = vmul.f32 %v23, %v91
  %v95 = vmul.f32 %v24, %v91
  %v96 = vmul.f32 %v25, %v91
  %v97 = vmul.f32 %v26, %v91
  %v98 = vmul.f32 %v27, %v91
  %v99 = vmul.f32 %v28, %v91
  %v100 = vmul.f32 %v29, %v91
  %v101 = vmul.f32 %v30, %v91
  %v102 = vmul.f32 %v31, %v91
  %v103 = vmul.f32 %v32, %v91
  %v104 = vmul.f32 %v33, %v91
  %v105 = vmul.f32 %v34, %v91
  %v106 = vmul.f32 %v35, %v91
  %v107 = vmul.f32 %v36, %v91
  %v108 = vmul.f32 %v37, %v91
  %v109 = vmul.f32 %v38, %v91
  %v110 = vmul.f32 %v39, %v91
  %v111 = vmul.f32 %v40, %v91
  %v112 = vmul.f32 %v41, %v91
  %v113 = vmul.f32 %v42, %v91
  %v114 = vmul.f32 %v43, %v91
  %v115 = vmul.f32 %v44, %v91
  %v116 = vmul.f32 %v45, %v91
  %v117 = vmul.f32 %v46, %v91
  %v118 = vmul.f32 %v47, %v91
  %v119 = vmul.f32 %v48, %v91
  %v120 = vmul.f32 %v49, %v91
  %v121 = vmul.f32 %v50, %v91
  %v122 = vmul.f32 %v51, %v91
  %v123 = vmul.f32 %v52, %v91
  %v124 = vmul.f32 %v53, %v91
  %v125 = vmul.f32 %v54, %v91
  %v126 = vmul.f32 %v55, %v91
  %v127 = vmul.f32 %v56, %v91
  %v128 = vmul.f32 %v57, %v91
  %v129 = vmul.f32 %v58, %v91
  %v130 = vmul.f32 %v59, %v91
  %v131 = vmul.f32 %v60, %v91
  %v132 = vmul.f32 %v61, %v91
  %v133 = vmul.f32 %v62, %v91
  %v134 = vmul.f32 %v63, %v91
  %v135 = vmul.f32 %v64, %v91
  %v136 = vmul.f32 %v65, %v91
  %v137 = vmul.f32 %v66, %v91
  %v138 = vmul.f32 %v67, %v91
  %v139 = vmul.f32 %v68, %v91
  %v140 = vmul.f32 %v69, %v91
  %v141 = vmul.f32 %v70, %v91
  %v142 = vmul.f32 %v71, %v91
  %v143 = vmul.f32 %v72, %v91
  %v144 = vmul.f32 %v73, %v91
  %v145 = vmul.f32 %v74, %v91
  %v146 = vmul.f32 %v75, %v91
  %v147 = vmul.f32 %v76, %v91
  %v148 = vmul.f32 %v77, %v91
  %v149 = vmul.f32 %v78, %v91
  %v150 = vmul.f32 %v79, %v91
  %v151 = vmul.f32 %v80, %v91
  %v152 = vmul.f32 %v81, %v91
  %v153 = vmul.f32 %v82, %v91
  %v154 = vmul.f32 %v83, %v91
  %v155 = vmul.f32 %v84, %v91
  %v156 = vmul.f32 %v85, %v91
  %v157 = vld [vmem:[%s4] sm:$0x1]
  %v159 = vlaneseq
  %v160 = vshrl.u32 %v159, 7
  %v161 = vsub.s32 0, %v160
  %v162 = vrot.slane %v157, %v161
  %v164 = vadd.f32 %v93, %v162
  %v165 = vadd.f32 %v94, %v162
  %v166 = vadd.f32 %v95, %v162
  %v167 = vadd.f32 %v96, %v162
  %v168 = vadd.f32 %v97, %v162
  %v169 = vadd.f32 %v98, %v162
  %v170 = vadd.f32 %v99, %v162
  %v171 = vadd.f32 %v100, %v162
  %v172 = vadd.f32 %v101, %v162
  %v173 = vadd.f32 %v102, %v162
  %v174 = vadd.f32 %v103, %v162
  %v175 = vadd.f32 %v104, %v162
  %v176 = vadd.f32 %v105, %v162
  %v177 = vadd.f32 %v106, %v162
  %v178 = vadd.f32 %v107, %v162
  %v179 = vadd.f32 %v108, %v162
  %v180 = vadd.f32 %v109, %v162
  %v181 = vadd.f32 %v110, %v162
  %v182 = vadd.f32 %v111, %v162
  %v183 = vadd.f32 %v112, %v162
  %v184 = vadd.f32 %v113, %v162
  %v185 = vadd.f32 %v114, %v162
  %v186 = vadd.f32 %v115, %v162
  %v187 = vadd.f32 %v116, %v162
  %v188 = vadd.f32 %v117, %v162
  %v189 = vadd.f32 %v118, %v162
  %v190 = vadd.f32 %v119, %v162
  %v191 = vadd.f32 %v120, %v162
  %v192 = vadd.f32 %v121, %v162
  %v193 = vadd.f32 %v122, %v162
  %v194 = vadd.f32 %v123, %v162
  %v195 = vadd.f32 %v124, %v162
  %v196 = vadd.f32 %v125, %v162
  %v197 = vadd.f32 %v126, %v162
  %v198 = vadd.f32 %v127, %v162
  %v199 = vadd.f32 %v128, %v162
  %v200 = vadd.f32 %v129, %v162
  %v201 = vadd.f32 %v130, %v162
  %v202 = vadd.f32 %v131, %v162
  %v203 = vadd.f32 %v132, %v162
  %v204 = vadd.f32 %v133, %v162
  %v205 = vadd.f32 %v134, %v162
  %v206 = vadd.f32 %v135, %v162
  %v207 = vadd.f32 %v136, %v162
  %v208 = vadd.f32 %v137, %v162
  %v209 = vadd.f32 %v138, %v162
  %v210 = vadd.f32 %v139, %v162
  %v211 = vadd.f32 %v140, %v162
  %v212 = vadd.f32 %v141, %v162
  %v213 = vadd.f32 %v142, %v162
  %v214 = vadd.f32 %v143, %v162
  %v215 = vadd.f32 %v144, %v162
  %v216 = vadd.f32 %v145, %v162
  %v217 = vadd.f32 %v146, %v162
  %v218 = vadd.f32 %v147, %v162
  %v219 = vadd.f32 %v148, %v162
  %v220 = vadd.f32 %v149, %v162
  %v221 = vadd.f32 %v150, %v162
  %v222 = vadd.f32 %v151, %v162
  %v223 = vadd.f32 %v152, %v162
  %v224 = vadd.f32 %v153, %v162
  %v225 = vadd.f32 %v154, %v162
  %v226 = vadd.f32 %v155, %v162
  %v227 = vadd.f32 %v156, %v162
  %v228 = vld [vmem:[%s1] sm:$0xf]
  %v229 = vld [vmem:[%s2] sm:$0x1]
  %v231 = vlaneseq
  %v232 = vshrl.u32 %v231, 7
  %v233 = vsub.s32 0, %v232
  %v234 = vrot.slane %v229, %v233
  %vm236 = vcmask 31744
  %v238 = vsel %vm236, %v164, 0
  %v241 = vsel %vm236, %v165, 0
  %v244 = vsel %vm236, %v166, 0
  %v247 = vsel %vm236, %v167, 0
  %v250 = vsel %vm236, %v168, 0
  %v253 = vsel %vm236, %v169, 0
  %v256 = vsel %vm236, %v170, 0
  %v259 = vsel %vm236, %v171, 0
  %v262 = vsel %vm236, %v172, 0
  %v265 = vsel %vm236, %v173, 0
  %v268 = vsel %vm236, %v174, 0
  %v271 = vsel %vm236, %v175, 0
  %v274 = vsel %vm236, %v176, 0
  %v277 = vsel %vm236, %v177, 0
  %v280 = vsel %vm236, %v178, 0
  %v283 = vsel %vm236, %v179, 0
  %v286 = vsel %vm236, %v180, 0
  %v289 = vsel %vm236, %v181, 0
  %v292 = vsel %vm236, %v182, 0
  %v295 = vsel %vm236, %v183, 0
  %v298 = vsel %vm236, %v184, 0
  %v301 = vsel %vm236, %v185, 0
  %v304 = vsel %vm236, %v186, 0
  %v307 = vsel %vm236, %v187, 0
  %v310 = vsel %vm236, %v188, 0
  %v313 = vsel %vm236, %v189, 0
  %v316 = vsel %vm236, %v190, 0
  %v319 = vsel %vm236, %v191, 0
  %v322 = vsel %vm236, %v192, 0
  %v325 = vsel %vm236, %v193, 0
  %v328 = vsel %vm236, %v194, 0
  %v331 = vsel %vm236, %v195, 0
  %v334 = vsel %vm236, %v196, 0
  %v337 = vsel %vm236, %v197, 0
  %v340 = vsel %vm236, %v198, 0
  %v343 = vsel %vm236, %v199, 0
  %v346 = vsel %vm236, %v200, 0
  %v349 = vsel %vm236, %v201, 0
  %v352 = vsel %vm236, %v202, 0
  %v355 = vsel %vm236, %v203, 0
  %v358 = vsel %vm236, %v204, 0
  %v361 = vsel %vm236, %v205, 0
  %v364 = vsel %vm236, %v206, 0
  %v367 = vsel %vm236, %v207, 0
  %v370 = vsel %vm236, %v208, 0
  %v373 = vsel %vm236, %v209, 0
  %v376 = vsel %vm236, %v210, 0
  %v379 = vsel %vm236, %v211, 0
  %v382 = vsel %vm236, %v212, 0
  %v385 = vsel %vm236, %v213, 0
  %v388 = vsel %vm236, %v214, 0
  %v391 = vsel %vm236, %v215, 0
  %v394 = vsel %vm236, %v216, 0
  %v397 = vsel %vm236, %v217, 0
  %v400 = vsel %vm236, %v218, 0
  %v403 = vsel %vm236, %v219, 0
  %v406 = vsel %vm236, %v220, 0
  %v409 = vsel %vm236, %v221, 0
  %v412 = vsel %vm236, %v222, 0
  %v415 = vsel %vm236, %v223, 0
  %v418 = vsel %vm236, %v224, 0
  %v421 = vsel %vm236, %v225, 0
  %v424 = vsel %vm236, %v226, 0
  %v427 = vsel %vm236, %v227, 0
  %vm429 = vcmask 1043456
  %v431 = vsel %vm429, %v228, 0
  %433 = vmatprep.subr.mxu0 0.0
  %434 = vmatpush1.msra.mxu0 %v431
  %435 = vmatprep.subr.mxu0 0.0
  %436 = vmatpush1.msra.mxu0 0.0
  %437 = vmatprep.subr.mxu0 0.0
  %438 = vmatpush1.msra.mxu0 0.0
  %439 = vmatprep.subr.mxu0 0.0
  %440 = vmatpush1.msra.mxu0 0.0
  %441 = vmatprep.subr.mxu0 0.0
  %442 = vmatpush1.msra.mxu0 0.0
  %443 = vmatprep.subr.mxu0 0.0
  %444 = vmatpush1.msra.mxu0 0.0
  %445 = vmatprep.subr.mxu0 0.0
  %446 = vmatpush1.msra.mxu0 0.0
  %447 = vmatprep.subr.mxu0 0.0
  %448 = vmatpush1.msra.mxu0 0.0
  %449 = vmatprep.subr.mxu0 0.0
  %450 = vmatpush1.msra.mxu0 0.0
  %451 = vmatprep.subr.mxu0 0.0
  %452 = vmatpush1.msra.mxu0 0.0
  %453 = vmatprep.subr.mxu0 0.0
  %454 = vmatpush1.msra.mxu0 0.0
  %455 = vmatprep.subr.mxu0 0.0
  %456 = vmatpush1.msra.mxu0 0.0
  %457 = vmatprep.subr.mxu0 0.0
  %458 = vmatpush1.msra.mxu0 0.0
  %459 = vmatprep.subr.mxu0 0.0
  %460 = vmatpush1.msra.mxu0 0.0
  %461 = vmatprep.subr.mxu0 0.0
  %462 = vmatpush1.msra.mxu0 0.0
  %463 = vmatprep.subr.mxu0 0.0
  %464 = vmatpush1.msra.mxu0 0.0
  %465 = vmatprep.subr.mxu0 0.0
  %466 = vmatpush1.msra.mxu0 0.0
  %467 = vmatprep.subr.mxu0 0.0
  %468 = vmatpush1.msra.mxu0 0.0
  %469 = vmatprep.subr.mxu0 0.0
  %470 = vmatpush1.msra.mxu0 0.0
  %471 = vmatprep.subr.mxu0 0.0
  %472 = vmatpush1.msra.mxu0 0.0
  %473 = vmatprep.subr.mxu0 0.0
  %474 = vmatpush1.msra.mxu0 0.0
  %475 = vmatprep.subr.mxu0 0.0
  %476 = vmatpush1.msra.mxu0 0.0
  %477 = vmatprep.subr.mxu0 0.0
  %478 = vmatpush1.msra.mxu0 0.0
  %479 = vmatprep.subr.mxu0 0.0
  %480 = vmatpush1.msra.mxu0 0.0
  %481 = vmatprep.subr.mxu0 0.0
  %482 = vmatpush1.msra.mxu0 0.0
  %483 = vmatprep.subr.mxu0 0.0
  %484 = vmatpush1.msra.mxu0 0.0
  %485 = vmatprep.subr.mxu0 0.0
  %486 = vmatpush1.msra.mxu0 0.0
  %487 = vmatprep.subr.mxu0 0.0
  %488 = vmatpush1.msra.mxu0 0.0
  %489 = vmatprep.subr.mxu0 0.0
  %490 = vmatpush1.msra.mxu0 0.0
  %491 = vmatprep.subr.mxu0 0.0
  %492 = vmatpush1.msra.mxu0 0.0
  %493 = vmatprep.subr.mxu0 0.0
  %494 = vmatpush1.msra.mxu0 0.0
  %495 = vmatprep.subr.mxu0 0.0
  %496 = vmatpush1.msra.mxu0 0.0
  %497 = vmatprep.mubr.f32.mxu0 0.0
  %498 = vmatmul.mubr.f32.gmra.mrb[0].mxu0 %v238
  %v499 = vpop.f32.mrb[0].mxu0
  %v500 = vadd.f32 %v234, %v499
  %v501 = vpop.f32.mrb[0].mxu0
  %502 = vmatprep.mubr.f32.mxu0 0.0
  %503 = vmatmul.mubr.f32.gmra.mrb[0].mxu0 %v241
  %v504 = vpop.f32.mrb[0].mxu0
  %v505 = vadd.f32 %v234, %v504
  %v506 = vpop.f32.mrb[0].mxu0
  %507 = vmatprep.mubr.f32.mxu0 0.0
  %508 = vmatmul.mubr.f32.gmra.mrb[0].mxu0 %v244
  %v509 = vpop.f32.mrb[0].mxu0
  %v510 = vadd.f32 %v234, %v509
  %v511 = vpop.f32.mrb[0].mxu0
  %512 = vmatprep.mubr.f32.mxu0 0.0
  %513 = vmatmul.mubr.f32.gmra.mrb[0].mxu0 %v247
  %v514 = vpop.f32.mrb[0].mxu0
  %v515 = vadd.f32 %v234, %v514
  %v516 = vpop.f32.mrb[0].mxu0
  %517 = vmatprep.mubr.f32.mxu0 0.0
  %518 = vmatmul.mubr.f32.gmra.mrb[0].mxu0 %v250
  %v519 = vpop.f32.mrb[0].mxu0
  %v520 = vadd.f32 %v234, %v519
  %v521 = vpop.f32.mrb[0].mxu0
  %522 = vmatprep.mubr.f32.mxu0 0.0
  %523 = vmatmul.mubr.f32.gmra.mrb[0].mxu0 %v253
  %v524 = vpop.f32.mrb[0].mxu0
  %v525 = vadd.f32 %v234, %v524
  %v526 = vpop.f32.mrb[0].mxu0
  %527 = vmatprep.mubr.f32.mxu0 0.0
  %528 = vmatmul.mubr.f32.gmra.mrb[0].mxu0 %v256
  %v529 = vpop.f32.mrb[0].mxu0
  %v530 = vadd.f32 %v234, %v529
  %v531 = vpop.f32.mrb[0].mxu0
  %532 = vmatprep.mubr.f32.mxu0 0.0
  %533 = vmatmul.mubr.f32.gmra.mrb[0].mxu0 %v259
  %v534 = vpop.f32.mrb[0].mxu0
  %v535 = vadd.f32 %v234, %v534
  %v536 = vpop.f32.mrb[0].mxu0
  %537 = vmatprep.mubr.f32.mxu0 0.0
  %538 = vmatmul.mubr.f32.gmra.mrb[0].mxu0 %v262
  %v539 = vpop.f32.mrb[0].mxu0
  %v540 = vadd.f32 %v234, %v539
  %v541 = vpop.f32.mrb[0].mxu0
  %542 = vmatprep.mubr.f32.mxu0 0.0
  %543 = vmatmul.mubr.f32.gmra.mrb[0].mxu0 %v265
  %v544 = vpop.f32.mrb[0].mxu0
  %v545 = vadd.f32 %v234, %v544
  %v546 = vpop.f32.mrb[0].mxu0
  %547 = vmatprep.mubr.f32.mxu0 0.0
  %548 = vmatmul.mubr.f32.gmra.mrb[0].mxu0 %v268
  %v549 = vpop.f32.mrb[0].mxu0
  %v550 = vadd.f32 %v234, %v549
  %v551 = vpop.f32.mrb[0].mxu0
  %552 = vmatprep.mubr.f32.mxu0 0.0
  %553 = vmatmul.mubr.f32.gmra.mrb[0].mxu0 %v271
  %v554 = vpop.f32.mrb[0].mxu0
  %v555 = vadd.f32 %v234, %v554
  %v556 = vpop.f32.mrb[0].mxu0
  %557 = vmatprep.mubr.f32.mxu0 0.0
  %558 = vmatmul.mubr.f32.gmra.mrb[0].mxu0 %v274
  %v559 = vpop.f32.mrb[0].mxu0
  %v560 = vadd.f32 %v234, %v559
  %v561 = vpop.f32.mrb[0].mxu0
  %562 = vmatprep.mubr.f32.mxu0 0.0
  %563 = vmatmul.mubr.f32.gmra.mrb[0].mxu0 %v277
  %v564 = vpop.f32.mrb[0].mxu0
  %v565 = vadd.f32 %v234, %v564
  %v566 = vpop.f32.mrb[0].mxu0
  %567 = vmatprep.mubr.f32.mxu0 0.0
  %568 = vmatmul.mubr.f32.gmra.mrb[0].mxu0 %v280
  %v569 = vpop.f32.mrb[0].mxu0
  %v570 = vadd.f32 %v234, %v569
  %v571 = vpop.f32.mrb[0].mxu0
  %572 = vmatprep.mubr.f32.mxu0 0.0
  %573 = vmatmul.mubr.f32.gmra.mrb[0].mxu0 %v283
  %v574 = vpop.f32.mrb[0].mxu0
  %v575 = vadd.f32 %v234, %v574
  %v576 = vpop.f32.mrb[0].mxu0
  %577 = vmatprep.mubr.f32.mxu0 0.0
  %578 = vmatmul.mubr.f32.gmra.mrb[0].mxu0 %v286
  %v579 = vpop.f32.mrb[0].mxu0
  %v580 = vadd.f32 %v234, %v579
  %v581 = vpop.f32.mrb[0].mxu0
  %582 = vmatprep.mubr.f32.mxu0 0.0
  %583 = vmatmul.mubr.f32.gmra.mrb[0].mxu0 %v289
  %v584 = vpop.f32.mrb[0].mxu0
  %v585 = vadd.f32 %v234, %v584
  %v586 = vpop.f32.mrb[0].mxu0
  %587 = vmatprep.mubr.f32.mxu0 0.0
  %588 = vmatmul.mubr.f32.gmra.mrb[0].mxu0 %v292
  %v589 = vpop.f32.mrb[0].mxu0
  %v590 = vadd.f32 %v234, %v589
  %v591 = vpop.f32.mrb[0].mxu0
  %592 = vmatprep.mubr.f32.mxu0 0.0
  %593 = vmatmul.mubr.f32.gmra.mrb[0].mxu0 %v295
  %v594 = vpop.f32.mrb[0].mxu0
  %v595 = vadd.f32 %v234, %v594
  %v596 = vpop.f32.mrb[0].mxu0
  %597 = vmatprep.mubr.f32.mxu0 0.0
  %598 = vmatmul.mubr.f32.gmra.mrb[0].mxu0 %v298
  %v599 = vpop.f32.mrb[0].mxu0
  %v600 = vadd.f32 %v234, %v599
  %v601 = vpop.f32.mrb[0].mxu0
  %602 = vmatprep.mubr.f32.mxu0 0.0
  %603 = vmatmul.mubr.f32.gmra.mrb[0].mxu0 %v301
  %v604 = vpop.f32.mrb[0].mxu0
  %v605 = vadd.f32 %v234, %v604
  %v606 = vpop.f32.mrb[0].mxu0
  %607 = vmatprep.mubr.f32.mxu0 0.0
  %608 = vmatmul.mubr.f32.gmra.mrb[0].mxu0 %v304
  %v609 = vpop.f32.mrb[0].mxu0
  %v610 = vadd.f32 %v234, %v609
  %v611 = vpop.f32.mrb[0].mxu0
  %612 = vmatprep.mubr.f32.mxu0 0.0
  %613 = vmatmul.mubr.f32.gmra.mrb[0].mxu0 %v307
  %v614 = vpop.f32.mrb[0].mxu0
  %v615 = vadd.f32 %v234, %v614
  %v616 = vpop.f32.mrb[0].mxu0
  %617 = vmatprep.mubr.f32.mxu0 0.0
  %618 = vmatmul.mubr.f32.gmra.mrb[0].mxu0 %v310
  %v619 = vpop.f32.mrb[0].mxu0
  %v620 = vadd.f32 %v234, %v619
  %v621 = vpop.f32.mrb[0].mxu0
  %622 = vmatprep.mubr.f32.mxu0 0.0
  %623 = vmatmul.mubr.f32.gmra.mrb[0].mxu0 %v313
  %v624 = vpop.f32.mrb[0].mxu0
  %v625 = vadd.f32 %v234, %v624
  %v626 = vpop.f32.mrb[0].mxu0
  %627 = vmatprep.mubr.f32.mxu0 0.0
  %628 = vmatmul.mubr.f32.gmra.mrb[0].mxu0 %v316
  %v629 = vpop.f32.mrb[0].mxu0
  %v630 = vadd.f32 %v234, %v629
  %v631 = vpop.f32.mrb[0].mxu0
  %632 = vmatprep.mubr.f32.mxu0 0.0
  %633 = vmatmul.mubr.f32.gmra.mrb[0].mxu0 %v319
  %v634 = vpop.f32.mrb[0].mxu0
  %v635 = vadd.f32 %v234, %v634
  %v636 = vpop.f32.mrb[0].mxu0
  %637 = vmatprep.mubr.f32.mxu0 0.0
  %638 = vmatmul.mubr.f32.gmra.mrb[0].mxu0 %v322
  %v639 = vpop.f32.mrb[0].mxu0
  %v640 = vadd.f32 %v234, %v639
  %v641 = vpop.f32.mrb[0].mxu0
  %642 = vmatprep.mubr.f32.mxu0 0.0
  %643 = vmatmul.mubr.f32.gmra.mrb[0].mxu0 %v325
  %v644 = vpop.f32.mrb[0].mxu0
  %v645 = vadd.f32 %v234, %v644
  %v646 = vpop.f32.mrb[0].mxu0
  %647 = vmatprep.mubr.f32.mxu0 0.0
  %648 = vmatmul.mubr.f32.gmra.mrb[0].mxu0 %v328
  %v649 = vpop.f32.mrb[0].mxu0
  %v650 = vadd.f32 %v234, %v649
  %v651 = vpop.f32.mrb[0].mxu0
  %652 = vmatprep.mubr.f32.mxu0 0.0
  %653 = vmatmul.mubr.f32.gmra.mrb[0].mxu0 %v331
  %v654 = vpop.f32.mrb[0].mxu0
  %v655 = vadd.f32 %v234, %v654
  %v656 = vpop.f32.mrb[0].mxu0
  %657 = vmatprep.mubr.f32.mxu0 0.0
  %658 = vmatmul.mubr.f32.gmra.mrb[0].mxu0 %v334
  %v659 = vpop.f32.mrb[0].mxu0
  %v660 = vadd.f32 %v234, %v659
  %v661 = vpop.f32.mrb[0].mxu0
  %662 = vmatprep.mubr.f32.mxu0 0.0
  %663 = vmatmul.mubr.f32.gmra.mrb[0].mxu0 %v337
  %v664 = vpop.f32.mrb[0].mxu0
  %v665 = vadd.f32 %v234, %v664
  %v666 = vpop.f32.mrb[0].mxu0
  %667 = vmatprep.mubr.f32.mxu0 0.0
  %668 = vmatmul.mubr.f32.gmra.mrb[0].mxu0 %v340
  %v669 = vpop.f32.mrb[0].mxu0
  %v670 = vadd.f32 %v234, %v669
  %v671 = vpop.f32.mrb[0].mxu0
  %672 = vmatprep.mubr.f32.mxu0 0.0
  %673 = vmatmul.mubr.f32.gmra.mrb[0].mxu0 %v343
  %v674 = vpop.f32.mrb[0].mxu0
  %v675 = vadd.f32 %v234, %v674
  %v676 = vpop.f32.mrb[0].mxu0
  %677 = vmatprep.mubr.f32.mxu0 0.0
  %678 = vmatmul.mubr.f32.gmra.mrb[0].mxu0 %v346
  %v679 = vpop.f32.mrb[0].mxu0
  %v680 = vadd.f32 %v234, %v679
  %v681 = vpop.f32.mrb[0].mxu0
  %682 = vmatprep.mubr.f32.mxu0 0.0
  %683 = vmatmul.mubr.f32.gmra.mrb[0].mxu0 %v349
  %v684 = vpop.f32.mrb[0].mxu0
  %v685 = vadd.f32 %v234, %v684
  %v686 = vpop.f32.mrb[0].mxu0
  %687 = vmatprep.mubr.f32.mxu0 0.0
  %688 = vmatmul.mubr.f32.gmra.mrb[0].mxu0 %v352
  %v689 = vpop.f32.mrb[0].mxu0
  %v690 = vadd.f32 %v234, %v689
  %v691 = vpop.f32.mrb[0].mxu0
  %692 = vmatprep.mubr.f32.mxu0 0.0
  %693 = vmatmul.mubr.f32.gmra.mrb[0].mxu0 %v355
  %v694 = vpop.f32.mrb[0].mxu0
  %v695 = vadd.f32 %v234, %v694
  %v696 = vpop.f32.mrb[0].mxu0
  %697 = vmatprep.mubr.f32.mxu0 0.0
  %698 = vmatmul.mubr.f32.gmra.mrb[0].mxu0 %v358
  %v699 = vpop.f32.mrb[0].mxu0
  %v700 = vadd.f32 %v234, %v699
  %v701 = vpop.f32.mrb[0].mxu0
  %702 = vmatprep.mubr.f32.mxu0 0.0
  %703 = vmatmul.mubr.f32.gmra.mrb[0].mxu0 %v361
  %v704 = vpop.f32.mrb[0].mxu0
  %v705 = vadd.f32 %v234, %v704
  %v706 = vpop.f32.mrb[0].mxu0
  %707 = vmatprep.mubr.f32.mxu0 0.0
  %708 = vmatmul.mubr.f32.gmra.mrb[0].mxu0 %v364
  %v709 = vpop.f32.mrb[0].mxu0
  %v710 = vadd.f32 %v234, %v709
  %v711 = vpop.f32.mrb[0].mxu0
  %712 = vmatprep.mubr.f32.mxu0 0.0
  %713 = vmatmul.mubr.f32.gmra.mrb[0].mxu0 %v367
  %v714 = vpop.f32.mrb[0].mxu0
  %v715 = vadd.f32 %v234, %v714
  %v716 = vpop.f32.mrb[0].mxu0
  %717 = vmatprep.mubr.f32.mxu0 0.0
  %718 = vmatmul.mubr.f32.gmra.mrb[0].mxu0 %v370
  %v719 = vpop.f32.mrb[0].mxu0
  %v720 = vadd.f32 %v234, %v719
  %v721 = vpop.f32.mrb[0].mxu0
  %722 = vmatprep.mubr.f32.mxu0 0.0
  %723 = vmatmul.mubr.f32.gmra.mrb[0].mxu0 %v373
  %v724 = vpop.f32.mrb[0].mxu0
  %v725 = vadd.f32 %v234, %v724
  %v726 = vpop.f32.mrb[0].mxu0
  %727 = vmatprep.mubr.f32.mxu0 0.0
  %728 = vmatmul.mubr.f32.gmra.mrb[0].mxu0 %v376
  %v729 = vpop.f32.mrb[0].mxu0
  %v730 = vadd.f32 %v234, %v729
  %v731 = vpop.f32.mrb[0].mxu0
  %732 = vmatprep.mubr.f32.mxu0 0.0
  %733 = vmatmul.mubr.f32.gmra.mrb[0].mxu0 %v379
  %v734 = vpop.f32.mrb[0].mxu0
  %v735 = vadd.f32 %v234, %v734
  %v736 = vpop.f32.mrb[0].mxu0
  %737 = vmatprep.mubr.f32.mxu0 0.0
  %738 = vmatmul.mubr.f32.gmra.mrb[0].mxu0 %v382
  %v739 = vpop.f32.mrb[0].mxu0
  %v740 = vadd.f32 %v234, %v739
  %v741 = vpop.f32.mrb[0].mxu0
  %742 = vmatprep.mubr.f32.mxu0 0.0
  %743 = vmatmul.mubr.f32.gmra.mrb[0].mxu0 %v385
  %v744 = vpop.f32.mrb[0].mxu0
  %v745 = vadd.f32 %v234, %v744
  %v746 = vpop.f32.mrb[0].mxu0
  %747 = vmatprep.mubr.f32.mxu0 0.0
  %748 = vmatmul.mubr.f32.gmra.mrb[0].mxu0 %v388
  %v749 = vpop.f32.mrb[0].mxu0
  %v750 = vadd.f32 %v234, %v749
  %v751 = vpop.f32.mrb[0].mxu0
  %752 = vmatprep.mubr.f32.mxu0 0.0
  %753 = vmatmul.mubr.f32.gmra.mrb[0].mxu0 %v391
  %v754 = vpop.f32.mrb[0].mxu0
  %v755 = vadd.f32 %v234, %v754
  %v756 = vpop.f32.mrb[0].mxu0
  %757 = vmatprep.mubr.f32.mxu0 0.0
  %758 = vmatmul.mubr.f32.gmra.mrb[0].mxu0 %v394
  %v759 = vpop.f32.mrb[0].mxu0
  %v760 = vadd.f32 %v234, %v759
  %v761 = vpop.f32.mrb[0].mxu0
  %762 = vmatprep.mubr.f32.mxu0 0.0
  %763 = vmatmul.mubr.f32.gmra.mrb[0].mxu0 %v397
  %v764 = vpop.f32.mrb[0].mxu0
  %v765 = vadd.f32 %v234, %v764
  %v766 = vpop.f32.mrb[0].mxu0
  %767 = vmatprep.mubr.f32.mxu0 0.0
  %768 = vmatmul.mubr.f32.gmra.mrb[0].mxu0 %v400
  %v769 = vpop.f32.mrb[0].mxu0
  %v770 = vadd.f32 %v234, %v769
  %v771 = vpop.f32.mrb[0].mxu0
  %772 = vmatprep.mubr.f32.mxu0 0.0
  %773 = vmatmul.mubr.f32.gmra.mrb[0].mxu0 %v403
  %v774 = vpop.f32.mrb[0].mxu0
  %v775 = vadd.f32 %v234, %v774
  %v776 = vpop.f32.mrb[0].mxu0
  %777 = vmatprep.mubr.f32.mxu0 0.0
  %778 = vmatmul.mubr.f32.gmra.mrb[0].mxu0 %v406
  %v779 = vpop.f32.mrb[0].mxu0
  %v780 = vadd.f32 %v234, %v779
  %v781 = vpop.f32.mrb[0].mxu0
  %782 = vmatprep.mubr.f32.mxu0 0.0
  %783 = vmatmul.mubr.f32.gmra.mrb[0].mxu0 %v409
  %v784 = vpop.f32.mrb[0].mxu0
  %v785 = vadd.f32 %v234, %v784
  %v786 = vpop.f32.mrb[0].mxu0
  %787 = vmatprep.mubr.f32.mxu0 0.0
  %788 = vmatmul.mubr.f32.gmra.mrb[0].mxu0 %v412
  %v789 = vpop.f32.mrb[0].mxu0
  %v790 = vadd.f32 %v234, %v789
  %v791 = vpop.f32.mrb[0].mxu0
  %792 = vmatprep.mubr.f32.mxu0 0.0
  %793 = vmatmul.mubr.f32.gmra.mrb[0].mxu0 %v415
  %v794 = vpop.f32.mrb[0].mxu0
  %v795 = vadd.f32 %v234, %v794
  %v796 = vpop.f32.mrb[0].mxu0
  %797 = vmatprep.mubr.f32.mxu0 0.0
  %798 = vmatmul.mubr.f32.gmra.mrb[0].mxu0 %v418
  %v799 = vpop.f32.mrb[0].mxu0
  %v800 = vadd.f32 %v234, %v799
  %v801 = vpop.f32.mrb[0].mxu0
  %802 = vmatprep.mubr.f32.mxu0 0.0
  %803 = vmatmul.mubr.f32.gmra.mrb[0].mxu0 %v421
  %v804 = vpop.f32.mrb[0].mxu0
  %v805 = vadd.f32 %v234, %v804
  %v806 = vpop.f32.mrb[0].mxu0
  %807 = vmatprep.mubr.f32.mxu0 0.0
  %808 = vmatmul.mubr.f32.gmra.mrb[0].mxu0 %v424
  %v809 = vpop.f32.mrb[0].mxu0
  %v810 = vadd.f32 %v234, %v809
  %v811 = vpop.f32.mrb[0].mxu0
  %812 = vmatprep.mubr.f32.mxu0 0.0
  %813 = vmatmul.mubr.f32.gmra.mrb[0].mxu0 %v427
  %v814 = vpop.f32.mrb[0].mxu0
  %v815 = vadd.f32 %v234, %v814
  %v816 = vpop.f32.mrb[0].mxu0
  %817 = vdwg.mxu0
  %818 = vst.msk [vmem:[%s5] sm:$0xff] %vm236, %v500
  %819 = vst.msk [vmem:[%s5 + $0x8] sm:$0xff] %vm236, %v505
  %820 = vst.msk [vmem:[%s5 + $0x10] sm:$0xff] %vm236, %v510
  %821 = vst.msk [vmem:[%s5 + $0x18] sm:$0xff] %vm236, %v515
  %822 = vst.msk [vmem:[%s5 + $0x20] sm:$0xff] %vm236, %v520
  %823 = vst.msk [vmem:[%s5 + $0x28] sm:$0xff] %vm236, %v525
  %824 = vst.msk [vmem:[%s5 + $0x30] sm:$0xff] %vm236, %v530
  %825 = vst.msk [vmem:[%s5 + $0x38] sm:$0xff] %vm236, %v535
  %826 = vst.msk [vmem:[%s5 + $0x40] sm:$0xff] %vm236, %v540
  %827 = vst.msk [vmem:[%s5 + $0x48] sm:$0xff] %vm236, %v545
  %828 = vst.msk [vmem:[%s5 + $0x50] sm:$0xff] %vm236, %v550
  %829 = vst.msk [vmem:[%s5 + $0x58] sm:$0xff] %vm236, %v555
  %830 = vst.msk [vmem:[%s5 + $0x60] sm:$0xff] %vm236, %v560
  %831 = vst.msk [vmem:[%s5 + $0x68] sm:$0xff] %vm236, %v565
  %832 = vst.msk [vmem:[%s5 + $0x70] sm:$0xff] %vm236, %v570
  %833 = vst.msk [vmem:[%s5 + $0x78] sm:$0xff] %vm236, %v575
  %834 = vst.msk [vmem:[%s5 + $0x80] sm:$0xff] %vm236, %v580
  %835 = vst.msk [vmem:[%s5 + $0x88] sm:$0xff] %vm236, %v585
  %836 = vst.msk [vmem:[%s5 + $0x90] sm:$0xff] %vm236, %v590
  %837 = vst.msk [vmem:[%s5 + $0x98] sm:$0xff] %vm236, %v595
  %838 = vst.msk [vmem:[%s5 + $0xa0] sm:$0xff] %vm236, %v600
  %839 = vst.msk [vmem:[%s5 + $0xa8] sm:$0xff] %vm236, %v605
  %840 = vst.msk [vmem:[%s5 + $0xb0] sm:$0xff] %vm236, %v610
  %841 = vst.msk [vmem:[%s5 + $0xb8] sm:$0xff] %vm236, %v615
  %842 = vst.msk [vmem:[%s5 + $0xc0] sm:$0xff] %vm236, %v620
  %843 = vst.msk [vmem:[%s5 + $0xc8] sm:$0xff] %vm236, %v625
  %844 = vst.msk [vmem:[%s5 + $0xd0] sm:$0xff] %vm236, %v630
  %845 = vst.msk [vmem:[%s5 + $0xd8] sm:$0xff] %vm236, %v635
  %846 = vst.msk [vmem:[%s5 + $0xe0] sm:$0xff] %vm236, %v640
  %847 = vst.msk [vmem:[%s5 + $0xe8] sm:$0xff] %vm236, %v645
  %848 = vst.msk [vmem:[%s5 + $0xf0] sm:$0xff] %vm236, %v650
  %849 = vst.msk [vmem:[%s5 + $0xf8] sm:$0xff] %vm236, %v655
  %850 = vst.msk [vmem:[%s5 + $0x100] sm:$0xff] %vm236, %v660
  %851 = vst.msk [vmem:[%s5 + $0x108] sm:$0xff] %vm236, %v665
  %852 = vst.msk [vmem:[%s5 + $0x110] sm:$0xff] %vm236, %v670
  %853 = vst.msk [vmem:[%s5 + $0x118] sm:$0xff] %vm236, %v675
  %854 = vst.msk [vmem:[%s5 + $0x120] sm:$0xff] %vm236, %v680
  %855 = vst.msk [vmem:[%s5 + $0x128] sm:$0xff] %vm236, %v685
  %856 = vst.msk [vmem:[%s5 + $0x130] sm:$0xff] %vm236, %v690
  %857 = vst.msk [vmem:[%s5 + $0x138] sm:$0xff] %vm236, %v695
  %858 = vst.msk [vmem:[%s5 + $0x140] sm:$0xff] %vm236, %v700
  %859 = vst.msk [vmem:[%s5 + $0x148] sm:$0xff] %vm236, %v705
  %860 = vst.msk [vmem:[%s5 + $0x150] sm:$0xff] %vm236, %v710
  %861 = vst.msk [vmem:[%s5 + $0x158] sm:$0xff] %vm236, %v715
  %862 = vst.msk [vmem:[%s5 + $0x160] sm:$0xff] %vm236, %v720
  %863 = vst.msk [vmem:[%s5 + $0x168] sm:$0xff] %vm236, %v725
  %864 = vst.msk [vmem:[%s5 + $0x170] sm:$0xff] %vm236, %v730
  %865 = vst.msk [vmem:[%s5 + $0x178] sm:$0xff] %vm236, %v735
  %866 = vst.msk [vmem:[%s5 + $0x180] sm:$0xff] %vm236, %v740
  %867 = vst.msk [vmem:[%s5 + $0x188] sm:$0xff] %vm236, %v745
  %868 = vst.msk [vmem:[%s5 + $0x190] sm:$0xff] %vm236, %v750
  %869 = vst.msk [vmem:[%s5 + $0x198] sm:$0xff] %vm236, %v755
  %870 = vst.msk [vmem:[%s5 + $0x1a0] sm:$0xff] %vm236, %v760
  %871 = vst.msk [vmem:[%s5 + $0x1a8] sm:$0xff] %vm236, %v765
  %872 = vst.msk [vmem:[%s5 + $0x1b0] sm:$0xff] %vm236, %v770
  %873 = vst.msk [vmem:[%s5 + $0x1b8] sm:$0xff] %vm236, %v775
  %874 = vst.msk [vmem:[%s5 + $0x1c0] sm:$0xff] %vm236, %v780
  %875 = vst.msk [vmem:[%s5 + $0x1c8] sm:$0xff] %vm236, %v785
  %876 = vst.msk [vmem:[%s5 + $0x1d0] sm:$0xff] %vm236, %v790
  %877 = vst.msk [vmem:[%s5 + $0x1d8] sm:$0xff] %vm236, %v795
  %878 = vst.msk [vmem:[%s5 + $0x1e0] sm:$0xff] %vm236, %v800
  %879 = vst.msk [vmem:[%s5 + $0x1e8] sm:$0xff] %vm236, %v805
  %880 = vst.msk [vmem:[%s5 + $0x1f0] sm:$0xff] %vm236, %v810
  %881 = vst.msk [vmem:[%s5 + $0x1f8] sm:$0xff] %vm236, %v815
  %s882 = smul.u32 0, 512
  %v883 = vlaneseq
  %v884 = vshrl.u32 %v883, 7
  %v885 = vadd.s32 %v884, 8
  %v886 = vadd.s32 %v884, 16
  %v887 = vadd.s32 %v884, 24
  %v888 = vadd.s32 %v884, 32
  %v889 = vadd.s32 %v884, 40
  %v890 = vadd.s32 %v884, 48
  %v891 = vadd.s32 %v884, 56
  %v892 = vadd.s32 %v884, 64
  %v893 = vadd.s32 %v884, 72
  %v894 = vadd.s32 %v884, 80
  %v895 = vadd.s32 %v884, 88
  %v896 = vadd.s32 %v884, 96
  %v897 = vadd.s32 %v884, 104
  %v898 = vadd.s32 %v884, 112
  %v899 = vadd.s32 %v884, 120
  %v900 = vadd.s32 %v884, 128
  %v901 = vadd.s32 %v884, 136
  %v902 = vadd.s32 %v884, 144
  %v903 = vadd.s32 %v884, 152
  %v904 = vadd.s32 %v884, 160
  %v905 = vadd.s32 %v884, 168
  %v906 = vadd.s32 %v884, 176
  %v907 = vadd.s32 %v884, 184
  %v908 = vadd.s32 %v884, 192
  %v909 = vadd.s32 %v884, 200
  %v910 = vadd.s32 %v884, 208
  %v911 = vadd.s32 %v884, 216
  %v912 = vadd.s32 %v884, 224
  %v913 = vadd.s32 %v884, 232
  %v914 = vadd.s32 %v884, 240
  %v915 = vadd.s32 %v884, 248
  %v916 = vadd.s32 %v884, 256
  %v917 = vadd.s32 %v884, 264
  %v918 = vadd.s32 %v884, 272
  %v919 = vadd.s32 %v884, 280
  %v920 = vadd.s32 %v884, 288
  %v921 = vadd.s32 %v884, 296
  %v922 = vadd.s32 %v884, 304
  %v923 = vadd.s32 %v884, 312
  %v924 = vadd.s32 %v884, 320
  %v925 = vadd.s32 %v884, 328
  %v926 = vadd.s32 %v884, 336
  %v927 = vadd.s32 %v884, 344
  %v928 = vadd.s32 %v884, 352
  %v929 = vadd.s32 %v884, 360
  %v930 = vadd.s32 %v884, 368
  %v931 = vadd.s32 %v884, 376
  %v932 = vadd.s32 %v884, 384
  %v933 = vadd.s32 %v884, 392
  %v934 = vadd.s32 %v884, 400
  %v935 = vadd.s32 %v884, 408
  %v936 = vadd.s32 %v884, 416
  %v937 = vadd.s32 %v884, 424
  %v938 = vadd.s32 %v884, 432
  %v939 = vadd.s32 %v884, 440
  %v940 = vadd.s32 %v884, 448
  %v941 = vadd.s32 %v884, 456
  %v942 = vadd.s32 %v884, 464
  %v943 = vadd.s32 %v884, 472
  %v944 = vadd.s32 %v884, 480
  %v945 = vadd.s32 %v884, 488
  %v946 = vadd.s32 %v884, 496
  %v947 = vadd.s32 %v884, 504
  %v948 = vstv %s882
  %v949 = vadd.s32 %v948, %v884
  %v950 = vadd.s32 %v948, %v885
  %v951 = vadd.s32 %v948, %v886
  %v952 = vadd.s32 %v948, %v887
  %v953 = vadd.s32 %v948, %v888
  %v954 = vadd.s32 %v948, %v889
  %v955 = vadd.s32 %v948, %v890
  %v956 = vadd.s32 %v948, %v891
  %v957 = vadd.s32 %v948, %v892
  %v958 = vadd.s32 %v948, %v893
  %v959 = vadd.s32 %v948, %v894
  %v960 = vadd.s32 %v948, %v895
  %v961 = vadd.s32 %v948, %v896
  %v962 = vadd.s32 %v948, %v897
  %v963 = vadd.s32 %v948, %v898
  %v964 = vadd.s32 %v948, %v899
  %v965 = vadd.s32 %v948, %v900
  %v966 = vadd.s32 %v948, %v901
  %v967 = vadd.s32 %v948, %v902
  %v968 = vadd.s32 %v948, %v903
  %v969 = vadd.s32 %v948, %v904
  %v970 = vadd.s32 %v948, %v905
  %v971 = vadd.s32 %v948, %v906
  %v972 = vadd.s32 %v948, %v907
  %v973 = vadd.s32 %v948, %v908
  %v974 = vadd.s32 %v948, %v909
  %v975 = vadd.s32 %v948, %v910
  %v976 = vadd.s32 %v948, %v911
  %v977 = vadd.s32 %v948, %v912
  %v978 = vadd.s32 %v948, %v913
  %v979 = vadd.s32 %v948, %v914
  %v980 = vadd.s32 %v948, %v915
  %v981 = vadd.s32 %v948, %v916
  %v982 = vadd.s32 %v948, %v917
  %v983 = vadd.s32 %v948, %v918
  %v984 = vadd.s32 %v948, %v919
  %v985 = vadd.s32 %v948, %v920
  %v986 = vadd.s32 %v948, %v921
  %v987 = vadd.s32 %v948, %v922
  %v988 = vadd.s32 %v948, %v923
  %v989 = vadd.s32 %v948, %v924
  %v990 = vadd.s32 %v948, %v925
  %v991 = vadd.s32 %v948, %v926
  %v992 = vadd.s32 %v948, %v927
  %v993 = vadd.s32 %v948, %v928
  %v994 = vadd.s32 %v948, %v929
  %v995 = vadd.s32 %v948, %v930
  %v996 = vadd.s32 %v948, %v931
  %v997 = vadd.s32 %v948, %v932
  %v998 = vadd.s32 %v948, %v933
  %v999 = vadd.s32 %v948, %v934
  %v1000 = vadd.s32 %v948, %v935
  %v1001 = vadd.s32 %v948, %v936
  %v1002 = vadd.s32 %v948, %v937
  %v1003 = vadd.s32 %v948, %v938
  %v1004 = vadd.s32 %v948, %v939
  %v1005 = vadd.s32 %v948, %v940
  %v1006 = vadd.s32 %v948, %v941
  %v1007 = vadd.s32 %v948, %v942
  %v1008 = vadd.s32 %v948, %v943
  %v1009 = vadd.s32 %v948, %v944
  %v1010 = vadd.s32 %v948, %v945
  %v1011 = vadd.s32 %v948, %v946
  %v1012 = vadd.s32 %v948, %v947
  %vm1013 = vcmp.lt.s32.totalorder %v949, 512
  %vm1014 = vcmp.lt.s32.totalorder %v950, 512
  %vm1015 = vcmp.lt.s32.totalorder %v951, 512
  %vm1016 = vcmp.lt.s32.totalorder %v952, 512
  %vm1017 = vcmp.lt.s32.totalorder %v953, 512
  %vm1018 = vcmp.lt.s32.totalorder %v954, 512
  %vm1019 = vcmp.lt.s32.totalorder %v955, 512
  %vm1020 = vcmp.lt.s32.totalorder %v956, 512
  %vm1021 = vcmp.lt.s32.totalorder %v957, 512
  %vm1022 = vcmp.lt.s32.totalorder %v958, 512
  %vm1023 = vcmp.lt.s32.totalorder %v959, 512
  %vm1024 = vcmp.lt.s32.totalorder %v960, 512
  %vm1025 = vcmp.lt.s32.totalorder %v961, 512
  %vm1026 = vcmp.lt.s32.totalorder %v962, 512
  %vm1027 = vcmp.lt.s32.totalorder %v963, 512
  %vm1028 = vcmp.lt.s32.totalorder %v964, 512
  %vm1029 = vcmp.lt.s32.totalorder %v965, 512
  %vm1030 = vcmp.lt.s32.totalorder %v966, 512
  %vm1031 = vcmp.lt.s32.totalorder %v967, 512
  %vm1032 = vcmp.lt.s32.totalorder %v968, 512
  %vm1033 = vcmp.lt.s32.totalorder %v969, 512
  %vm1034 = vcmp.lt.s32.totalorder %v970, 512
  %vm1035 = vcmp.lt.s32.totalorder %v971, 512
  %vm1036 = vcmp.lt.s32.totalorder %v972, 512
  %vm1037 = vcmp.lt.s32.totalorder %v973, 512
  %vm1038 = vcmp.lt.s32.totalorder %v974, 512
  %vm1039 = vcmp.lt.s32.totalorder %v975, 512
  %vm1040 = vcmp.lt.s32.totalorder %v976, 512
  %vm1041 = vcmp.lt.s32.totalorder %v977, 512
  %vm1042 = vcmp.lt.s32.totalorder %v978, 512
  %vm1043 = vcmp.lt.s32.totalorder %v979, 512
  %vm1044 = vcmp.lt.s32.totalorder %v980, 512
  %vm1045 = vcmp.lt.s32.totalorder %v981, 512
  %vm1046 = vcmp.lt.s32.totalorder %v982, 512
  %vm1047 = vcmp.lt.s32.totalorder %v983, 512
  %vm1048 = vcmp.lt.s32.totalorder %v984, 512
  %vm1049 = vcmp.lt.s32.totalorder %v985, 512
  %vm1050 = vcmp.lt.s32.totalorder %v986, 512
  %vm1051 = vcmp.lt.s32.totalorder %v987, 512
  %vm1052 = vcmp.lt.s32.totalorder %v988, 512
  %vm1053 = vcmp.lt.s32.totalorder %v989, 512
  %vm1054 = vcmp.lt.s32.totalorder %v990, 512
  %vm1055 = vcmp.lt.s32.totalorder %v991, 512
  %vm1056 = vcmp.lt.s32.totalorder %v992, 512
  %vm1057 = vcmp.lt.s32.totalorder %v993, 512
  %vm1058 = vcmp.lt.s32.totalorder %v994, 512
  %vm1059 = vcmp.lt.s32.totalorder %v995, 512
  %vm1060 = vcmp.lt.s32.totalorder %v996, 512
  %vm1061 = vcmp.lt.s32.totalorder %v997, 512
  %vm1062 = vcmp.lt.s32.totalorder %v998, 512
  %vm1063 = vcmp.lt.s32.totalorder %v999, 512
  %vm1064 = vcmp.lt.s32.totalorder %v1000, 512
  %vm1065 = vcmp.lt.s32.totalorder %v1001, 512
  %vm1066 = vcmp.lt.s32.totalorder %v1002, 512
  %vm1067 = vcmp.lt.s32.totalorder %v1003, 512
  %vm1068 = vcmp.lt.s32.totalorder %v1004, 512
  %vm1069 = vcmp.lt.s32.totalorder %v1005, 512
  %vm1070 = vcmp.lt.s32.totalorder %v1006, 512
  %vm1071 = vcmp.lt.s32.totalorder %v1007, 512
  %vm1072 = vcmp.lt.s32.totalorder %v1008, 512
  %vm1073 = vcmp.lt.s32.totalorder %v1009, 512
  %vm1074 = vcmp.lt.s32.totalorder %v1010, 512
  %vm1075 = vcmp.lt.s32.totalorder %v1011, 512
  %vm1076 = vcmp.lt.s32.totalorder %v1012, 512
  %v1077 = vsel %vm1013, 1, 0
  %v1078 = vsel %vm1014, 1, 0
  %v1079 = vsel %vm1015, 1, 0
  %v1080 = vsel %vm1016, 1, 0
  %v1081 = vsel %vm1017, 1, 0
  %v1082 = vsel %vm1018, 1, 0
  %v1083 = vsel %vm1019, 1, 0
  %v1084 = vsel %vm1020, 1, 0
  %v1085 = vsel %vm1021, 1, 0
  %v1086 = vsel %vm1022, 1, 0
  %v1087 = vsel %vm1023, 1, 0
  %v1088 = vsel %vm1024, 1, 0
  %v1089 = vsel %vm1025, 1, 0
  %v1090 = vsel %vm1026, 1, 0
  %v1091 = vsel %vm1027, 1, 0
  %v1092 = vsel %vm1028, 1, 0
  %v1093 = vsel %vm1029, 1, 0
  %v1094 = vsel %vm1030, 1, 0
  %v1095 = vsel %vm1031, 1, 0
  %v1096 = vsel %vm1032, 1, 0
  %v1097 = vsel %vm1033, 1, 0
  %v1098 = vsel %vm1034, 1, 0
  %v1099 = vsel %vm1035, 1, 0
  %v1100 = vsel %vm1036, 1, 0
  %v1101 = vsel %vm1037, 1, 0
  %v1102 = vsel %vm1038, 1, 0
  %v1103 = vsel %vm1039, 1, 0
  %v1104 = vsel %vm1040, 1, 0
  %v1105 = vsel %vm1041, 1, 0
  %v1106 = vsel %vm1042, 1, 0
  %v1107 = vsel %vm1043, 1, 0
  %v1108 = vsel %vm1044, 1, 0
  %v1109 = vsel %vm1045, 1, 0
  %v1110 = vsel %vm1046, 1, 0
  %v1111 = vsel %vm1047, 1, 0
  %v1112 = vsel %vm1048, 1, 0
  %v1113 = vsel %vm1049, 1, 0
  %v1114 = vsel %vm1050, 1, 0
  %v1115 = vsel %vm1051, 1, 0
  %v1116 = vsel %vm1052, 1, 0
  %v1117 = vsel %vm1053, 1, 0
  %v1118 = vsel %vm1054, 1, 0
  %v1119 = vsel %vm1055, 1, 0
  %v1120 = vsel %vm1056, 1, 0
  %v1121 = vsel %vm1057, 1, 0
  %v1122 = vsel %vm1058, 1, 0
  %v1123 = vsel %vm1059, 1, 0
  %v1124 = vsel %vm1060, 1, 0
  %v1125 = vsel %vm1061, 1, 0
  %v1126 = vsel %vm1062, 1, 0
  %v1127 = vsel %vm1063, 1, 0
  %v1128 = vsel %vm1064, 1, 0
  %v1129 = vsel %vm1065, 1, 0
  %v1130 = vsel %vm1066, 1, 0
  %v1131 = vsel %vm1067, 1, 0
  %v1132 = vsel %vm1068, 1, 0
  %v1133 = vsel %vm1069, 1, 0
  %v1134 = vsel %vm1070, 1, 0
  %v1135 = vsel %vm1071, 1, 0
  %v1136 = vsel %vm1072, 1, 0
  %v1137 = vsel %vm1073, 1, 0
  %v1138 = vsel %vm1074, 1, 0
  %v1139 = vsel %vm1075, 1, 0
  %v1140 = vsel %vm1076, 1, 0
  %vm1141 = vcmp.eq.s32.totalorder %v1077, 1
  %vm1142 = vcmp.eq.s32.totalorder %v1078, 1
  %vm1143 = vcmp.eq.s32.totalorder %v1079, 1
  %vm1144 = vcmp.eq.s32.totalorder %v1080, 1
  %vm1145 = vcmp.eq.s32.totalorder %v1081, 1
  %vm1146 = vcmp.eq.s32.totalorder %v1082, 1
  %vm1147 = vcmp.eq.s32.totalorder %v1083, 1
  %vm1148 = vcmp.eq.s32.totalorder %v1084, 1
  %vm1149 = vcmp.eq.s32.totalorder %v1085, 1
  %vm1150 = vcmp.eq.s32.totalorder %v1086, 1
  %vm1151 = vcmp.eq.s32.totalorder %v1087, 1
  %vm1152 = vcmp.eq.s32.totalorder %v1088, 1
  %vm1153 = vcmp.eq.s32.totalorder %v1089, 1
  %vm1154 = vcmp.eq.s32.totalorder %v1090, 1
  %vm1155 = vcmp.eq.s32.totalorder %v1091, 1
  %vm1156 = vcmp.eq.s32.totalorder %v1092, 1
  %vm1157 = vcmp.eq.s32.totalorder %v1093, 1
  %vm1158 = vcmp.eq.s32.totalorder %v1094, 1
  %vm1159 = vcmp.eq.s32.totalorder %v1095, 1
  %vm1160 = vcmp.eq.s32.totalorder %v1096, 1
  %vm1161 = vcmp.eq.s32.totalorder %v1097, 1
  %vm1162 = vcmp.eq.s32.totalorder %v1098, 1
  %vm1163 = vcmp.eq.s32.totalorder %v1099, 1
  %vm1164 = vcmp.eq.s32.totalorder %v1100, 1
  %vm1165 = vcmp.eq.s32.totalorder %v1101, 1
  %vm1166 = vcmp.eq.s32.totalorder %v1102, 1
  %vm1167 = vcmp.eq.s32.totalorder %v1103, 1
  %vm1168 = vcmp.eq.s32.totalorder %v1104, 1
  %vm1169 = vcmp.eq.s32.totalorder %v1105, 1
  %vm1170 = vcmp.eq.s32.totalorder %v1106, 1
  %vm1171 = vcmp.eq.s32.totalorder %v1107, 1
  %vm1172 = vcmp.eq.s32.totalorder %v1108, 1
  %vm1173 = vcmp.eq.s32.totalorder %v1109, 1
  %vm1174 = vcmp.eq.s32.totalorder %v1110, 1
  %vm1175 = vcmp.eq.s32.totalorder %v1111, 1
  %vm1176 = vcmp.eq.s32.totalorder %v1112, 1
  %vm1177 = vcmp.eq.s32.totalorder %v1113, 1
  %vm1178 = vcmp.eq.s32.totalorder %v1114, 1
  %vm1179 = vcmp.eq.s32.totalorder %v1115, 1
  %vm1180 = vcmp.eq.s32.totalorder %v1116, 1
  %vm1181 = vcmp.eq.s32.totalorder %v1117, 1
  %vm1182 = vcmp.eq.s32.totalorder %v1118, 1
  %vm1183 = vcmp.eq.s32.totalorder %v1119, 1
  %vm1184 = vcmp.eq.s32.totalorder %v1120, 1
  %vm1185 = vcmp.eq.s32.totalorder %v1121, 1
  %vm1186 = vcmp.eq.s32.totalorder %v1122, 1
  %vm1187 = vcmp.eq.s32.totalorder %v1123, 1
  %vm1188 = vcmp.eq.s32.totalorder %v1124, 1
  %vm1189 = vcmp.eq.s32.totalorder %v1125, 1
  %vm1190 = vcmp.eq.s32.totalorder %v1126, 1
  %vm1191 = vcmp.eq.s32.totalorder %v1127, 1
  %vm1192 = vcmp.eq.s32.totalorder %v1128, 1
  %vm1193 = vcmp.eq.s32.totalorder %v1129, 1
  %vm1194 = vcmp.eq.s32.totalorder %v1130, 1
  %vm1195 = vcmp.eq.s32.totalorder %v1131, 1
  %vm1196 = vcmp.eq.s32.totalorder %v1132, 1
  %vm1197 = vcmp.eq.s32.totalorder %v1133, 1
  %vm1198 = vcmp.eq.s32.totalorder %v1134, 1
  %vm1199 = vcmp.eq.s32.totalorder %v1135, 1
  %vm1200 = vcmp.eq.s32.totalorder %v1136, 1
  %vm1201 = vcmp.eq.s32.totalorder %v1137, 1
  %vm1202 = vcmp.eq.s32.totalorder %v1138, 1
  %vm1203 = vcmp.eq.s32.totalorder %v1139, 1
  %vm1204 = vcmp.eq.s32.totalorder %v1140, 1
  %v1205 = vsel %vm1141, %v500, 0.0
  %v1206 = vsel %vm1142, %v505, 0.0
  %v1207 = vsel %vm1143, %v510, 0.0
  %v1208 = vsel %vm1144, %v515, 0.0
  %v1209 = vsel %vm1145, %v520, 0.0
  %v1210 = vsel %vm1146, %v525, 0.0
  %v1211 = vsel %vm1147, %v530, 0.0
  %v1212 = vsel %vm1148, %v535, 0.0
  %v1213 = vsel %vm1149, %v540, 0.0
  %v1214 = vsel %vm1150, %v545, 0.0
  %v1215 = vsel %vm1151, %v550, 0.0
  %v1216 = vsel %vm1152, %v555, 0.0
  %v1217 = vsel %vm1153, %v560, 0.0
  %v1218 = vsel %vm1154, %v565, 0.0
  %v1219 = vsel %vm1155, %v570, 0.0
  %v1220 = vsel %vm1156, %v575, 0.0
  %v1221 = vsel %vm1157, %v580, 0.0
  %v1222 = vsel %vm1158, %v585, 0.0
  %v1223 = vsel %vm1159, %v590, 0.0
  %v1224 = vsel %vm1160, %v595, 0.0
  %v1225 = vsel %vm1161, %v600, 0.0
  %v1226 = vsel %vm1162, %v605, 0.0
  %v1227 = vsel %vm1163, %v610, 0.0
  %v1228 = vsel %vm1164, %v615, 0.0
  %v1229 = vsel %vm1165, %v620, 0.0
  %v1230 = vsel %vm1166, %v625, 0.0
  %v1231 = vsel %vm1167, %v630, 0.0
  %v1232 = vsel %vm1168, %v635, 0.0
  %v1233 = vsel %vm1169, %v640, 0.0
  %v1234 = vsel %vm1170, %v645, 0.0
  %v1235 = vsel %vm1171, %v650, 0.0
  %v1236 = vsel %vm1172, %v655, 0.0
  %v1237 = vsel %vm1173, %v660, 0.0
  %v1238 = vsel %vm1174, %v665, 0.0
  %v1239 = vsel %vm1175, %v670, 0.0
  %v1240 = vsel %vm1176, %v675, 0.0
  %v1241 = vsel %vm1177, %v680, 0.0
  %v1242 = vsel %vm1178, %v685, 0.0
  %v1243 = vsel %vm1179, %v690, 0.0
  %v1244 = vsel %vm1180, %v695, 0.0
  %v1245 = vsel %vm1181, %v700, 0.0
  %v1246 = vsel %vm1182, %v705, 0.0
  %v1247 = vsel %vm1183, %v710, 0.0
  %v1248 = vsel %vm1184, %v715, 0.0
  %v1249 = vsel %vm1185, %v720, 0.0
  %v1250 = vsel %vm1186, %v725, 0.0
  %v1251 = vsel %vm1187, %v730, 0.0
  %v1252 = vsel %vm1188, %v735, 0.0
  %v1253 = vsel %vm1189, %v740, 0.0
  %v1254 = vsel %vm1190, %v745, 0.0
  %v1255 = vsel %vm1191, %v750, 0.0
  %v1256 = vsel %vm1192, %v755, 0.0
  %v1257 = vsel %vm1193, %v760, 0.0
  %v1258 = vsel %vm1194, %v765, 0.0
  %v1259 = vsel %vm1195, %v770, 0.0
  %v1260 = vsel %vm1196, %v775, 0.0
  %v1261 = vsel %vm1197, %v780, 0.0
  %v1262 = vsel %vm1198, %v785, 0.0
  %v1263 = vsel %vm1199, %v790, 0.0
  %v1264 = vsel %vm1200, %v795, 0.0
  %v1265 = vsel %vm1201, %v800, 0.0
  %v1266 = vsel %vm1202, %v805, 0.0
  %v1267 = vsel %vm1203, %v810, 0.0
  %v1268 = vsel %vm1204, %v815, 0.0
  %v1269 = vsel %vm236, %v1205, 0.0
  %v1270 = vsel %vm236, %v1206, 0.0
  %v1271 = vadd.f32 %v1269, %v1270
  %v1272 = vsel %vm236, %v1207, 0.0
  %v1273 = vadd.f32 %v1271, %v1272
  %v1274 = vsel %vm236, %v1208, 0.0
  %v1275 = vadd.f32 %v1273, %v1274
  %v1276 = vsel %vm236, %v1209, 0.0
  %v1277 = vadd.f32 %v1275, %v1276
  %v1278 = vsel %vm236, %v1210, 0.0
  %v1279 = vadd.f32 %v1277, %v1278
  %v1280 = vsel %vm236, %v1211, 0.0
  %v1281 = vadd.f32 %v1279, %v1280
  %v1282 = vsel %vm236, %v1212, 0.0
  %v1283 = vadd.f32 %v1281, %v1282
  %v1284 = vsel %vm236, %v1213, 0.0
  %v1285 = vadd.f32 %v1283, %v1284
  %v1286 = vsel %vm236, %v1214, 0.0
  %v1287 = vadd.f32 %v1285, %v1286
  %v1288 = vsel %vm236, %v1215, 0.0
  %v1289 = vadd.f32 %v1287, %v1288
  %v1290 = vsel %vm236, %v1216, 0.0
  %v1291 = vadd.f32 %v1289, %v1290
  %v1292 = vsel %vm236, %v1217, 0.0
  %v1293 = vadd.f32 %v1291, %v1292
  %v1294 = vsel %vm236, %v1218, 0.0
  %v1295 = vadd.f32 %v1293, %v1294
  %v1296 = vsel %vm236, %v1219, 0.0
  %v1297 = vadd.f32 %v1295, %v1296
  %v1298 = vsel %vm236, %v1220, 0.0
  %v1299 = vadd.f32 %v1297, %v1298
  %v1300 = vsel %vm236, %v1221, 0.0
  %v1301 = vadd.f32 %v1299, %v1300
  %v1302 = vsel %vm236, %v1222, 0.0
  %v1303 = vadd.f32 %v1301, %v1302
  %v1304 = vsel %vm236, %v1223, 0.0
  %v1305 = vadd.f32 %v1303, %v1304
  %v1306 = vsel %vm236, %v1224, 0.0
  %v1307 = vadd.f32 %v1305, %v1306
  %v1308 = vsel %vm236, %v1225, 0.0
  %v1309 = vadd.f32 %v1307, %v1308
  %v1310 = vsel %vm236, %v1226, 0.0
  %v1311 = vadd.f32 %v1309, %v1310
  %v1312 = vsel %vm236, %v1227, 0.0
  %v1313 = vadd.f32 %v1311, %v1312
  %v1314 = vsel %vm236, %v1228, 0.0
  %v1315 = vadd.f32 %v1313, %v1314
  %v1316 = vsel %vm236, %v1229, 0.0
  %v1317 = vadd.f32 %v1315, %v1316
  %v1318 = vsel %vm236, %v1230, 0.0
  %v1319 = vadd.f32 %v1317, %v1318
  %v1320 = vsel %vm236, %v1231, 0.0
  %v1321 = vadd.f32 %v1319, %v1320
  %v1322 = vsel %vm236, %v1232, 0.0
  %v1323 = vadd.f32 %v1321, %v1322
  %v1324 = vsel %vm236, %v1233, 0.0
  %v1325 = vadd.f32 %v1323, %v1324
  %v1326 = vsel %vm236, %v1234, 0.0
  %v1327 = vadd.f32 %v1325, %v1326
  %v1328 = vsel %vm236, %v1235, 0.0
  %v1329 = vadd.f32 %v1327, %v1328
  %v1330 = vsel %vm236, %v1236, 0.0
  %v1331 = vadd.f32 %v1329, %v1330
  %v1332 = vsel %vm236, %v1237, 0.0
  %v1333 = vadd.f32 %v1331, %v1332
  %v1334 = vsel %vm236, %v1238, 0.0
  %v1335 = vadd.f32 %v1333, %v1334
  %v1336 = vsel %vm236, %v1239, 0.0
  %v1337 = vadd.f32 %v1335, %v1336
  %v1338 = vsel %vm236, %v1240, 0.0
  %v1339 = vadd.f32 %v1337, %v1338
  %v1340 = vsel %vm236, %v1241, 0.0
  %v1341 = vadd.f32 %v1339, %v1340
  %v1342 = vsel %vm236, %v1242, 0.0
  %v1343 = vadd.f32 %v1341, %v1342
  %v1344 = vsel %vm236, %v1243, 0.0
  %v1345 = vadd.f32 %v1343, %v1344
  %v1346 = vsel %vm236, %v1244, 0.0
  %v1347 = vadd.f32 %v1345, %v1346
  %v1348 = vsel %vm236, %v1245, 0.0
  %v1349 = vadd.f32 %v1347, %v1348
  %v1350 = vsel %vm236, %v1246, 0.0
  %v1351 = vadd.f32 %v1349, %v1350
  %v1352 = vsel %vm236, %v1247, 0.0
  %v1353 = vadd.f32 %v1351, %v1352
  %v1354 = vsel %vm236, %v1248, 0.0
  %v1355 = vadd.f32 %v1353, %v1354
  %v1356 = vsel %vm236, %v1249, 0.0
  %v1357 = vadd.f32 %v1355, %v1356
  %v1358 = vsel %vm236, %v1250, 0.0
  %v1359 = vadd.f32 %v1357, %v1358
  %v1360 = vsel %vm236, %v1251, 0.0
  %v1361 = vadd.f32 %v1359, %v1360
  %v1362 = vsel %vm236, %v1252, 0.0
  %v1363 = vadd.f32 %v1361, %v1362
  %v1364 = vsel %vm236, %v1253, 0.0
  %v1365 = vadd.f32 %v1363, %v1364
  %v1366 = vsel %vm236, %v1254, 0.0
  %v1367 = vadd.f32 %v1365, %v1366
  %v1368 = vsel %vm236, %v1255, 0.0
  %v1369 = vadd.f32 %v1367, %v1368
  %v1370 = vsel %vm236, %v1256, 0.0
  %v1371 = vadd.f32 %v1369, %v1370
  %v1372 = vsel %vm236, %v1257, 0.0
  %v1373 = vadd.f32 %v1371, %v1372
  %v1374 = vsel %vm236, %v1258, 0.0
  %v1375 = vadd.f32 %v1373, %v1374
  %v1376 = vsel %vm236, %v1259, 0.0
  %v1377 = vadd.f32 %v1375, %v1376
  %v1378 = vsel %vm236, %v1260, 0.0
  %v1379 = vadd.f32 %v1377, %v1378
  %v1380 = vsel %vm236, %v1261, 0.0
  %v1381 = vadd.f32 %v1379, %v1380
  %v1382 = vsel %vm236, %v1262, 0.0
  %v1383 = vadd.f32 %v1381, %v1382
  %v1384 = vsel %vm236, %v1263, 0.0
  %v1385 = vadd.f32 %v1383, %v1384
  %v1386 = vsel %vm236, %v1264, 0.0
  %v1387 = vadd.f32 %v1385, %v1386
  %v1388 = vsel %vm236, %v1265, 0.0
  %v1389 = vadd.f32 %v1387, %v1388
  %v1390 = vsel %vm236, %v1266, 0.0
  %v1391 = vadd.f32 %v1389, %v1390
  %v1392 = vsel %vm236, %v1267, 0.0
  %v1393 = vadd.f32 %v1391, %v1392
  %v1394 = vsel %vm236, %v1268, 0.0
  %v1395 = vadd.f32 %v1393, %v1394
  %v1396 = vrot.slane %v1395, 4
  %v1397 = vadd.f32 %v1395, %v1396
  %v1398 = vrot.slane %v1397, 2
  %v1399 = vadd.f32 %v1397, %v1398
  %v1400 = vrot.slane %v1399, 1
  %v1401 = vadd.f32 %v1399, %v1400
  %vm1402 = vcmask 24576
  %1403 = vst.msk [vmem:[%s6] sm:$0x1] %vm1402, %v1401
  %v1404 = vmul.f32 %v1205, %v1205
  %v1405 = vmul.f32 %v1206, %v1206
  %v1406 = vmul.f32 %v1207, %v1207
  %v1407 = vmul.f32 %v1208, %v1208
  %v1408 = vmul.f32 %v1209, %v1209
  %v1409 = vmul.f32 %v1210, %v1210
  %v1410 = vmul.f32 %v1211, %v1211
  %v1411 = vmul.f32 %v1212, %v1212
  %v1412 = vmul.f32 %v1213, %v1213
  %v1413 = vmul.f32 %v1214, %v1214
  %v1414 = vmul.f32 %v1215, %v1215
  %v1415 = vmul.f32 %v1216, %v1216
  %v1416 = vmul.f32 %v1217, %v1217
  %v1417 = vmul.f32 %v1218, %v1218
  %v1418 = vmul.f32 %v1219, %v1219
  %v1419 = vmul.f32 %v1220, %v1220
  %v1420 = vmul.f32 %v1221, %v1221
  %v1421 = vmul.f32 %v1222, %v1222
  %v1422 = vmul.f32 %v1223, %v1223
  %v1423 = vmul.f32 %v1224, %v1224
  %v1424 = vmul.f32 %v1225, %v1225
  %v1425 = vmul.f32 %v1226, %v1226
  %v1426 = vmul.f32 %v1227, %v1227
  %v1427 = vmul.f32 %v1228, %v1228
  %v1428 = vmul.f32 %v1229, %v1229
  %v1429 = vmul.f32 %v1230, %v1230
  %v1430 = vmul.f32 %v1231, %v1231
  %v1431 = vmul.f32 %v1232, %v1232
  %v1432 = vmul.f32 %v1233, %v1233
  %v1433 = vmul.f32 %v1234, %v1234
  %v1434 = vmul.f32 %v1235, %v1235
  %v1435 = vmul.f32 %v1236, %v1236
  %v1436 = vmul.f32 %v1237, %v1237
  %v1437 = vmul.f32 %v1238, %v1238
  %v1438 = vmul.f32 %v1239, %v1239
  %v1439 = vmul.f32 %v1240, %v1240
  %v1440 = vmul.f32 %v1241, %v1241
  %v1441 = vmul.f32 %v1242, %v1242
  %v1442 = vmul.f32 %v1243, %v1243
  %v1443 = vmul.f32 %v1244, %v1244
  %v1444 = vmul.f32 %v1245, %v1245
  %v1445 = vmul.f32 %v1246, %v1246
  %v1446 = vmul.f32 %v1247, %v1247
  %v1447 = vmul.f32 %v1248, %v1248
  %v1448 = vmul.f32 %v1249, %v1249
  %v1449 = vmul.f32 %v1250, %v1250
  %v1450 = vmul.f32 %v1251, %v1251
  %v1451 = vmul.f32 %v1252, %v1252
  %v1452 = vmul.f32 %v1253, %v1253
  %v1453 = vmul.f32 %v1254, %v1254
  %v1454 = vmul.f32 %v1255, %v1255
  %v1455 = vmul.f32 %v1256, %v1256
  %v1456 = vmul.f32 %v1257, %v1257
  %v1457 = vmul.f32 %v1258, %v1258
  %v1458 = vmul.f32 %v1259, %v1259
  %v1459 = vmul.f32 %v1260, %v1260
  %v1460 = vmul.f32 %v1261, %v1261
  %v1461 = vmul.f32 %v1262, %v1262
  %v1462 = vmul.f32 %v1263, %v1263
  %v1463 = vmul.f32 %v1264, %v1264
  %v1464 = vmul.f32 %v1265, %v1265
  %v1465 = vmul.f32 %v1266, %v1266
  %v1466 = vmul.f32 %v1267, %v1267
  %v1467 = vmul.f32 %v1268, %v1268
  %v1468 = vsel %vm236, %v1404, 0.0
  %v1469 = vsel %vm236, %v1405, 0.0
  %v1470 = vadd.f32 %v1468, %v1469
  %v1471 = vsel %vm236, %v1406, 0.0
  %v1472 = vadd.f32 %v1470, %v1471
  %v1473 = vsel %vm236, %v1407, 0.0
  %v1474 = vadd.f32 %v1472, %v1473
  %v1475 = vsel %vm236, %v1408, 0.0
  %v1476 = vadd.f32 %v1474, %v1475
  %v1477 = vsel %vm236, %v1409, 0.0
  %v1478 = vadd.f32 %v1476, %v1477
  %v1479 = vsel %vm236, %v1410, 0.0
  %v1480 = vadd.f32 %v1478, %v1479
  %v1481 = vsel %vm236, %v1411, 0.0
  %v1482 = vadd.f32 %v1480, %v1481
  %v1483 = vsel %vm236, %v1412, 0.0
  %v1484 = vadd.f32 %v1482, %v1483
  %v1485 = vsel %vm236, %v1413, 0.0
  %v1486 = vadd.f32 %v1484, %v1485
  %v1487 = vsel %vm236, %v1414, 0.0
  %v1488 = vadd.f32 %v1486, %v1487
  %v1489 = vsel %vm236, %v1415, 0.0
  %v1490 = vadd.f32 %v1488, %v1489
  %v1491 = vsel %vm236, %v1416, 0.0
  %v1492 = vadd.f32 %v1490, %v1491
  %v1493 = vsel %vm236, %v1417, 0.0
  %v1494 = vadd.f32 %v1492, %v1493
  %v1495 = vsel %vm236, %v1418, 0.0
  %v1496 = vadd.f32 %v1494, %v1495
  %v1497 = vsel %vm236, %v1419, 0.0
  %v1498 = vadd.f32 %v1496, %v1497
  %v1499 = vsel %vm236, %v1420, 0.0
  %v1500 = vadd.f32 %v1498, %v1499
  %v1501 = vsel %vm236, %v1421, 0.0
  %v1502 = vadd.f32 %v1500, %v1501
  %v1503 = vsel %vm236, %v1422, 0.0
  %v1504 = vadd.f32 %v1502, %v1503
  %v1505 = vsel %vm236, %v1423, 0.0
  %v1506 = vadd.f32 %v1504, %v1505
  %v1507 = vsel %vm236, %v1424, 0.0
  %v1508 = vadd.f32 %v1506, %v1507
  %v1509 = vsel %vm236, %v1425, 0.0
  %v1510 = vadd.f32 %v1508, %v1509
  %v1511 = vsel %vm236, %v1426, 0.0
  %v1512 = vadd.f32 %v1510, %v1511
  %v1513 = vsel %vm236, %v1427, 0.0
  %v1514 = vadd.f32 %v1512, %v1513
  %v1515 = vsel %vm236, %v1428, 0.0
  %v1516 = vadd.f32 %v1514, %v1515
  %v1517 = vsel %vm236, %v1429, 0.0
  %v1518 = vadd.f32 %v1516, %v1517
  %v1519 = vsel %vm236, %v1430, 0.0
  %v1520 = vadd.f32 %v1518, %v1519
  %v1521 = vsel %vm236, %v1431, 0.0
  %v1522 = vadd.f32 %v1520, %v1521
  %v1523 = vsel %vm236, %v1432, 0.0
  %v1524 = vadd.f32 %v1522, %v1523
  %v1525 = vsel %vm236, %v1433, 0.0
  %v1526 = vadd.f32 %v1524, %v1525
  %v1527 = vsel %vm236, %v1434, 0.0
  %v1528 = vadd.f32 %v1526, %v1527
  %v1529 = vsel %vm236, %v1435, 0.0
  %v1530 = vadd.f32 %v1528, %v1529
  %v1531 = vsel %vm236, %v1436, 0.0
  %v1532 = vadd.f32 %v1530, %v1531
  %v1533 = vsel %vm236, %v1437, 0.0
  %v1534 = vadd.f32 %v1532, %v1533
  %v1535 = vsel %vm236, %v1438, 0.0
  %v1536 = vadd.f32 %v1534, %v1535
  %v1537 = vsel %vm236, %v1439, 0.0
  %v1538 = vadd.f32 %v1536, %v1537
  %v1539 = vsel %vm236, %v1440, 0.0
  %v1540 = vadd.f32 %v1538, %v1539
  %v1541 = vsel %vm236, %v1441, 0.0
  %v1542 = vadd.f32 %v1540, %v1541
  %v1543 = vsel %vm236, %v1442, 0.0
  %v1544 = vadd.f32 %v1542, %v1543
  %v1545 = vsel %vm236, %v1443, 0.0
  %v1546 = vadd.f32 %v1544, %v1545
  %v1547 = vsel %vm236, %v1444, 0.0
  %v1548 = vadd.f32 %v1546, %v1547
  %v1549 = vsel %vm236, %v1445, 0.0
  %v1550 = vadd.f32 %v1548, %v1549
  %v1551 = vsel %vm236, %v1446, 0.0
  %v1552 = vadd.f32 %v1550, %v1551
  %v1553 = vsel %vm236, %v1447, 0.0
  %v1554 = vadd.f32 %v1552, %v1553
  %v1555 = vsel %vm236, %v1448, 0.0
  %v1556 = vadd.f32 %v1554, %v1555
  %v1557 = vsel %vm236, %v1449, 0.0
  %v1558 = vadd.f32 %v1556, %v1557
  %v1559 = vsel %vm236, %v1450, 0.0
  %v1560 = vadd.f32 %v1558, %v1559
  %v1561 = vsel %vm236, %v1451, 0.0
  %v1562 = vadd.f32 %v1560, %v1561
  %v1563 = vsel %vm236, %v1452, 0.0
  %v1564 = vadd.f32 %v1562, %v1563
  %v1565 = vsel %vm236, %v1453, 0.0
  %v1566 = vadd.f32 %v1564, %v1565
  %v1567 = vsel %vm236, %v1454, 0.0
  %v1568 = vadd.f32 %v1566, %v1567
  %v1569 = vsel %vm236, %v1455, 0.0
  %v1570 = vadd.f32 %v1568, %v1569
  %v1571 = vsel %vm236, %v1456, 0.0
  %v1572 = vadd.f32 %v1570, %v1571
  %v1573 = vsel %vm236, %v1457, 0.0
  %v1574 = vadd.f32 %v1572, %v1573
  %v1575 = vsel %vm236, %v1458, 0.0
  %v1576 = vadd.f32 %v1574, %v1575
  %v1577 = vsel %vm236, %v1459, 0.0
  %v1578 = vadd.f32 %v1576, %v1577
  %v1579 = vsel %vm236, %v1460, 0.0
  %v1580 = vadd.f32 %v1578, %v1579
  %v1581 = vsel %vm236, %v1461, 0.0
  %v1582 = vadd.f32 %v1580, %v1581
  %v1583 = vsel %vm236, %v1462, 0.0
  %v1584 = vadd.f32 %v1582, %v1583
  %v1585 = vsel %vm236, %v1463, 0.0
  %v1586 = vadd.f32 %v1584, %v1585
  %v1587 = vsel %vm236, %v1464, 0.0
  %v1588 = vadd.f32 %v1586, %v1587
  %v1589 = vsel %vm236, %v1465, 0.0
  %v1590 = vadd.f32 %v1588, %v1589
  %v1591 = vsel %vm236, %v1466, 0.0
  %v1592 = vadd.f32 %v1590, %v1591
  %v1593 = vsel %vm236, %v1467, 0.0
  %v1594 = vadd.f32 %v1592, %v1593
  %v1595 = vrot.slane %v1594, 4
  %v1596 = vadd.f32 %v1594, %v1595
  %v1597 = vrot.slane %v1596, 2
  %v1598 = vadd.f32 %v1596, %v1597
  %v1599 = vrot.slane %v1598, 1
  %v1600 = vadd.f32 %v1598, %v1599
  %1601 = vst.msk [vmem:[%s6 + $0x1] sm:$0x1] %vm1402, %v1600
  // Predicated region
  $region22: #{resblock_forward.5} parent=0 // pred_check
    _
  $region23: #{resblock_forward.5} parent=0 // pred_check_branch
    %1603 = sbr.rel (0) target = $region25
  $region24: #{resblock_forward.5} parent=0 // pred_region
    _
  $region25: #{resblock_forward.5} parent=0 // pred_fallthru
    _
  // Predicated region
  $region26: #{resblock_forward.5} parent=0 // pred_check
    _
  $region27: #{resblock_forward.5} parent=0 // pred_check_branch
    %1605 = sbr.rel (0) target = $region29
  $region28: #{resblock_forward.5} parent=0 // pred_region
    _
  $region29: #{resblock_forward.5} parent=0 // pred_fallthru
    _
  // Predicated region
  $region30: #{resblock_forward.5} parent=0 // pred_check
    _
  $region31: #{resblock_forward.5} parent=0 // pred_check_branch
    %1607 = sbr.rel (0) target = $region33
  $region32: #{resblock_forward.5} parent=0 // pred_region
    _
  $region33: #{resblock_forward.5} parent=0 // pred_fallthru
    _
  // Predicated region
  $region34: #{resblock_forward.5} parent=0 // pred_check
    _
  $region35: #{resblock_forward.5} parent=0 // pred_check_branch
    %1609 = sbr.rel (0) target = $region37
  $region36: #{resblock_forward.5} parent=0 // pred_region
    _
  $region37: #{resblock_forward.5} parent=0 // pred_fallthru
    _

// kernel: resblock_forward.7
$region0: #{resblock_forward.7}
  #allocation0 [shape = 'u32[]', space=smem, size = 0x4, offset = 0x4, fixed_abs, tag = 'smem constant byte address 0x4 - core index']
  #allocation1 [shape = 'u32[144,128]{1,0:T(1,128)}', space=vmem, size = 0x12000, scoped, tag = 'internal scratch']
  %s0 = inlined_call_operand.vmem [shape: f32[128,4], index: 0, kind: input, shape index: {}]
  %s1 = inlined_call_operand.vmem [shape: f32[4,16], index: 1, kind: input, shape index: {}]
  %s2 = inlined_call_operand.vmem [shape: f32[1,16], index: 2, kind: input, shape index: {}]
  %s3 = inlined_call_operand.vmem [shape: f32[1,4], index: 3, kind: input, shape index: {}]
  %s4 = inlined_call_operand.vmem [shape: f32[1,4], index: 4, kind: input, shape index: {}]
  %s5 = inlined_call_operand.vmem [shape: f32[128,16], index: 5, kind: output, shape index: {0}]
  %s6 = inlined_call_operand.vmem [shape: f32[1,2,16], index: 6, kind: output, shape index: {1}]
  %7 = xla_tuple %s5, %s6
  %s8 = sld [smem:[#allocation0]]
  $region38: #{resblock_forward.7} parent=0
    _
  %s10 = ssub.s32 1, %s8
  %s11 = scalar_select 0, %s10, %s8
  // Predicated region
  $region2: #{resblock_forward.7} parent=0 // pred_check
    _
  $region3: #{resblock_forward.7} parent=0 // pred_check_branch
    %13 = sbr.rel (0) target = $region5
  $region4: #{resblock_forward.7} parent=0 // pred_region
    _
  $region5: #{resblock_forward.7} parent=0 // pred_fallthru
    _
  // Predicated region
  $region6: #{resblock_forward.7} parent=0 // pred_check
    _
  $region7: #{resblock_forward.7} parent=0 // pred_check_branch
    %15 = sbr.rel (0) target = $region9
  $region8: #{resblock_forward.7} parent=0 // pred_region
    _
  $region9: #{resblock_forward.7} parent=0 // pred_fallthru
    _
  // Predicated region
  $region10: #{resblock_forward.7} parent=0 // pred_check
    _
  $region11: #{resblock_forward.7} parent=0 // pred_check_branch
    %17 = sbr.rel (0) target = $region13
  $region12: #{resblock_forward.7} parent=0 // pred_region
    _
  $region13: #{resblock_forward.7} parent=0 // pred_fallthru
    _
  // Predicated region
  $region14: #{resblock_forward.7} parent=0 // pred_check
    _
  $region15: #{resblock_forward.7} parent=0 // pred_check_branch
    %19 = sbr.rel (0) target = $region17
  $region16: #{resblock_forward.7} parent=0 // pred_region
    _
  $region17: #{resblock_forward.7} parent=0 // pred_fallthru
    _
  // Predicated region
  $region18: #{resblock_forward.7} parent=0 // pred_check
    _
  $region19: #{resblock_forward.7} parent=0 // pred_check_branch
    %21 = sbr.rel (0) target = $region21
  $region20: #{resblock_forward.7} parent=0 // pred_region
    _
  $region21: #{resblock_forward.7} parent=0 // pred_fallthru
    _
  %v22 = vld [vmem:[%s0] sm:$0xff]
  %v23 = vld [vmem:[%s0 + $0x8] sm:$0xff]
  %v24 = vld [vmem:[%s0 + $0x10] sm:$0xff]
  %v25 = vld [vmem:[%s0 + $0x18] sm:$0xff]
  %v26 = vld [vmem:[%s0 + $0x20] sm:$0xff]
  %v27 = vld [vmem:[%s0 + $0x28] sm:$0xff]
  %v28 = vld [vmem:[%s0 + $0x30] sm:$0xff]
  %v29 = vld [vmem:[%s0 + $0x38] sm:$0xff]
  %v30 = vld [vmem:[%s0 + $0x40] sm:$0xff]
  %v31 = vld [vmem:[%s0 + $0x48] sm:$0xff]
  %v32 = vld [vmem:[%s0 + $0x50] sm:$0xff]
  %v33 = vld [vmem:[%s0 + $0x58] sm:$0xff]
  %v34 = vld [vmem:[%s0 + $0x60] sm:$0xff]
  %v35 = vld [vmem:[%s0 + $0x68] sm:$0xff]
  %v36 = vld [vmem:[%s0 + $0x70] sm:$0xff]
  %v37 = vld [vmem:[%s0 + $0x78] sm:$0xff]
  %v38 = vld [vmem:[%s3] sm:$0x1]
  %v40 = vlaneseq
  %v41 = vshrl.u32 %v40, 7
  %v42 = vsub.s32 0, %v41
  %v43 = vrot.slane %v38, %v42
  %v45 = vmul.f32 %v22, %v43
  %v46 = vmul.f32 %v23, %v43
  %v47 = vmul.f32 %v24, %v43
  %v48 = vmul.f32 %v25, %v43
  %v49 = vmul.f32 %v26, %v43
  %v50 = vmul.f32 %v27, %v43
  %v51 = vmul.f32 %v28, %v43
  %v52 = vmul.f32 %v29, %v43
  %v53 = vmul.f32 %v30, %v43
  %v54 = vmul.f32 %v31, %v43
  %v55 = vmul.f32 %v32, %v43
  %v56 = vmul.f32 %v33, %v43
  %v57 = vmul.f32 %v34, %v43
  %v58 = vmul.f32 %v35, %v43
  %v59 = vmul.f32 %v36, %v43
  %v60 = vmul.f32 %v37, %v43
  %v61 = vld [vmem:[%s4] sm:$0x1]
  %v63 = vlaneseq
  %v64 = vshrl.u32 %v63, 7
  %v65 = vsub.s32 0, %v64
  %v66 = vrot.slane %v61, %v65
  %v68 = vadd.f32 %v45, %v66
  %v69 = vadd.f32 %v46, %v66
  %v70 = vadd.f32 %v47, %v66
  %v71 = vadd.f32 %v48, %v66
  %v72 = vadd.f32 %v49, %v66
  %v73 = vadd.f32 %v50, %v66
  %v74 = vadd.f32 %v51, %v66
  %v75 = vadd.f32 %v52, %v66
  %v76 = vadd.f32 %v53, %v66
  %v77 = vadd.f32 %v54, %v66
  %v78 = vadd.f32 %v55, %v66
  %v79 = vadd.f32 %v56, %v66
  %v80 = vadd.f32 %v57, %v66
  %v81 = vadd.f32 %v58, %v66
  %v82 = vadd.f32 %v59, %v66
  %v83 = vadd.f32 %v60, %v66
  %vm84 = vcmp.ge.f32.partialorder %v68, 0.0
  %vm85 = vcmp.ge.f32.partialorder %v69, 0.0
  %vm86 = vcmp.ge.f32.partialorder %v70, 0.0
  %vm87 = vcmp.ge.f32.partialorder %v71, 0.0
  %vm88 = vcmp.ge.f32.partialorder %v72, 0.0
  %vm89 = vcmp.ge.f32.partialorder %v73, 0.0
  %vm90 = vcmp.ge.f32.partialorder %v74, 0.0
  %vm91 = vcmp.ge.f32.partialorder %v75, 0.0
  %vm92 = vcmp.ge.f32.partialorder %v76, 0.0
  %vm93 = vcmp.ge.f32.partialorder %v77, 0.0
  %vm94 = vcmp.ge.f32.partialorder %v78, 0.0
  %vm95 = vcmp.ge.f32.partialorder %v79, 0.0
  %vm96 = vcmp.ge.f32.partialorder %v80, 0.0
  %vm97 = vcmp.ge.f32.partialorder %v81, 0.0
  %vm98 = vcmp.ge.f32.partialorder %v82, 0.0
  %vm99 = vcmp.ge.f32.partialorder %v83, 0.0
  %v100 = vmul.f32 %v68, 0.02
  %v101 = vmul.f32 %v69, 0.02
  %v102 = vmul.f32 %v70, 0.02
  %v103 = vmul.f32 %v71, 0.02
  %v104 = vmul.f32 %v72, 0.02
  %v105 = vmul.f32 %v73, 0.02
  %v106 = vmul.f32 %v74, 0.02
  %v107 = vmul.f32 %v75, 0.02
  %v108 = vmul.f32 %v76, 0.02
  %v109 = vmul.f32 %v77, 0.02
  %v110 = vmul.f32 %v78, 0.02
  %v111 = vmul.f32 %v79, 0.02
  %v112 = vmul.f32 %v80, 0.02
  %v113 = vmul.f32 %v81, 0.02
  %v114 = vmul.f32 %v82, 0.02
  %v115 = vmul.f32 %v83, 0.02
  %v116 = vsel %vm84, %v68, %v100
  %v117 = vsel %vm85, %v69, %v101
  %v118 = vsel %vm86, %v70, %v102
  %v119 = vsel %vm87, %v71, %v103
  %v120 = vsel %vm88, %v72, %v104
  %v121 = vsel %vm89, %v73, %v105
  %v122 = vsel %vm90, %v74, %v106
  %v123 = vsel %vm91, %v75, %v107
  %v124 = vsel %vm92, %v76, %v108
  %v125 = vsel %vm93, %v77, %v109
  %v126 = vsel %vm94, %v78, %v110
  %v127 = vsel %vm95, %v79, %v111
  %v128 = vsel %vm96, %v80, %v112
  %v129 = vsel %vm97, %v81, %v113
  %v130 = vsel %vm98, %v82, %v114
  %v131 = vsel %vm99, %v83, %v115
  %v132 = vld [vmem:[%s1] sm:$0xf]
  %v133 = vld [vmem:[%s2] sm:$0x1]
  %v135 = vlaneseq
  %v136 = vshrl.u32 %v135, 7
  %v137 = vsub.s32 0, %v136
  %v138 = vrot.slane %v133, %v137
  %vm140 = vcmask 31744
  %v142 = vsel %vm140, %v116, 0
  %v145 = vsel %vm140, %v117, 0
  %v148 = vsel %vm140, %v118, 0
  %v151 = vsel %vm140, %v119, 0
  %v154 = vsel %vm140, %v120, 0
  %v157 = vsel %vm140, %v121, 0
  %v160 = vsel %vm140, %v122, 0
  %v163 = vsel %vm140, %v123, 0
  %v166 = vsel %vm140, %v124, 0
  %v169 = vsel %vm140, %v125, 0
  %v172 = vsel %vm140, %v126, 0
  %v175 = vsel %vm140, %v127, 0
  %v178 = vsel %vm140, %v128, 0
  %v181 = vsel %vm140, %v129, 0
  %v184 = vsel %vm140, %v130, 0
  %v187 = vsel %vm140, %v131, 0
  %vm189 = vcmask 1043456
  %v191 = vsel %vm189, %v132, 0
  %193 = vmatprep.subr.mxu0 0.0
  %194 = vmatpush1.msra.mxu0 %v191
  %195 = vmatprep.subr.mxu0 0.0
  %196 = vmatpush1.msra.mxu0 0.0
  %197 = vmatprep.subr.mxu0 0.0
  %198 = vmatpush1.msra.mxu0 0.0
  %199 = vmatprep.subr.mxu0 0.0
  %200 = vmatpush1.msra.mxu0 0.0
  %201 = vmatprep.subr.mxu0 0.0
  %202 = vmatpush1.msra.mxu0 0.0
  %203 = vmatprep.subr.mxu0 0.0
  %204 = vmatpush1.msra.mxu0 0.0
  %205 = vmatprep.subr.mxu0 0.0
  %206 = vmatpush1.msra.mxu0 0.0
  %207 = vmatprep.subr.mxu0 0.0
  %208 = vmatpush1.msra.mxu0 0.0
  %209 = vmatprep.subr.mxu0 0.0
  %210 = vmatpush1.msra.mxu0 0.0
  %211 = vmatprep.subr.mxu0 0.0
  %212 = vmatpush1.msra.mxu0 0.0
  %213 = vmatprep.subr.mxu0 0.0
  %214 = vmatpush1.msra.mxu0 0.0
  %215 = vmatprep.subr.mxu0 0.0
  %216 = vmatpush1.msra.mxu0 0.0
  %217 = vmatprep.subr.mxu0 0.0
  %218 = vmatpush1.msra.mxu0 0.0
  %219 = vmatprep.subr.mxu0 0.0
  %220 = vmatpush1.msra.mxu0 0.0
  %221 = vmatprep.subr.mxu0 0.0
  %222 = vmatpush1.msra.mxu0 0.0
  %223 = vmatprep.subr.mxu0 0.0
  %224 = vmatpush1.msra.mxu0 0.0
  %225 = vmatprep.subr.mxu0 0.0
  %226 = vmatpush1.msra.mxu0 0.0
  %227 = vmatprep.subr.mxu0 0.0
  %228 = vmatpush1.msra.mxu0 0.0
  %229 = vmatprep.subr.mxu0 0.0
  %230 = vmatpush1.msra.mxu0 0.0
  %231 = vmatprep.subr.mxu0 0.0
  %232 = vmatpush1.msra.mxu0 0.0
  %233 = vmatprep.subr.mxu0 0.0
  %234 = vmatpush1.msra.mxu0 0.0
  %235 = vmatprep.subr.mxu0 0.0
  %236 = vmatpush1.msra.mxu0 0.0
  %237 = vmatprep.subr.mxu0 0.0
  %238 = vmatpush1.msra.mxu0 0.0
  %239 = vmatprep.subr.mxu0 0.0
  %240 = vmatpush1.msra.mxu0 0.0
  %241 = vmatprep.subr.mxu0 0.0
  %242 = vmatpush1.msra.mxu0 0.0
  %243 = vmatprep.subr.mxu0 0.0
  %244 = vmatpush1.msra.mxu0 0.0
  %245 = vmatprep.subr.mxu0 0.0
  %246 = vmatpush1.msra.mxu0 0.0
  %247 = vmatprep.subr.mxu0 0.0
  %248 = vmatpush1.msra.mxu0 0.0
  %249 = vmatprep.subr.mxu0 0.0
  %250 = vmatpush1.msra.mxu0 0.0
  %251 = vmatprep.subr.mxu0 0.0
  %252 = vmatpush1.msra.mxu0 0.0
  %253 = vmatprep.subr.mxu0 0.0
  %254 = vmatpush1.msra.mxu0 0.0
  %255 = vmatprep.subr.mxu0 0.0
  %256 = vmatpush1.msra.mxu0 0.0
  %257 = vmatprep.mubr.f32.mxu0 0.0
  %258 = vmatmul.mubr.f32.gmra.mrb[0].mxu0 %v142
  %v259 = vpop.f32.mrb[0].mxu0
  %v260 = vadd.f32 %v138, %v259
  %v261 = vpop.f32.mrb[0].mxu0
  %262 = vmatprep.mubr.f32.mxu0 0.0
  %263 = vmatmul.mubr.f32.gmra.mrb[0].mxu0 %v145
  %v264 = vpop.f32.mrb[0].mxu0
  %v265 = vadd.f32 %v138, %v264
  %v266 = vpop.f32.mrb[0].mxu0
  %267 = vmatprep.mubr.f32.mxu0 0.0
  %268 = vmatmul.mubr.f32.gmra.mrb[0].mxu0 %v148
  %v269 = vpop.f32.mrb[0].mxu0
  %v270 = vadd.f32 %v138, %v269
  %v271 = vpop.f32.mrb[0].mxu0
  %272 = vmatprep.mubr.f32.mxu0 0.0
  %273 = vmatmul.mubr.f32.gmra.mrb[0].mxu0 %v151
  %v274 = vpop.f32.mrb[0].mxu0
  %v275 = vadd.f32 %v138, %v274
  %v276 = vpop.f32.mrb[0].mxu0
  %277 = vmatprep.mubr.f32.mxu0 0.0
  %278 = vmatmul.mubr.f32.gmra.mrb[0].mxu0 %v154
  %v279 = vpop.f32.mrb[0].mxu0
  %v280 = vadd.f32 %v138, %v279
  %v281 = vpop.f32.mrb[0].mxu0
  %282 = vmatprep.mubr.f32.mxu0 0.0
  %283 = vmatmul.mubr.f32.gmra.mrb[0].mxu0 %v157
  %v284 = vpop.f32.mrb[0].mxu0
  %v285 = vadd.f32 %v138, %v284
  %v286 = vpop.f32.mrb[0].mxu0
  %287 = vmatprep.mubr.f32.mxu0 0.0
  %288 = vmatmul.mubr.f32.gmra.mrb[0].mxu0 %v160
  %v289 = vpop.f32.mrb[0].mxu0
  %v290 = vadd.f32 %v138, %v289
  %v291 = vpop.f32.mrb[0].mxu0
  %292 = vmatprep.mubr.f32.mxu0 0.0
  %293 = vmatmul.mubr.f32.gmra.mrb[0].mxu0 %v163
  %v294 = vpop.f32.mrb[0].mxu0
  %v295 = vadd.f32 %v138, %v294
  %v296 = vpop.f32.mrb[0].mxu0
  %297 = vmatprep.mubr.f32.mxu0 0.0
  %298 = vmatmul.mubr.f32.gmra.mrb[0].mxu0 %v166
  %v299 = vpop.f32.mrb[0].mxu0
  %v300 = vadd.f32 %v138, %v299
  %v301 = vpop.f32.mrb[0].mxu0
  %302 = vmatprep.mubr.f32.mxu0 0.0
  %303 = vmatmul.mubr.f32.gmra.mrb[0].mxu0 %v169
  %v304 = vpop.f32.mrb[0].mxu0
  %v305 = vadd.f32 %v138, %v304
  %v306 = vpop.f32.mrb[0].mxu0
  %307 = vmatprep.mubr.f32.mxu0 0.0
  %308 = vmatmul.mubr.f32.gmra.mrb[0].mxu0 %v172
  %v309 = vpop.f32.mrb[0].mxu0
  %v310 = vadd.f32 %v138, %v309
  %v311 = vpop.f32.mrb[0].mxu0
  %312 = vmatprep.mubr.f32.mxu0 0.0
  %313 = vmatmul.mubr.f32.gmra.mrb[0].mxu0 %v175
  %v314 = vpop.f32.mrb[0].mxu0
  %v315 = vadd.f32 %v138, %v314
  %v316 = vpop.f32.mrb[0].mxu0
  %317 = vmatprep.mubr.f32.mxu0 0.0
  %318 = vmatmul.mubr.f32.gmra.mrb[0].mxu0 %v178
  %v319 = vpop.f32.mrb[0].mxu0
  %v320 = vadd.f32 %v138, %v319
  %v321 = vpop.f32.mrb[0].mxu0
  %322 = vmatprep.mubr.f32.mxu0 0.0
  %323 = vmatmul.mubr.f32.gmra.mrb[0].mxu0 %v181
  %v324 = vpop.f32.mrb[0].mxu0
  %v325 = vadd.f32 %v138, %v324
  %v326 = vpop.f32.mrb[0].mxu0
  %327 = vmatprep.mubr.f32.mxu0 0.0
  %328 = vmatmul.mubr.f32.gmra.mrb[0].mxu0 %v184
  %v329 = vpop.f32.mrb[0].mxu0
  %v330 = vadd.f32 %v138, %v329
  %v331 = vpop.f32.mrb[0].mxu0
  %332 = vmatprep.mubr.f32.mxu0 0.0
  %333 = vmatmul.mubr.f32.gmra.mrb[0].mxu0 %v187
  %v334 = vpop.f32.mrb[0].mxu0
  %v335 = vadd.f32 %v138, %v334
  %v336 = vpop.f32.mrb[0].mxu0
  %337 = vdwg.mxu0
  %vm338 = vcmask 130048
  %339 = vst.msk [vmem:[%s5] sm:$0xff] %vm338, %v260
  %340 = vst.msk [vmem:[%s5 + $0x8] sm:$0xff] %vm338, %v265
  %341 = vst.msk [vmem:[%s5 + $0x10] sm:$0xff] %vm338, %v270
  %342 = vst.msk [vmem:[%s5 + $0x18] sm:$0xff] %vm338, %v275
  %343 = vst.msk [vmem:[%s5 + $0x20] sm:$0xff] %vm338, %v280
  %344 = vst.msk [vmem:[%s5 + $0x28] sm:$0xff] %vm338, %v285
  %345 = vst.msk [vmem:[%s5 + $0x30] sm:$0xff] %vm338, %v290
  %346 = vst.msk [vmem:[%s5 + $0x38] sm:$0xff] %vm338, %v295
  %347 = vst.msk [vmem:[%s5 + $0x40] sm:$0xff] %vm338, %v300
  %348 = vst.msk [vmem:[%s5 + $0x48] sm:$0xff] %vm338, %v305
  %349 = vst.msk [vmem:[%s5 + $0x50] sm:$0xff] %vm338, %v310
  %350 = vst.msk [vmem:[%s5 + $0x58] sm:$0xff] %vm338, %v315
  %351 = vst.msk [vmem:[%s5 + $0x60] sm:$0xff] %vm338, %v320
  %352 = vst.msk [vmem:[%s5 + $0x68] sm:$0xff] %vm338, %v325
  %353 = vst.msk [vmem:[%s5 + $0x70] sm:$0xff] %vm338, %v330
  %354 = vst.msk [vmem:[%s5 + $0x78] sm:$0xff] %vm338, %v335
  %s355 = smul.u32 0, 128
  %v356 = vlaneseq
  %v357 = vshrl.u32 %v356, 7
  %v358 = vadd.s32 %v357, 8
  %v359 = vadd.s32 %v357, 16
  %v360 = vadd.s32 %v357, 24
  %v361 = vadd.s32 %v357, 32
  %v362 = vadd.s32 %v357, 40
  %v363 = vadd.s32 %v357, 48
  %v364 = vadd.s32 %v357, 56
  %v365 = vadd.s32 %v357, 64
  %v366 = vadd.s32 %v357, 72
  %v367 = vadd.s32 %v357, 80
  %v368 = vadd.s32 %v357, 88
  %v369 = vadd.s32 %v357, 96
  %v370 = vadd.s32 %v357, 104
  %v371 = vadd.s32 %v357, 112
  %v372 = vadd.s32 %v357, 120
  %v373 = vstv %s355
  %v374 = vadd.s32 %v373, %v357
  %v375 = vadd.s32 %v373, %v358
  %v376 = vadd.s32 %v373, %v359
  %v377 = vadd.s32 %v373, %v360
  %v378 = vadd.s32 %v373, %v361
  %v379 = vadd.s32 %v373, %v362
  %v380 = vadd.s32 %v373, %v363
  %v381 = vadd.s32 %v373, %v364
  %v382 = vadd.s32 %v373, %v365
  %v383 = vadd.s32 %v373, %v366
  %v384 = vadd.s32 %v373, %v367
  %v385 = vadd.s32 %v373, %v368
  %v386 = vadd.s32 %v373, %v369
  %v387 = vadd.s32 %v373, %v370
  %v388 = vadd.s32 %v373, %v371
  %v389 = vadd.s32 %v373, %v372
  %vm390 = vcmp.lt.s32.totalorder %v374, 128
  %vm391 = vcmp.lt.s32.totalorder %v375, 128
  %vm392 = vcmp.lt.s32.totalorder %v376, 128
  %vm393 = vcmp.lt.s32.totalorder %v377, 128
  %vm394 = vcmp.lt.s32.totalorder %v378, 128
  %vm395 = vcmp.lt.s32.totalorder %v379, 128
  %vm396 = vcmp.lt.s32.totalorder %v380, 128
  %vm397 = vcmp.lt.s32.totalorder %v381, 128
  %vm398 = vcmp.lt.s32.totalorder %v382, 128
  %vm399 = vcmp.lt.s32.totalorder %v383, 128
  %vm400 = vcmp.lt.s32.totalorder %v384, 128
  %vm401 = vcmp.lt.s32.totalorder %v385, 128
  %vm402 = vcmp.lt.s32.totalorder %v386, 128
  %vm403 = vcmp.lt.s32.totalorder %v387, 128
  %vm404 = vcmp.lt.s32.totalorder %v388, 128
  %vm405 = vcmp.lt.s32.totalorder %v389, 128
  %v406 = vsel %vm390, 1, 0
  %v407 = vsel %vm391, 1, 0
  %v408 = vsel %vm392, 1, 0
  %v409 = vsel %vm393, 1, 0
  %v410 = vsel %vm394, 1, 0
  %v411 = vsel %vm395, 1, 0
  %v412 = vsel %vm396, 1, 0
  %v413 = vsel %vm397, 1, 0
  %v414 = vsel %vm398, 1, 0
  %v415 = vsel %vm399, 1, 0
  %v416 = vsel %vm400, 1, 0
  %v417 = vsel %vm401, 1, 0
  %v418 = vsel %vm402, 1, 0
  %v419 = vsel %vm403, 1, 0
  %v420 = vsel %vm404, 1, 0
  %v421 = vsel %vm405, 1, 0
  %vm422 = vcmp.eq.s32.totalorder %v406, 1
  %vm423 = vcmp.eq.s32.totalorder %v407, 1
  %vm424 = vcmp.eq.s32.totalorder %v408, 1
  %vm425 = vcmp.eq.s32.totalorder %v409, 1
  %vm426 = vcmp.eq.s32.totalorder %v410, 1
  %vm427 = vcmp.eq.s32.totalorder %v411, 1
  %vm428 = vcmp.eq.s32.totalorder %v412, 1
  %vm429 = vcmp.eq.s32.totalorder %v413, 1
  %vm430 = vcmp.eq.s32.totalorder %v414, 1
  %vm431 = vcmp.eq.s32.totalorder %v415, 1
  %vm432 = vcmp.eq.s32.totalorder %v416, 1
  %vm433 = vcmp.eq.s32.totalorder %v417, 1
  %vm434 = vcmp.eq.s32.totalorder %v418, 1
  %vm435 = vcmp.eq.s32.totalorder %v419, 1
  %vm436 = vcmp.eq.s32.totalorder %v420, 1
  %vm437 = vcmp.eq.s32.totalorder %v421, 1
  %v438 = vsel %vm422, %v260, 0.0
  %v439 = vsel %vm423, %v265, 0.0
  %v440 = vsel %vm424, %v270, 0.0
  %v441 = vsel %vm425, %v275, 0.0
  %v442 = vsel %vm426, %v280, 0.0
  %v443 = vsel %vm427, %v285, 0.0
  %v444 = vsel %vm428, %v290, 0.0
  %v445 = vsel %vm429, %v295, 0.0
  %v446 = vsel %vm430, %v300, 0.0
  %v447 = vsel %vm431, %v305, 0.0
  %v448 = vsel %vm432, %v310, 0.0
  %v449 = vsel %vm433, %v315, 0.0
  %v450 = vsel %vm434, %v320, 0.0
  %v451 = vsel %vm435, %v325, 0.0
  %v452 = vsel %vm436, %v330, 0.0
  %v453 = vsel %vm437, %v335, 0.0
  %v454 = vsel %vm338, %v438, 0.0
  %v455 = vsel %vm338, %v439, 0.0
  %v456 = vadd.f32 %v454, %v455
  %v457 = vsel %vm338, %v440, 0.0
  %v458 = vadd.f32 %v456, %v457
  %v459 = vsel %vm338, %v441, 0.0
  %v460 = vadd.f32 %v458, %v459
  %v461 = vsel %vm338, %v442, 0.0
  %v462 = vadd.f32 %v460, %v461
  %v463 = vsel %vm338, %v443, 0.0
  %v464 = vadd.f32 %v462, %v463
  %v465 = vsel %vm338, %v444, 0.0
  %v466 = vadd.f32 %v464, %v465
  %v467 = vsel %vm338, %v445, 0.0
  %v468 = vadd.f32 %v466, %v467
  %v469 = vsel %vm338, %v446, 0.0
  %v470 = vadd.f32 %v468, %v469
  %v471 = vsel %vm338, %v447, 0.0
  %v472 = vadd.f32 %v470, %v471
  %v473 = vsel %vm338, %v448, 0.0
  %v474 = vadd.f32 %v472, %v473
  %v475 = vsel %vm338, %v449, 0.0
  %v476 = vadd.f32 %v474, %v475
  %v477 = vsel %vm338, %v450, 0.0
  %v478 = vadd.f32 %v476, %v477
  %v479 = vsel %vm338, %v451, 0.0
  %v480 = vadd.f32 %v478, %v479
  %v481 = vsel %vm338, %v452, 0.0
  %v482 = vadd.f32 %v480, %v481
  %v483 = vsel %vm338, %v453, 0.0
  %v484 = vadd.f32 %v482, %v483
  %v485 = vrot.slane %v484, 4
  %v486 = vadd.f32 %v484, %v485
  %v487 = vrot.slane %v486, 2
  %v488 = vadd.f32 %v486, %v487
  %v489 = vrot.slane %v488, 1
  %v490 = vadd.f32 %v488, %v489
  %vm491 = vcmask 122880
  %492 = vst.msk [vmem:[%s6] sm:$0x1] %vm491, %v490
  %v493 = vmul.f32 %v438, %v438
  %v494 = vmul.f32 %v439, %v439
  %v495 = vmul.f32 %v440, %v440
  %v496 = vmul.f32 %v441, %v441
  %v497 = vmul.f32 %v442, %v442
  %v498 = vmul.f32 %v443, %v443
  %v499 = vmul.f32 %v444, %v444
  %v500 = vmul.f32 %v445, %v445
  %v501 = vmul.f32 %v446, %v446
  %v502 = vmul.f32 %v447, %v447
  %v503 = vmul.f32 %v448, %v448
  %v504 = vmul.f32 %v449, %v449
  %v505 = vmul.f32 %v450, %v450
  %v506 = vmul.f32 %v451, %v451
  %v507 = vmul.f32 %v452, %v452
  %v508 = vmul.f32 %v453, %v453
  %v509 = vsel %vm338, %v493, 0.0
  %v510 = vsel %vm338, %v494, 0.0
  %v511 = vadd.f32 %v509, %v510
  %v512 = vsel %vm338, %v495, 0.0
  %v513 = vadd.f32 %v511, %v512
  %v514 = vsel %vm338, %v496, 0.0
  %v515 = vadd.f32 %v513, %v514
  %v516 = vsel %vm338, %v497, 0.0
  %v517 = vadd.f32 %v515, %v516
  %v518 = vsel %vm338, %v498, 0.0
  %v519 = vadd.f32 %v517, %v518
  %v520 = vsel %vm338, %v499, 0.0
  %v521 = vadd.f32 %v519, %v520
  %v522 = vsel %vm338, %v500, 0.0
  %v523 = vadd.f32 %v521, %v522
  %v524 = vsel %vm338, %v501, 0.0
  %v525 = vadd.f32 %v523, %v524
  %v526 = vsel %vm338, %v502, 0.0
  %v527 = vadd.f32 %v525, %v526
  %v528 = vsel %vm338, %v503, 0.0
  %v529 = vadd.f32 %v527, %v528
  %v530 = vsel %vm338, %v504, 0.0
  %v531 = vadd.f32 %v529, %v530
  %v532 = vsel %vm338, %v505, 0.0
  %v533 = vadd.f32 %v531, %v532
  %v534 = vsel %vm338, %v506, 0.0
  %v535 = vadd.f32 %v533, %v534
  %v536 = vsel %vm338, %v507, 0.0
  %v537 = vadd.f32 %v535, %v536
  %v538 = vsel %vm338, %v508, 0.0
  %v539 = vadd.f32 %v537, %v538
  %v540 = vrot.slane %v539, 4
  %v541 = vadd.f32 %v539, %v540
  %v542 = vrot.slane %v541, 2
  %v543 = vadd.f32 %v541, %v542
  %v544 = vrot.slane %v543, 1
  %v545 = vadd.f32 %v543, %v544
  %546 = vst.msk [vmem:[%s6 + $0x1] sm:$0x1] %vm491, %v545
  // Predicated region
  $region22: #{resblock_forward.7} parent=0 // pred_check
    _
  $region23: #{resblock_forward.7} parent=0 // pred_check_branch
    %548 = sbr.rel (0) target = $region25
  $region24: #{resblock_forward.7} parent=0 // pred_region
    _
  $region25: #{resblock_forward.7} parent=0 // pred_fallthru
    _
  // Predicated region
  $region26: #{resblock_forward.7} parent=0 // pred_check
    _
  $region27: #{resblock_forward.7} parent=0 // pred_check_branch
    %550 = sbr.rel (0) target = $region29
  $region28: #{resblock_forward.7} parent=0 // pred_region
    _
  $region29: #{resblock_forward.7} parent=0 // pred_fallthru
    _
  // Predicated region
  $region30: #{resblock_forward.7} parent=0 // pred_check
    _
  $region31: #{resblock_forward.7} parent=0 // pred_check_branch
    %552 = sbr.rel (0) target = $region33
  $region32: #{resblock_forward.7} parent=0 // pred_region
    _
  $region33: #{resblock_forward.7} parent=0 // pred_fallthru
    _
  // Predicated region
  $region34: #{resblock_forward.7} parent=0 // pred_check
    _
  $region35: #{resblock_forward.7} parent=0 // pred_check_branch
    %554 = sbr.rel (0) target = $region37
  $region36: #{resblock_forward.7} parent=0 // pred_region
    _
  $region37: #{resblock_forward.7} parent=0 // pred_fallthru
    _

// kernel: resblock_forward.6
$region0: #{resblock_forward.6}
  #allocation0 [shape = 'u32[]', space=smem, size = 0x4, offset = 0x4, fixed_abs, tag = 'smem constant byte address 0x4 - core index']
  #allocation1 [shape = 'u32[144,128]{1,0:T(1,128)}', space=vmem, size = 0x12000, scoped, tag = 'internal scratch']
  %s0 = inlined_call_operand.vmem [shape: f32[2,36,9,4], index: 0, kind: input, shape index: {}]
  %s1 = inlined_call_operand.vmem [shape: f32[9,4,4], index: 1, kind: input, shape index: {}]
  %s2 = inlined_call_operand.vmem [shape: f32[1,4], index: 2, kind: input, shape index: {}]
  %s3 = inlined_call_operand.vmem [shape: f32[2,64,4], index: 3, kind: output, shape index: {0}]
  %s4 = inlined_call_operand.vmem [shape: f32[2,2,4], index: 4, kind: output, shape index: {1}]
  %5 = xla_tuple %s3, %s4
  %s6 = sld [smem:[#allocation0]]
  $region53: #{resblock_forward.6} parent=0
    _
  %s8 = ssub.s32 1, %s6
  %s9 = scalar_select 0, %s8, %s6
  loop: start=0, step=1, limit=4
  $region2: #{resblock_forward.6} parent=0 // loop_pre_header
    _
  $region3: #{resblock_forward.6} parent=0 // loop_header
    %s11 = sphi 0, %s15
    %p12 = scmp.ge.s32.totalorder %s11, 4
    %s21 = sphi 0, %s23
    %s24 = sphi 0, %s21
    %s25 = sphi 0, %s24
    %s41 = sphi 0, %s25
    %s45 = sphi 0, %s45
    %s47 = sphi 0, %s45
    %s48 = sphi 0, %s47
    %s62 = sphi 0, %s48
    %s66 = sphi 0, %s66
    %s68 = sphi 0, %s66
    %s69 = sphi 0, %s68
    %s83 = sphi 0, %s69
    %s89 = sphi 0, %s91
    %s92 = sphi 0, %s89
    %s93 = sphi 0, %s92
    %s109 = sphi 0, %s93
    %s115 = sphi 0, %s117
    %s118 = sphi 0, %s115
    %s119 = sphi 0, %s118
    %s135 = sphi 0, %s119
  $region4: #{resblock_forward.6} parent=0 // loop_header_branch
    %14 = sbr.rel (%p12) target = $region8
  $region5: #{resblock_forward.6} parent=0 // loop_body
    %s16 = ssub.s32 %s11, 1
    %s17 = ssub.s32 %s11, 2
    %s18 = sadd.s32 %s11, 1
    %s19 = ssub.s32 %s11, %s18
    %p20 = scmp.eq.s32.totalorder %s19, 0
    %s22 = sadd.s32 %s21, 1
    %s23 = scalar_select %p20, %s21, %s22
    %p26 = pneg %p20
    %p27 = scmp.eq.s32.totalorder %s11, 1
    %p28 = por %p26, %p27
    %p29 = scmp.ne.s32.totalorder %s21, %s24
    %p30 = scmp.eq.s32.totalorder %s11, 0
    %p31 = por %p29, %p30
    %p32 = scmp.ne.s32.totalorder %s21, %s24
    %p33 = scmp.eq.s32.totalorder %s16, 1
    %p34 = por %p32, %p33
    %p35 = scmp.ne.s32.totalorder %s24, %s25
    %p36 = scmp.eq.s32.totalorder %s16, 0
    %p37 = por %p35, %p36
    %p38 = scmp.ne.s32.totalorder %s24, %s25
    %p39 = scmp.eq.s32.totalorder %s17, 1
    %p40 = por %p38, %p39
    %p42 = scmp.ne.s32.totalorder %s25, %s41
    %p43 = scmp.eq.s32.totalorder %s17, 0
    %p44 = por %p42, %p43
    %s46 = sadd.s32 %s45, 1
    %p49 = scmp.eq.s32.totalorder %s11, 1
    %p50 = scmp.ne.s32.totalorder %s45, %s47
    %p51 = scmp.eq.s32.totalorder %s11, 0
    %p52 = por %p50, %p51
    %p53 = scmp.ne.s32.totalorder %s45, %s47
    %p54 = scmp.eq.s32.totalorder %s16, 1
    %p55 = por %p53, %p54
    %p56 = scmp.ne.s32.totalorder %s47, %s48
    %p57 = scmp.eq.s32.totalorder %s16, 0
    %p58 = por %p56, %p57
    %p59 = scmp.ne.s32.totalorder %s47, %s48
    %p60 = scmp.eq.s32.totalorder %s17, 1
    %p61 = por %p59, %p60
    %p63 = scmp.ne.s32.totalorder %s48, %s62
    %p64 = scmp.eq.s32.totalorder %s17, 0
    %p65 = por %p63, %p64
    %s67 = sadd.s32 %s66, 1
    %p70 = scmp.eq.s32.totalorder %s11, 1
    %p71 = scmp.ne.s32.totalorder %s66, %s68
    %p72 = scmp.eq.s32.totalorder %s11, 0
    %p73 = por %p71, %p72
    %p74 = scmp.ne.s32.totalorder %s66, %s68
    %p75 = scmp.eq.s32.totalorder %s16, 1
    %p76 = por %p74, %p75
    %p77 = scmp.ne.s32.totalorder %s68, %s69
    %p78 = scmp.eq.s32.totalorder %s16, 0
    %p79 = por %p77, %p78
    %p80 = scmp.ne.s32.totalorder %s68, %s69
    %p81 = scmp.eq.s32.totalorder %s17, 1
    %p82 = por %p80, %p81
    %p84 = scmp.ne.s32.totalorder %s69, %s83
    %p85 = scmp.eq.s32.totalorder %s17, 0
    %p86 = por %p84, %p85
    %s87 = ssub.s32 %s11, %s18
    %p88 = scmp.eq.s32.totalorder %s87, 0
    %s90 = sadd.s32 %s89, 1
    %s91 = scalar_select %p88, %s89, %s90
    %p94 = pneg %p88
    %p95 = scmp.eq.s32.totalorder %s11, 1
    %p96 = por %p94, %p95
    %p97 = scmp.ne.s32.totalorder %s89, %s92
    %p98 = scmp.eq.s32.totalorder %s11, 0
    %p99 = por %p97, %p98
    %p100 = scmp.ne.s32.totalorder %s89, %s92
    %p101 = scmp.eq.s32.totalorder %s16, 1
    %p102 = por %p100, %p101
    %p103 = scmp.ne.s32.totalorder %s92, %s93
    %p104 = scmp.eq.s32.totalorder %s16, 0
    %p105 = por %p103, %p104
    %p106 = scmp.ne.s32.totalorder %s92, %s93
    %p107 = scmp.eq.s32.totalorder %s17, 1
    %p108 = por %p106, %p107
    %p110 = scmp.ne.s32.totalorder %s93, %s109
    %p111 = scmp.eq.s32.totalorder %s17, 0
    %p112 = por %p110, %p111
    %s113 = ssub.s32 %s11, %s18
    %p114 = scmp.eq.s32.totalorder %s113, 0
    %s116 = sadd.s32 %s115, 1
    %s117 = scalar_select %p114, %s115, %s116
    %p120 = pneg %p114
    %p121 = scmp.eq.s32.totalorder %s11, 1
    %p122 = por %p120, %p121
    %p123 = scmp.ne.s32.totalorder %s115, %s118
    %p124 = scmp.eq.s32.totalorder %s11, 0
    %p125 = por %p123, %p124
    %p126 = scmp.ne.s32.totalorder %s115, %s118
    %p127 = scmp.eq.s32.totalorder %s16, 1
    %p128 = por %p126, %p127
    %p129 = scmp.ne.s32.totalorder %s118, %s119
    %p130 = scmp.eq.s32.totalorder %s16, 0
    %p131 = por %p129, %p130
    %p132 = scmp.ne.s32.totalorder %s118, %s119
    %p133 = scmp.eq.s32.totalorder %s17, 1
    %p134 = por %p132, %p133
    %p136 = scmp.ne.s32.totalorder %s119, %s135
    %p137 = scmp.eq.s32.totalorder %s17, 0
    %p138 = por %p136, %p137
    %p139 = scmp.le.s32.totalorder 1, %s11
    %p140 = scmp.lt.s32.totalorder %s11, 3
    %p141 = pnand %p139, %p140
    %p142 = pneg %p141
    // Predicated region
    $region9: #{resblock_forward.6} parent=5 // pred_check
      _
    $region10: #{resblock_forward.6} parent=5 // pred_check_branch
      %144 = sbr.rel (%p141) target = $region12
    $region11: #{resblock_forward.6} parent=5 // pred_region
      %s145 = ssub.s32 %s11, 1
      // Predicated region
      $region13: #{resblock_forward.6} parent=11 // pred_check
        %p146 = pneg %p58
      $region14: #{resblock_forward.6} parent=11 // pred_check_branch
        %148 = sbr.rel (%p146) target = $region16
      $region15: #{resblock_forward.6} parent=11 // pred_region
        _
      $region16: #{resblock_forward.6} parent=11 // pred_fallthru
        _
      // Predicated region
      $region17: #{resblock_forward.6} parent=11 // pred_check
        %p149 = pneg %p79
      $region18: #{resblock_forward.6} parent=11 // pred_check_branch
        %151 = sbr.rel (%p149) target = $region20
      $region19: #{resblock_forward.6} parent=11 // pred_region
        _
      $region20: #{resblock_forward.6} parent=11 // pred_fallthru
        _
    $region12: #{resblock_forward.6} parent=5 // pred_fallthru
      _
    %p152 = scmp.lt.s32.totalorder %s11, 2
    // Predicated region
    $region21: #{resblock_forward.6} parent=5 // pred_check
      %p153 = pneg %p152
    $region22: #{resblock_forward.6} parent=5 // pred_check_branch
      %155 = sbr.rel (%p153) target = $region24
    $region23: #{resblock_forward.6} parent=5 // pred_region
      // Predicated region
      $region25: #{resblock_forward.6} parent=23 // pred_check
        %p156 = pneg %p31
      $region26: #{resblock_forward.6} parent=23 // pred_check_branch
        %158 = sbr.rel (%p156) target = $region28
      $region27: #{resblock_forward.6} parent=23 // pred_region
        %p159 = scmp.lt.s32.totalorder %s11, 1
        %s160 = scalar_select %p159, %s11, 1
        %s161 = smul.addr %s160, 72
        %s162 = smul.addr %s161, 8
        %s163 = scalar_lea.vmem %s0, %s162
      $region28: #{resblock_forward.6} parent=23 // pred_fallthru
        _
    $region24: #{resblock_forward.6} parent=5 // pred_fallthru
      _
    %p164 = scmp.le.s32.totalorder 1, %s11
    %p165 = scmp.lt.s32.totalorder %s11, 3
    %p166 = pnand %p164, %p165
    %p167 = pneg %p166
    // Predicated region
    $region29: #{resblock_forward.6} parent=5 // pred_check
      _
    $region30: #{resblock_forward.6} parent=5 // pred_check_branch
      %169 = sbr.rel (%p166) target = $region32
    $region31: #{resblock_forward.6} parent=5 // pred_region
      %s170 = ssub.s32 %s11, 1
      %p171 = scmp.lt.s32.totalorder %s16, 1
      %s172 = scalar_select %p171, %s16, 1
      %s173 = smul.addr %s172, 72
      %s174 = smul.addr %s173, 8
      %s175 = scalar_lea.vmem %s0, %s174
      %p176 = pneg %p37
      %p177 = pneg %p34
      %p178 = pneg %p58
      %p179 = pneg %p55
      %p180 = pneg %p79
      %p181 = pneg %p76
      %p182 = pneg %p105
      %p183 = pneg %p102
      %p184 = scmp.lt.s32.totalorder %s16, 1
      %s185 = scalar_select %p184, %s16, 1
      %s186 = smul.addr %s185, 8
      %s187 = smul.addr %s186, 8
      %s188 = scalar_lea.vmem %s3, %s187
      %p189 = pneg %p131
      %p190 = pneg %p128
      %p191 = scmp.lt.s32.totalorder %s16, 1
      %s192 = scalar_select %p191, %s16, 1
      %s193 = smul.addr %s192, 2
      %s194 = scalar_lea.vmem %s4, %s193
      %p195 = scmp.lt.s32.totalorder %s16, 1
      %s196 = scalar_select %p195, %s16, 1
      %s197 = smul.addr %s196, 72
      %s198 = smul.addr %s197, 8
      %s199 = scalar_lea.vmem %s0, %s198
      %p200 = scmp.lt.s32.totalorder %s16, 1
      %s201 = scalar_select %p200, %s16, 1
      %s202 = smul.addr %s201, 8
      %s203 = smul.addr %s202, 8
      %s204 = scalar_lea.vmem %s3, %s203
      %p205 = scmp.lt.s32.totalorder %s16, 1
      %s206 = scalar_select %p205, %s16, 1
      %s207 = smul.addr %s206, 2
      %s208 = scalar_lea.vmem %s4, %s207
      %v209 = vld [vmem:[%s199] sm:$0xff]
      %v210 = vld [vmem:[%s199 + $0x10] sm:$0xff]
      %v211 = vld [vmem:[%s199 + $0x20] sm:$0xff]
      %v212 = vld [vmem:[%s199 + $0x30] sm:$0xff]
      %v213 = vld [vmem:[%s199 + $0x40] sm:$0xff]
      %v214 = vld [vmem:[%s199 + $0x50] sm:$0xff]
      %v215 = vld [vmem:[%s199 + $0x60] sm:$0xff]
      %v216 = vld [vmem:[%s199 + $0x70] sm:$0xff]
      %v217 = vld [vmem:[%s1] sm:$0xf]
      %s218 = scalar_lea.vmem %s199, 144
      %v219 = vld [vmem:[%s218] sm:$0xff]
      %v220 = vld [vmem:[%s218 + $0x10] sm:$0xff]
      %v221 = vld [vmem:[%s218 + $0x20] sm:$0xff]
      %v222 = vld [vmem:[%s218 + $0x30] sm:$0xff]
      %v223 = vld [vmem:[%s218 + $0x40] sm:$0xff]
      %v224 = vld [vmem:[%s218 + $0x50] sm:$0xff]
      %v225 = vld [vmem:[%s218 + $0x60] sm:$0xff]
      %v226 = vld [vmem:[%s218 + $0x70] sm:$0xff]
      %s227 = scalar_lea.vmem %s1, 4
      %v228 = vld [vmem:[%s227] sm:$0xf]
      %vm229 = vcmask 31744
      %v231 = vsel %vm229, %v219, 0
      %v234 = vsel %vm229, %v220, 0
      %v237 = vsel %vm229, %v221, 0
      %v240 = vsel %vm229, %v222, 0
      %v243 = vsel %vm229, %v223, 0
      %v246 = vsel %vm229, %v224, 0
      %v249 = vsel %vm229, %v225, 0
      %v252 = vsel %vm229, %v226, 0
      %vm254 = vcmask 1043456
      %v256 = vsel %vm254, %v228, 0
      %258 = vmatprep.subr.mxu0 0.0
      %259 = vmatpush1.msra.mxu0 %v256
      %260 = vmatprep.subr.mxu0 0.0
      %261 = vmatpush1.msra.mxu0 0.0
      %262 = vmatprep.subr.mxu0 0.0
      %263 = vmatpush1.msra.mxu0 0.0
      %264 = vmatprep.subr.mxu0 0.0
      %265 = vmatpush1.msra.mxu0 0.0
      %266 = vmatprep.subr.mxu0 0.0
      %267 = vmatpush1.msra.mxu0 0.0
      %268 = vmatprep.subr.mxu0 0.0
      %269 = vmatpush1.msra.mxu0 0.0
      %270 = vmatprep.subr.mxu0 0.0
      %271 = vmatpush1.msra.mxu0 0.0
      %272 = vmatprep.subr.mxu0 0.0
      %273 = vmatpush1.msra.mxu0 0.0
      %274 = vmatprep.subr.mxu0 0.0
      %275 = vmatpush1.msra.mxu0 0.0
      %276 = vmatprep.subr.mxu0 0.0
      %277 = vmatpush1.msra.mxu0 0.0
      %278 = vmatprep.subr.mxu0 0.0
      %279 = vmatpush1.msra.mxu0 0.0
      %280 = vmatprep.subr.mxu0 0.0
      %281 = vmatpush1.msra.mxu0 0.0
      %282 = vmatprep.subr.mxu0 0.0
      %283 = vmatpush1.msra.mxu0 0.0
      %284 = vmatprep.subr.mxu0 0.0
      %285 = vmatpush1.msra.mxu0 0.0
      %286 = vmatprep.subr.mxu0 0.0
      %287 = vmatpush1.msra.mxu0 0.0
      %288 = vmatprep.subr.mxu0 0.0
      %289 = vmatpush1.msra.mxu0 0.0
      %290 = vmatprep.subr.mxu0 0.0
      %291 = vmatpush1.msra.mxu0 0.0
      %292 = vmatprep.subr.mxu0 0.0
      %293 = vmatpush1.msra.mxu0 0.0
      %294 = vmatprep.subr.mxu0 0.0
      %295 = vmatpush1.msra.mxu0 0.0
      %296 = vmatprep.subr.mxu0 0.0
      %297 = vmatpush1.msra.mxu0 0.0
      %298 = vmatprep.subr.mxu0 0.0
      %299 = vmatpush1.msra.mxu0 0.0
      %300 = vmatprep.subr.mxu0 0.0
      %301 = vmatpush1.msra.mxu0 0.0
      %302 = vmatprep.subr.mxu0 0.0
      %303 = vmatpush1.msra.mxu0 0.0
      %304 = vmatprep.subr.mxu0 0.0
      %305 = vmatpush1.msra.mxu0 0.0
      %306 = vmatprep.subr.mxu0 0.0
      %307 = vmatpush1.msra.mxu0 0.0
      %308 = vmatprep.subr.mxu0 0.0
      %309 = vmatpush1.msra.mxu0 0.0
      %310 = vmatprep.subr.mxu0 0.0
      %311 = vmatpush1.msra.mxu0 0.0
      %312 = vmatprep.subr.mxu0 0.0
      %313 = vmatpush1.msra.mxu0 0.0
      %314 = vmatprep.subr.mxu0 0.0
      %315 = vmatpush1.msra.mxu0 0.0
      %316 = vmatprep.subr.mxu0 0.0
      %317 = vmatpush1.msra.mxu0 0.0
      %318 = vmatprep.subr.mxu0 0.0
      %319 = vmatpush1.msra.mxu0 0.0
      %320 = vmatprep.subr.mxu0 0.0
      %321 = vmatpush1.msra.mxu0 0.0
      %322 = vmatprep.mubr.f32.mxu0 0.0
      %323 = vmatmul.mubr.f32.gmra.mrb[0].mxu0 %v231
      %v324 = vpop.f32.mrb[0].mxu0
      %v325 = vadd.f32 0.0, %v324
      %v326 = vpop.f32.mrb[0].mxu0
      %327 = vmatprep.mubr.f32.mxu0 0.0
      %328 = vmatmul.mubr.f32.gmra.mrb[0].mxu0 %v234
      %v329 = vpop.f32.mrb[0].mxu0
      %v330 = vadd.f32 0.0, %v329
      %v331 = vpop.f32.mrb[0].mxu0
      %332 = vmatprep.mubr.f32.mxu0 0.0
      %333 = vmatmul.mubr.f32.gmra.mrb[0].mxu0 %v237
      %v334 = vpop.f32.mrb[0].mxu0
      %v335 = vadd.f32 0.0, %v334
      %v336 = vpop.f32.mrb[0].mxu0
      %337 = vmatprep.mubr.f32.mxu0 0.0
      %338 = vmatmul.mubr.f32.gmra.mrb[0].mxu0 %v240
      %v339 = vpop.f32.mrb[0].mxu0
      %v340 = vadd.f32 0.0, %v339
      %v341 = vpop.f32.mrb[0].mxu0
      %342 = vmatprep.mubr.f32.mxu0 0.0
      %343 = vmatmul.mubr.f32.gmra.mrb[0].mxu0 %v243
      %v344 = vpop.f32.mrb[0].mxu0
      %v345 = vadd.f32 0.0, %v344
      %v346 = vpop.f32.mrb[0].mxu0
      %347 = vmatprep.mubr.f32.mxu0 0.0
      %348 = vmatmul.mubr.f32.gmra.mrb[0].mxu0 %v246
      %v349 = vpop.f32.mrb[0].mxu0
      %v350 = vadd.f32 0.0, %v349
      %v351 = vpop.f32.mrb[0].mxu0
      %352 = vmatprep.mubr.f32.mxu0 0.0
      %353 = vmatmul.mubr.f32.gmra.mrb[0].mxu0 %v249
      %v354 = vpop.f32.mrb[0].mxu0
      %v355 = vadd.f32 0.0, %v354
      %v356 = vpop.f32.mrb[0].mxu0
      %357 = vmatprep.mubr.f32.mxu0 0.0
      %358 = vmatmul.mubr.f32.gmra.mrb[0].mxu0 %v252
      %v359 = vpop.f32.mrb[0].mxu0
      %v360 = vadd.f32 0.0, %v359
      %v361 = vpop.f32.mrb[0].mxu0
      %362 = vdwg.mxu0
      %v364 = vsel %vm229, %v209, 0
      %v367 = vsel %vm229, %v210, 0
      %v370 = vsel %vm229, %v211, 0
      %v373 = vsel %vm229, %v212, 0
      %v376 = vsel %vm229, %v213, 0
      %v379 = vsel %vm229, %v214, 0
      %v382 = vsel %vm229, %v215, 0
      %v385 = vsel %vm229, %v216, 0
      %v388 = vsel %vm254, %v217, 0
      %390 = vmatprep.subr.mxu0 0.0
      %391 = vmatpush1.msra.mxu0 %v388
      %392 = vmatprep.subr.mxu0 0.0
      %393 = vmatpush1.msra.mxu0 0.0
      %394 = vmatprep.subr.mxu0 0.0
      %395 = vmatpush1.msra.mxu0 0.0
      %396 = vmatprep.subr.mxu0 0.0
      %397 = vmatpush1.msra.mxu0 0.0
      %398 = vmatprep.subr.mxu0 0.0
      %399 = vmatpush1.msra.mxu0 0.0
      %400 = vmatprep.subr.mxu0 0.0
      %401 = vmatpush1.msra.mxu0 0.0
      %402 = vmatprep.subr.mxu0 0.0
      %403 = vmatpush1.msra.mxu0 0.0
      %404 = vmatprep.subr.mxu0 0.0
      %405 = vmatpush1.msra.mxu0 0.0
      %406 = vmatprep.subr.mxu0 0.0
      %407 = vmatpush1.msra.mxu0 0.0
      %408 = vmatprep.subr.mxu0 0.0
      %409 = vmatpush1.msra.mxu0 0.0
      %410 = vmatprep.subr.mxu0 0.0
      %411 = vmatpush1.msra.mxu0 0.0
      %412 = vmatprep.subr.mxu0 0.0
      %413 = vmatpush1.msra.mxu0 0.0
      %414 = vmatprep.subr.mxu0 0.0
      %415 = vmatpush1.msra.mxu0 0.0
      %416 = vmatprep.subr.mxu0 0.0
      %417 = vmatpush1.msra.mxu0 0.0
      %418 = vmatprep.subr.mxu0 0.0
      %419 = vmatpush1.msra.mxu0 0.0
      %420 = vmatprep.subr.mxu0 0.0
      %421 = vmatpush1.msra.mxu0 0.0
      %422 = vmatprep.subr.mxu0 0.0
      %423 = vmatpush1.msra.mxu0 0.0
      %424 = vmatprep.subr.mxu0 0.0
      %425 = vmatpush1.msra.mxu0 0.0
      %426 = vmatprep.subr.mxu0 0.0
      %427 = vmatpush1.msra.mxu0 0.0
      %428 = vmatprep.subr.mxu0 0.0
      %429 = vmatpush1.msra.mxu0 0.0
      %430 = vmatprep.subr.mxu0 0.0
      %431 = vmatpush1.msra.mxu0 0.0
      %432 = vmatprep.subr.mxu0 0.0
      %433 = vmatpush1.msra.mxu0 0.0
      %434 = vmatprep.subr.mxu0 0.0
      %435 = vmatpush1.msra.mxu0 0.0
      %436 = vmatprep.subr.mxu0 0.0
      %437 = vmatpush1.msra.mxu0 0.0
      %438 = vmatprep.subr.mxu0 0.0
      %439 = vmatpush1.msra.mxu0 0.0
      %440 = vmatprep.subr.mxu0 0.0
      %441 = vmatpush1.msra.mxu0 0.0
      %442 = vmatprep.subr.mxu0 0.0
      %443 = vmatpush1.msra.mxu0 0.0
      %444 = vmatprep.subr.mxu0 0.0
      %445 = vmatpush1.msra.mxu0 0.0
      %446 = vmatprep.subr.mxu0 0.0
      %447 = vmatpush1.msra.mxu0 0.0
      %448 = vmatprep.subr.mxu0 0.0
      %449 = vmatpush1.msra.mxu0 0.0
      %450 = vmatprep.subr.mxu0 0.0
      %451 = vmatpush1.msra.mxu0 0.0
      %452 = vmatprep.subr.mxu0 0.0
      %453 = vmatpush1.msra.mxu0 0.0
      %454 = vmatprep.mubr.f32.mxu0 0.0
      %455 = vmatmul.mubr.f32.gmra.mrb[0].mxu0 %v364
      %v456 = vpop.f32.mrb[0].mxu0
      %v457 = vadd.f32 %v325, %v456
      %v458 = vpop.f32.mrb[0].mxu0
      %459 = vmatprep.mubr.f32.mxu0 0.0
      %460 = vmatmul.mubr.f32.gmra.mrb[0].mxu0 %v367
      %v461 = vpop.f32.mrb[0].mxu0
      %v462 = vadd.f32 %v330, %v461
      %v463 = vpop.f32.mrb[0].mxu0
      %464 = vmatprep.mubr.f32.mxu0 0.0
      %465 = vmatmul.mubr.f32.gmra.mrb[0].mxu0 %v370
      %v466 = vpop.f32.mrb[0].mxu0
      %v467 = vadd.f32 %v335, %v466
      %v468 = vpop.f32.mrb[0].mxu0
      %469 = vmatprep.mubr.f32.mxu0 0.0
      %470 = vmatmul.mubr.f32.gmra.mrb[0].mxu0 %v373
      %v471 = vpop.f32.mrb[0].mxu0
      %v472 = vadd.f32 %v340, %v471
      %v473 = vpop.f32.mrb[0].mxu0
      %474 = vmatprep.mubr.f32.mxu0 0.0
      %475 = vmatmul.mubr.f32.gmra.mrb[0].mxu0 %v376
      %v476 = vpop.f32.mrb[0].mxu0
      %v477 = vadd.f32 %v345, %v476
      %v478 = vpop.f32.mrb[0].mxu0
      %479 = vmatprep.mubr.f32.mxu0 0.0
      %480 = vmatmul.mubr.f32.gmra.mrb[0].mxu0 %v379
      %v481 = vpop.f32.mrb[0].mxu0
      %v482 = vadd.f32 %v350, %v481
      %v483 = vpop.f32.mrb[0].mxu0
      %484 = vmatprep.mubr.f32.mxu0 0.0
      %485 = vmatmul.mubr.f32.gmra.mrb[0].mxu0 %v382
      %v486 = vpop.f32.mrb[0].mxu0
      %v487 = vadd.f32 %v355, %v486
      %v488 = vpop.f32.mrb[0].mxu0
      %489 = vmatprep.mubr.f32.mxu0 0.0
      %490 = vmatmul.mubr.f32.gmra.mrb[0].mxu0 %v385
      %v491 = vpop.f32.mrb[0].mxu0
      %v492 = vadd.f32 %v360, %v491
      %v493 = vpop.f32.mrb[0].mxu0
      %494 = vdwg.mxu0
      %v495 = vld [vmem:[%s199 + $0x1] sm:$0xff]
      %v496 = vld [vmem:[%s199 + $0x11] sm:$0xff]
      %v497 = vld [vmem:[%s199 + $0x21] sm:$0xff]
      %v498 = vld [vmem:[%s199 + $0x31] sm:$0xff]
      %v499 = vld [vmem:[%s199 + $0x41] sm:$0xff]
      %v500 = vld [vmem:[%s199 + $0x51] sm:$0xff]
      %v501 = vld [vmem:[%s199 + $0x61] sm:$0xff]
      %v502 = vld [vmem:[%s199 + $0x71] sm:$0xff]
      %s503 = scalar_lea.vmem %s1, 8
      %v504 = vld [vmem:[%s503] sm:$0xf]
      %v506 = vsel %vm229, %v495, 0
      %v509 = vsel %vm229, %v496, 0
      %v512 = vsel %vm229, %v497, 0
      %v515 = vsel %vm229, %v498, 0
      %v518 = vsel %vm229, %v499, 0
      %v521 = vsel %vm229, %v500, 0
      %v524 = vsel %vm229, %v501, 0
      %v527 = vsel %vm229, %v502, 0
      %v530 = vsel %vm254, %v504, 0
      %532 = vmatprep.subr.mxu0 0.0
      %533 = vmatpush1.msra.mxu0 %v530
      %534 = vmatprep.subr.mxu0 0.0
      %535 = vmatpush1.msra.mxu0 0.0
      %536 = vmatprep.subr.mxu0 0.0
      %537 = vmatpush1.msra.mxu0 0.0
      %538 = vmatprep.subr.mxu0 0.0
      %539 = vmatpush1.msra.mxu0 0.0
      %540 = vmatprep.subr.mxu0 0.0
      %541 = vmatpush1.msra.mxu0 0.0
      %542 = vmatprep.subr.mxu0 0.0
      %543 = vmatpush1.msra.mxu0 0.0
      %544 = vmatprep.subr.mxu0 0.0
      %545 = vmatpush1.msra.mxu0 0.0
      %546 = vmatprep.subr.mxu0 0.0
      %547 = vmatpush1.msra.mxu0 0.0
      %548 = vmatprep.subr.mxu0 0.0
      %549 = vmatpush1.msra.mxu0 0.0
      %550 = vmatprep.subr.mxu0 0.0
      %551 = vmatpush1.msra.mxu0 0.0
      %552 = vmatprep.subr.mxu0 0.0
      %553 = vmatpush1.msra.mxu0 0.0
      %554 = vmatprep.subr.mxu0 0.0
      %555 = vmatpush1.msra.mxu0 0.0
      %556 = vmatprep.subr.mxu0 0.0
      %557 = vmatpush1.msra.mxu0 0.0
      %558 = vmatprep.subr.mxu0 0.0
      %559 = vmatpush1.msra.mxu0 0.0
      %560 = vmatprep.subr.mxu0 0.0
      %561 = vmatpush1.msra.mxu0 0.0
      %562 = vmatprep.subr.mxu0 0.0
      %563 = vmatpush1.msra.mxu0 0.0
      %564 = vmatprep.subr.mxu0 0.0
      %565 = vmatpush1.msra.mxu0 0.0
      %566 = vmatprep.subr.mxu0 0.0
      %567 = vmatpush1.msra.mxu0 0.0
      %568 = vmatprep.subr.mxu0 0.0
      %569 = vmatpush1.msra.mxu0 0.0
      %570 = vmatprep.subr.mxu0 0.0
      %571 = vmatpush1.msra.mxu0 0.0
      %572 = vmatprep.subr.mxu0 0.0
      %573 = vmatpush1.msra.mxu0 0.0
      %574 = vmatprep.subr.mxu0 0.0
      %575 = vmatpush1.msra.mxu0 0.0
      %576 = vmatprep.subr.mxu0 0.0
      %577 = vmatpush1.msra.mxu0 0.0
      %578 = vmatprep.subr.mxu0 0.0
      %579 = vmatpush1.msra.mxu0 0.0
      %580 = vmatprep.subr.mxu0 0.0
      %581 = vmatpush1.msra.mxu0 0.0
      %582 = vmatprep.subr.mxu0 0.0
      %583 = vmatpush1.msra.mxu0 0.0
      %584 = vmatprep.subr.mxu0 0.0
      %585 = vmatpush1.msra.mxu0 0.0
      %586 = vmatprep.subr.mxu0 0.0
      %587 = vmatpush1.msra.mxu0 0.0
      %588 = vmatprep.subr.mxu0 0.0
      %589 = vmatpush1.msra.mxu0 0.0
      %590 = vmatprep.subr.mxu0 0.0
      %591 = vmatpush1.msra.mxu0 0.0
      %592 = vmatprep.subr.mxu0 0.0
      %593 = vmatpush1.msra.mxu0 0.0
      %594 = vmatprep.subr.mxu0 0.0
      %595 = vmatpush1.msra.mxu0 0.0
      %596 = vmatprep.mubr.f32.mxu0 0.0
      %597 = vmatmul.mubr.f32.gmra.mrb[0].mxu0 %v506
      %v598 = vpop.f32.mrb[0].mxu0
      %v599 = vadd.f32 0.0, %v598
      %v600 = vpop.f32.mrb[0].mxu0
      %601 = vmatprep.mubr.f32.mxu0 0.0
      %602 = vmatmul.mubr.f32.gmra.mrb[0].mxu0 %v509
      %v603 = vpop.f32.mrb[0].mxu0
      %v604 = vadd.f32 0.0, %v603
      %v605 = vpop.f32.mrb[0].mxu0
      %606 = vmatprep.mubr.f32.mxu0 0.0
      %607 = vmatmul.mubr.f32.gmra.mrb[0].mxu0 %v512
      %v608 = vpop.f32.mrb[0].mxu0
      %v609 = vadd.f32 0.0, %v608
      %v610 = vpop.f32.mrb[0].mxu0
      %611 = vmatprep.mubr.f32.mxu0 0.0
      %612 = vmatmul.mubr.f32.gmra.mrb[0].mxu0 %v515
      %v613 = vpop.f32.mrb[0].mxu0
      %v614 = vadd.f32 0.0, %v613
      %v615 = vpop.f32.mrb[0].mxu0
      %616 = vmatprep.mubr.f32.mxu0 0.0
      %617 = vmatmul.mubr.f32.gmra.mrb[0].mxu0 %v518
      %v618 = vpop.f32.mrb[0].mxu0
      %v619 = vadd.f32 0.0, %v618
      %v620 = vpop.f32.mrb[0].mxu0
      %621 = vmatprep.mubr.f32.mxu0 0.0
      %622 = vmatmul.mubr.f32.gmra.mrb[0].mxu0 %v521
      %v623 = vpop.f32.mrb[0].mxu0
      %v624 = vadd.f32 0.0, %v623
      %v625 = vpop.f32.mrb[0].mxu0
      %626 = vmatprep.mubr.f32.mxu0 0.0
      %627 = vmatmul.mubr.f32.gmra.mrb[0].mxu0 %v524
      %v628 = vpop.f32.mrb[0].mxu0
      %v629 = vadd.f32 0.0, %v628
      %v630 = vpop.f32.mrb[0].mxu0
      %631 = vmatprep.mubr.f32.mxu0 0.0
      %632 = vmatmul.mubr.f32.gmra.mrb[0].mxu0 %v527
      %v633 = vpop.f32.mrb[0].mxu0
      %v634 = vadd.f32 0.0, %v633
      %v635 = vpop.f32.mrb[0].mxu0
      %636 = vdwg.mxu0
      %v637 = vadd.f32 %v457, %v599
      %v638 = vadd.f32 %v462, %v604
      %v639 = vadd.f32 %v467, %v609
      %v640 = vadd.f32 %v472, %v614
      %v641 = vadd.f32 %v477, %v619
      %v642 = vadd.f32 %v482, %v624
      %v643 = vadd.f32 %v487, %v629
      %v644 = vadd.f32 %v492, %v634
      %s645 = scalar_lea.vmem %s199, 288
      %v646 = vld [vmem:[%s645] sm:$0xff]
      %v647 = vld [vmem:[%s645 + $0x10] sm:$0xff]
      %v648 = vld [vmem:[%s645 + $0x20] sm:$0xff]
      %v649 = vld [vmem:[%s645 + $0x30] sm:$0xff]
      %v650 = vld [vmem:[%s645 + $0x40] sm:$0xff]
      %v651 = vld [vmem:[%s645 + $0x50] sm:$0xff]
      %v652 = vld [vmem:[%s645 + $0x60] sm:$0xff]
      %v653 = vld [vmem:[%s645 + $0x70] sm:$0xff]
      %s654 = scalar_lea.vmem %s1, 12
      %v655 = vld [vmem:[%s654] sm:$0xf]
      %v657 = vsel %vm229, %v646, 0
      %v660 = vsel %vm229, %v647, 0
      %v663 = vsel %vm229, %v648, 0
      %v666 = vsel %vm229, %v649, 0
      %v669 = vsel %vm229, %v650, 0
      %v672 = vsel %vm229, %v651, 0
      %v675 = vsel %vm229, %v652, 0
      %v678 = vsel %vm229, %v653, 0
      %v681 = vsel %vm254, %v655, 0
      %683 = vmatprep.subr.mxu0 0.0
      %684 = vmatpush1.msra.mxu0 %v681
      %685 = vmatprep.subr.mxu0 0.0
      %686 = vmatpush1.msra.mxu0 0.0
      %687 = vmatprep.subr.mxu0 0.0
      %688 = vmatpush1.msra.mxu0 0.0
      %689 = vmatprep.subr.mxu0 0.0
      %690 = vmatpush1.msra.mxu0 0.0
      %691 = vmatprep.subr.mxu0 0.0
      %692 = vmatpush1.msra.mxu0 0.0
      %693 = vmatprep.subr.mxu0 0.0
      %694 = vmatpush1.msra.mxu0 0.0
      %695 = vmatprep.subr.mxu0 0.0
      %696 = vmatpush1.msra.mxu0 0.0
      %697 = vmatprep.subr.mxu0 0.0
      %698 = vmatpush1.msra.mxu0 0.0
      %699 = vmatprep.subr.mxu0 0.0
      %700 = vmatpush1.msra.mxu0 0.0
      %701 = vmatprep.subr.mxu0 0.0
      %702 = vmatpush1.msra.mxu0 0.0
      %703 = vmatprep.subr.mxu0 0.0
      %704 = vmatpush1.msra.mxu0 0.0
      %705 = vmatprep.subr.mxu0 0.0
      %706 = vmatpush1.msra.mxu0 0.0
      %707 = vmatprep.subr.mxu0 0.0
      %708 = vmatpush1.msra.mxu0 0.0
      %709 = vmatprep.subr.mxu0 0.0
      %710 = vmatpush1.msra.mxu0 0.0
      %711 = vmatprep.subr.mxu0 0.0
      %712 = vmatpush1.msra.mxu0 0.0
      %713 = vmatprep.subr.mxu0 0.0
      %714 = vmatpush1.msra.mxu0 0.0
      %715 = vmatprep.subr.mxu0 0.0
      %716 = vmatpush1.msra.mxu0 0.0
      %717 = vmatprep.subr.mxu0 0.0
      %718 = vmatpush1.msra.mxu0 0.0
      %719 = vmatprep.subr.mxu0 0.0
      %720 = vmatpush1.msra.mxu0 0.0
      %721 = vmatprep.subr.mxu0 0.0
      %722 = vmatpush1.msra.mxu0 0.0
      %723 = vmatprep.subr.mxu0 0.0
      %724 = vmatpush1.msra.mxu0 0.0
      %725 = vmatprep.subr.mxu0 0.0
      %726 = vmatpush1.msra.mxu0 0.0
      %727 = vmatprep.subr.mxu0 0.0
      %728 = vmatpush1.msra.mxu0 0.0
      %729 = vmatprep.subr.mxu0 0.0
      %730 = vmatpush1.msra.mxu0 0.0
      %731 = vmatprep.subr.mxu0 0.0
      %732 = vmatpush1.msra.mxu0 0.0
      %733 = vmatprep.subr.mxu0 0.0
      %734 = vmatpush1.msra.mxu0 0.0
      %735 = vmatprep.subr.mxu0 0.0
      %736 = vmatpush1.msra.mxu0 0.0
      %737 = vmatprep.subr.mxu0 0.0
      %738 = vmatpush1.msra.mxu0 0.0
      %739 = vmatprep.subr.mxu0 0.0
      %740 = vmatpush1.msra.mxu0 0.0
      %741 = vmatprep.subr.mxu0 0.0
      %742 = vmatpush1.msra.mxu0 0.0
      %743 = vmatprep.subr.mxu0 0.0
      %744 = vmatpush1.msra.mxu0 0.0
      %745 = vmatprep.subr.mxu0 0.0
      %746 = vmatpush1.msra.mxu0 0.0
      %747 = vmatprep.mubr.f32.mxu0 0.0
      %748 = vmatmul.mubr.f32.gmra.mrb[0].mxu0 %v657
      %v749 = vpop.f32.mrb[0].mxu0
      %v750 = vadd.f32 0.0, %v749
      %v751 = vpop.f32.mrb[0].mxu0
      %752 = vmatprep.mubr.f32.mxu0 0.0
      %753 = vmatmul.mubr.f32.gmra.mrb[0].mxu0 %v660
      %v754 = vpop.f32.mrb[0].mxu0
      %v755 = vadd.f32 0.0, %v754
      %v756 = vpop.f32.mrb[0].mxu0
      %757 = vmatprep.mubr.f32.mxu0 0.0
      %758 = vmatmul.mubr.f32.gmra.mrb[0].mxu0 %v663
      %v759 = vpop.f32.mrb[0].mxu0
      %v760 = vadd.f32 0.0, %v759
      %v761 = vpop.f32.mrb[0].mxu0
      %762 = vmatprep.mubr.f32.mxu0 0.0
      %763 = vmatmul.mubr.f32.gmra.mrb[0].mxu0 %v666
      %v764 = vpop.f32.mrb[0].mxu0
      %v765 = vadd.f32 0.0, %v764
      %v766 = vpop.f32.mrb[0].mxu0
      %767 = vmatprep.mubr.f32.mxu0 0.0
      %768 = vmatmul.mubr.f32.gmra.mrb[0].mxu0 %v669
      %v769 = vpop.f32.mrb[0].mxu0
      %v770 = vadd.f32 0.0, %v769
      %v771 = vpop.f32.mrb[0].mxu0
      %772 = vmatprep.mubr.f32.mxu0 0.0
      %773 = vmatmul.mubr.f32.gmra.mrb[0].mxu0 %v672
      %v774 = vpop.f32.mrb[0].mxu0
      %v775 = vadd.f32 0.0, %v774
      %v776 = vpop.f32.mrb[0].mxu0
      %777 = vmatprep.mubr.f32.mxu0 0.0
      %778 = vmatmul.mubr.f32.gmra.mrb[0].mxu0 %v675
      %v779 = vpop.f32.mrb[0].mxu0
      %v780 = vadd.f32 0.0, %v779
      %v781 = vpop.f32.mrb[0].mxu0
      %782 = vmatprep.mubr.f32.mxu0 0.0
      %783 = vmatmul.mubr.f32.gmra.mrb[0].mxu0 %v678
      %v784 = vpop.f32.mrb[0].mxu0
      %v785 = vadd.f32 0.0, %v784
      %v786 = vpop.f32.mrb[0].mxu0
      %787 = vdwg.mxu0
      %v788 = vadd.f32 %v637, %v750
      %v789 = vadd.f32 %v638, %v755
      %v790 = vadd.f32 %v639, %v760
      %v791 = vadd.f32 %v640, %v765
      %v792 = vadd.f32 %v641, %v770
      %v793 = vadd.f32 %v642, %v775
      %v794 = vadd.f32 %v643, %v780
      %v795 = vadd.f32 %v644, %v785
      %s796 = scalar_lea.vmem %s199, 432
      %v797 = vld [vmem:[%s796] sm:$0xff]
      %v798 = vld [vmem:[%s796 + $0x10] sm:$0xff]
      %v799 = vld [vmem:[%s796 + $0x20] sm:$0xff]
      %v800 = vld [vmem:[%s796 + $0x30] sm:$0xff]
      %v801 = vld [vmem:[%s796 + $0x40] sm:$0xff]
      %v802 = vld [vmem:[%s796 + $0x50] sm:$0xff]
      %v803 = vld [vmem:[%s796 + $0x60] sm:$0xff]
      %v804 = vld [vmem:[%s796 + $0x70] sm:$0xff]
      %s805 = scalar_lea.vmem %s1, 16
      %v806 = vld [vmem:[%s805] sm:$0xf]
      %v808 = vsel %vm229, %v797, 0
      %v811 = vsel %vm229, %v798, 0
      %v814 = vsel %vm229, %v799, 0
      %v817 = vsel %vm229, %v800, 0
      %v820 = vsel %vm229, %v801, 0
      %v823 = vsel %vm229, %v802, 0
      %v826 = vsel %vm229, %v803, 0
      %v829 = vsel %vm229, %v804, 0
      %v832 = vsel %vm254, %v806, 0
      %834 = vmatprep.subr.mxu0 0.0
      %835 = vmatpush1.msra.mxu0 %v832
      %836 = vmatprep.subr.mxu0 0.0
      %837 = vmatpush1.msra.mxu0 0.0
      %838 = vmatprep.subr.mxu0 0.0
      %839 = vmatpush1.msra.mxu0 0.0
      %840 = vmatprep.subr.mxu0 0.0
      %841 = vmatpush1.msra.mxu0 0.0
      %842 = vmatprep.subr.mxu0 0.0
      %843 = vmatpush1.msra.mxu0 0.0
      %844 = vmatprep.subr.mxu0 0.0
      %845 = vmatpush1.msra.mxu0 0.0
      %846 = vmatprep.subr.mxu0 0.0
      %847 = vmatpush1.msra.mxu0 0.0
      %848 = vmatprep.subr.mxu0 0.0
      %849 = vmatpush1.msra.mxu0 0.0
      %850 = vmatprep.subr.mxu0 0.0
      %851 = vmatpush1.msra.mxu0 0.0
      %852 = vmatprep.subr.mxu0 0.0
      %853 = vmatpush1.msra.mxu0 0.0
      %854 = vmatprep.subr.mxu0 0.0
      %855 = vmatpush1.msra.mxu0 0.0
      %856 = vmatprep.subr.mxu0 0.0
      %857 = vmatpush1.msra.mxu0 0.0
      %858 = vmatprep.subr.mxu0 0.0
      %859 = vmatpush1.msra.mxu0 0.0
      %860 = vmatprep.subr.mxu0 0.0
      %861 = vmatpush1.msra.mxu0 0.0
      %862 = vmatprep.subr.mxu0 0.0
      %863 = vmatpush1.msra.mxu0 0.0
      %864 = vmatprep.subr.mxu0 0.0
      %865 = vmatpush1.msra.mxu0 0.0
      %866 = vmatprep.subr.mxu0 0.0
      %867 = vmatpush1.msra.mxu0 0.0
      %868 = vmatprep.subr.mxu0 0.0
      %869 = vmatpush1.msra.mxu0 0.0
      %870 = vmatprep.subr.mxu0 0.0
      %871 = vmatpush1.msra.mxu0 0.0
      %872 = vmatprep.subr.mxu0 0.0
      %873 = vmatpush1.msra.mxu0 0.0
      %874 = vmatprep.subr.mxu0 0.0
      %875 = vmatpush1.msra.mxu0 0.0
      %876 = vmatprep.subr.mxu0 0.0
      %877 = vmatpush1.msra.mxu0 0.0
      %878 = vmatprep.subr.mxu0 0.0
      %879 = vmatpush1.msra.mxu0 0.0
      %880 = vmatprep.subr.mxu0 0.0
      %881 = vmatpush1.msra.mxu0 0.0
      %882 = vmatprep.subr.mxu0 0.0
      %883 = vmatpush1.msra.mxu0 0.0
      %884 = vmatprep.subr.mxu0 0.0
      %885 = vmatpush1.msra.mxu0 0.0
      %886 = vmatprep.subr.mxu0 0.0
      %887 = vmatpush1.msra.mxu0 0.0
      %888 = vmatprep.subr.mxu0 0.0
      %889 = vmatpush1.msra.mxu0 0.0
      %890 = vmatprep.subr.mxu0 0.0
      %891 = vmatpush1.msra.mxu0 0.0
      %892 = vmatprep.subr.mxu0 0.0
      %893 = vmatpush1.msra.mxu0 0.0
      %894 = vmatprep.subr.mxu0 0.0
      %895 = vmatpush1.msra.mxu0 0.0
      %896 = vmatprep.subr.mxu0 0.0
      %897 = vmatpush1.msra.mxu0 0.0
      %898 = vmatprep.mubr.f32.mxu0 0.0
      %899 = vmatmul.mubr.f32.gmra.mrb[0].mxu0 %v808
      %v900 = vpop.f32.mrb[0].mxu0
      %v901 = vadd.f32 0.0, %v900
      %v902 = vpop.f32.mrb[0].mxu0
      %903 = vmatprep.mubr.f32.mxu0 0.0
      %904 = vmatmul.mubr.f32.gmra.mrb[0].mxu0 %v811
      %v905 = vpop.f32.mrb[0].mxu0
      %v906 = vadd.f32 0.0, %v905
      %v907 = vpop.f32.mrb[0].mxu0
      %908 = vmatprep.mubr.f32.mxu0 0.0
      %909 = vmatmul.mubr.f32.gmra.mrb[0].mxu0 %v814
      %v910 = vpop.f32.mrb[0].mxu0
      %v911 = vadd.f32 0.0, %v910
      %v912 = vpop.f32.mrb[0].mxu0
      %913 = vmatprep.mubr.f32.mxu0 0.0
      %914 = vmatmul.mubr.f32.gmra.mrb[0].mxu0 %v817
      %v915 = vpop.f32.mrb[0].mxu0
      %v916 = vadd.f32 0.0, %v915
      %v917 = vpop.f32.mrb[0].mxu0
      %918 = vmatprep.mubr.f32.mxu0 0.0
      %919 = vmatmul.mubr.f32.gmra.mrb[0].mxu0 %v820
      %v920 = vpop.f32.mrb[0].mxu0
      %v921 = vadd.f32 0.0, %v920
      %v922 = vpop.f32.mrb[0].mxu0
      %923 = vmatprep.mubr.f32.mxu0 0.0
      %924 = vmatmul.mubr.f32.gmra.mrb[0].mxu0 %v823
      %v925 = vpop.f32.mrb[0].mxu0
      %v926 = vadd.f32 0.0, %v925
      %v927 = vpop.f32.mrb[0].mxu0
      %928 = vmatprep.mubr.f32.mxu0 0.0
      %929 = vmatmul.mubr.f32.gmra.mrb[0].mxu0 %v826
      %v930 = vpop.f32.mrb[0].mxu0
      %v931 = vadd.f32 0.0, %v930
      %v932 = vpop.f32.mrb[0].mxu0
      %933 = vmatprep.mubr.f32.mxu0 0.0
      %934 = vmatmul.mubr.f32.gmra.mrb[0].mxu0 %v829
      %v935 = vpop.f32.mrb[0].mxu0
      %v936 = vadd.f32 0.0, %v935
      %v937 = vpop.f32.mrb[0].mxu0
      %938 = vdwg.mxu0
      %v939 = vadd.f32 %v788, %v901
      %v940 = vadd.f32 %v789, %v906
      %v941 = vadd.f32 %v790, %v911
      %v942 = vadd.f32 %v791, %v916
      %v943 = vadd.f32 %v792, %v921
      %v944 = vadd.f32 %v793, %v926
      %v945 = vadd.f32 %v794, %v931
      %v946 = vadd.f32 %v795, %v936
      %v947 = vld [vmem:[%s645 + $0x1] sm:$0xff]
      %v948 = vld [vmem:[%s645 + $0x11] sm:$0xff]
      %v949 = vld [vmem:[%s645 + $0x21] sm:$0xff]
      %v950 = vld [vmem:[%s645 + $0x31] sm:$0xff]
      %v951 = vld [vmem:[%s645 + $0x41] sm:$0xff]
      %v952 = vld [vmem:[%s645 + $0x51] sm:$0xff]
      %v953 = vld [vmem:[%s645 + $0x61] sm:$0xff]
      %v954 = vld [vmem:[%s645 + $0x71] sm:$0xff]
      %s955 = scalar_lea.vmem %s1, 20
      %v956 = vld [vmem:[%s955] sm:$0xf]
      %v958 = vsel %vm229, %v947, 0
      %v961 = vsel %vm229, %v948, 0
      %v964 = vsel %vm229, %v949, 0
      %v967 = vsel %vm229, %v950, 0
      %v970 = vsel %vm229, %v951, 0
      %v973 = vsel %vm229, %v952, 0
      %v976 = vsel %vm229, %v953, 0
      %v979 = vsel %vm229, %v954, 0
      %v982 = vsel %vm254, %v956, 0
      %984 = vmatprep.subr.mxu0 0.0
      %985 = vmatpush1.msra.mxu0 %v982
      %986 = vmatprep.subr.mxu0 0.0
      %987 = vmatpush1.msra.mxu0 0.0
      %988 = vmatprep.subr.mxu0 0.0
      %989 = vmatpush1.msra.mxu0 0.0
      %990 = vmatprep.subr.mxu0 0.0
      %991 = vmatpush1.msra.mxu0 0.0
      %992 = vmatprep.subr.mxu0 0.0
      %993 = vmatpush1.msra.mxu0 0.0
      %994 = vmatprep.subr.mxu0 0.0
      %995 = vmatpush1.msra.mxu0 0.0
      %996 = vmatprep.subr.mxu0 0.0
      %997 = vmatpush1.msra.mxu0 0.0
      %998 = vmatprep.subr.mxu0 0.0
      %999 = vmatpush1.msra.mxu0 0.0
      %1000 = vmatprep.subr.mxu0 0.0
      %1001 = vmatpush1.msra.mxu0 0.0
      %1002 = vmatprep.subr.mxu0 0.0
      %1003 = vmatpush1.msra.mxu0 0.0
      %1004 = vmatprep.subr.mxu0 0.0
      %1005 = vmatpush1.msra.mxu0 0.0
      %1006 = vmatprep.subr.mxu0 0.0
      %1007 = vmatpush1.msra.mxu0 0.0
      %1008 = vmatprep.subr.mxu0 0.0
      %1009 = vmatpush1.msra.mxu0 0.0
      %1010 = vmatprep.subr.mxu0 0.0
      %1011 = vmatpush1.msra.mxu0 0.0
      %1012 = vmatprep.subr.mxu0 0.0
      %1013 = vmatpush1.msra.mxu0 0.0
      %1014 = vmatprep.subr.mxu0 0.0
      %1015 = vmatpush1.msra.mxu0 0.0
      %1016 = vmatprep.subr.mxu0 0.0
      %1017 = vmatpush1.msra.mxu0 0.0
      %1018 = vmatprep.subr.mxu0 0.0
      %1019 = vmatpush1.msra.mxu0 0.0
      %1020 = vmatprep.subr.mxu0 0.0
      %1021 = vmatpush1.msra.mxu0 0.0
      %1022 = vmatprep.subr.mxu0 0.0
      %1023 = vmatpush1.msra.mxu0 0.0
      %1024 = vmatprep.subr.mxu0 0.0
      %1025 = vmatpush1.msra.mxu0 0.0
      %1026 = vmatprep.subr.mxu0 0.0
      %1027 = vmatpush1.msra.mxu0 0.0
      %1028 = vmatprep.subr.mxu0 0.0
      %1029 = vmatpush1.msra.mxu0 0.0
      %1030 = vmatprep.subr.mxu0 0.0
      %1031 = vmatpush1.msra.mxu0 0.0
      %1032 = vmatprep.subr.mxu0 0.0
      %1033 = vmatpush1.msra.mxu0 0.0
      %1034 = vmatprep.subr.mxu0 0.0
      %1035 = vmatpush1.msra.mxu0 0.0
      %1036 = vmatprep.subr.mxu0 0.0
      %1037 = vmatpush1.msra.mxu0 0.0
      %1038 = vmatprep.subr.mxu0 0.0
      %1039 = vmatpush1.msra.mxu0 0.0
      %1040 = vmatprep.subr.mxu0 0.0
      %1041 = vmatpush1.msra.mxu0 0.0
      %1042 = vmatprep.subr.mxu0 0.0
      %1043 = vmatpush1.msra.mxu0 0.0
      %1044 = vmatprep.subr.mxu0 0.0
      %1045 = vmatpush1.msra.mxu0 0.0
      %1046 = vmatprep.subr.mxu0 0.0
      %1047 = vmatpush1.msra.mxu0 0.0
      %1048 = vmatprep.mubr.f32.mxu0 0.0
      %1049 = vmatmul.mubr.f32.gmra.mrb[0].mxu0 %v958
      %v1050 = vpop.f32.mrb[0].mxu0
      %v1051 = vadd.f32 0.0, %v1050
      %v1052 = vpop.f32.mrb[0].mxu0
      %1053 = vmatprep.mubr.f32.mxu0 0.0
      %1054 = vmatmul.mubr.f32.gmra.mrb[0].mxu0 %v961
      %v1055 = vpop.f32.mrb[0].mxu0
      %v1056 = vadd.f32 0.0, %v1055
      %v1057 = vpop.f32.mrb[0].mxu0
      %1058 = vmatprep.mubr.f32.mxu0 0.0
      %1059 = vmatmul.mubr.f32.gmra.mrb[0].mxu0 %v964
      %v1060 = vpop.f32.mrb[0].mxu0
      %v1061 = vadd.f32 0.0, %v1060
      %v1062 = vpop.f32.mrb[0].mxu0
      %1063 = vmatprep.mubr.f32.mxu0 0.0
      %1064 = vmatmul.mubr.f32.gmra.mrb[0].mxu0 %v967
      %v1065 = vpop.f32.mrb[0].mxu0
      %v1066 = vadd.f32 0.0, %v1065
      %v1067 = vpop.f32.mrb[0].mxu0
      %1068 = vmatprep.mubr.f32.mxu0 0.0
      %1069 = vmatmul.mubr.f32.gmra.mrb[0].mxu0 %v970
      %v1070 = vpop.f32.mrb[0].mxu0
      %v1071 = vadd.f32 0.0, %v1070
      %v1072 = vpop.f32.mrb[0].mxu0
      %1073 = vmatprep.mubr.f32.mxu0 0.0
      %1074 = vmatmul.mubr.f32.gmra.mrb[0].mxu0 %v973
      %v1075 = vpop.f32.mrb[0].mxu0
      %v1076 = vadd.f32 0.0, %v1075
      %v1077 = vpop.f32.mrb[0].mxu0
      %1078 = vmatprep.mubr.f32.mxu0 0.0
      %1079 = vmatmul.mubr.f32.gmra.mrb[0].mxu0 %v976
      %v1080 = vpop.f32.mrb[0].mxu0
      %v1081 = vadd.f32 0.0, %v1080
      %v1082 = vpop.f32.mrb[0].mxu0
      %1083 = vmatprep.mubr.f32.mxu0 0.0
      %1084 = vmatmul.mubr.f32.gmra.mrb[0].mxu0 %v979
      %v1085 = vpop.f32.mrb[0].mxu0
      %v1086 = vadd.f32 0.0, %v1085
      %v1087 = vpop.f32.mrb[0].mxu0
      %1088 = vdwg.mxu0
      %v1089 = vadd.f32 %v939, %v1051
      %v1090 = vadd.f32 %v940, %v1056
      %v1091 = vadd.f32 %v941, %v1061
      %v1092 = vadd.f32 %v942, %v1066
      %v1093 = vadd.f32 %v943, %v1071
      %v1094 = vadd.f32 %v944, %v1076
      %v1095 = vadd.f32 %v945, %v1081
      %v1096 = vadd.f32 %v946, %v1086
      %s1097 = scalar_lea.vmem %s199, 16
      %v1098 = vld [vmem:[%s1097] sm:$0xff]
      %v1099 = vld [vmem:[%s1097 + $0x10] sm:$0xff]
      %v1100 = vld [vmem:[%s1097 + $0x20] sm:$0xff]
      %v1101 = vld [vmem:[%s1097 + $0x30] sm:$0xff]
      %v1102 = vld [vmem:[%s1097 + $0x40] sm:$0xff]
      %v1103 = vld [vmem:[%s1097 + $0x50] sm:$0xff]
      %v1104 = vld [vmem:[%s1097 + $0x60] sm:$0xff]
      %v1105 = vld [vmem:[%s1097 + $0x70] sm:$0xff]
      %s1106 = scalar_lea.vmem %s1, 24
      %v1107 = vld [vmem:[%s1106] sm:$0xf]
      %v1109 = vsel %vm229, %v1098, 0
      %v1112 = vsel %vm229, %v1099, 0
      %v1115 = vsel %vm229, %v1100, 0
      %v1118 = vsel %vm229, %v1101, 0
      %v1121 = vsel %vm229, %v1102, 0
      %v1124 = vsel %vm229, %v1103, 0
      %v1127 = vsel %vm229, %v1104, 0
      %v1130 = vsel %vm229, %v1105, 0
      %v1133 = vsel %vm254, %v1107, 0
      %1135 = vmatprep.subr.mxu0 0.0
      %1136 = vmatpush1.msra.mxu0 %v1133
      %1137 = vmatprep.subr.mxu0 0.0
      %1138 = vmatpush1.msra.mxu0 0.0
      %1139 = vmatprep.subr.mxu0 0.0
      %1140 = vmatpush1.msra.mxu0 0.0
      %1141 = vmatprep.subr.mxu0 0.0
      %1142 = vmatpush1.msra.mxu0 0.0
      %1143 = vmatprep.subr.mxu0 0.0
      %1144 = vmatpush1.msra.mxu0 0.0
      %1145 = vmatprep.subr.mxu0 0.0
      %1146 = vmatpush1.msra.mxu0 0.0
      %1147 = vmatprep.subr.mxu0 0.0
      %1148 = vmatpush1.msra.mxu0 0.0
      %1149 = vmatprep.subr.mxu0 0.0
      %1150 = vmatpush1.msra.mxu0 0.0
      %1151 = vmatprep.subr.mxu0 0.0
      %1152 = vmatpush1.msra.mxu0 0.0
      %1153 = vmatprep.subr.mxu0 0.0
      %1154 = vmatpush1.msra.mxu0 0.0
      %1155 = vmatprep.subr.mxu0 0.0
      %1156 = vmatpush1.msra.mxu0 0.0
      %1157 = vmatprep.subr.mxu0 0.0
      %1158 = vmatpush1.msra.mxu0 0.0
      %1159 = vmatprep.subr.mxu0 0.0
      %1160 = vmatpush1.msra.mxu0 0.0
      %1161 = vmatprep.subr.mxu0 0.0
      %1162 = vmatpush1.msra.mxu0 0.0
      %1163 = vmatprep.subr.mxu0 0.0
      %1164 = vmatpush1.msra.mxu0 0.0
      %1165 = vmatprep.subr.mxu0 0.0
      %1166 = vmatpush1.msra.mxu0 0.0
      %1167 = vmatprep.subr.mxu0 0.0
      %1168 = vmatpush1.msra.mxu0 0.0
      %1169 = vmatprep.subr.mxu0 0.0
      %1170 = vmatpush1.msra.mxu0 0.0
      %1171 = vmatprep.subr.mxu0 0.0
      %1172 = vmatpush1.msra.mxu0 0.0
      %1173 = vmatprep.subr.mxu0 0.0
      %1174 = vmatpush1.msra.mxu0 0.0
      %1175 = vmatprep.subr.mxu0 0.0
      %1176 = vmatpush1.msra.mxu0 0.0
      %1177 = vmatprep.subr.mxu0 0.0
      %1178 = vmatpush1.msra.mxu0 0.0
      %1179 = vmatprep.subr.mxu0 0.0
      %1180 = vmatpush1.msra.mxu0 0.0
      %1181 = vmatprep.subr.mxu0 0.0
      %1182 = vmatpush1.msra.mxu0 0.0
      %1183 = vmatprep.subr.mxu0 0.0
      %1184 = vmatpush1.msra.mxu0 0.0
      %1185 = vmatprep.subr.mxu0 0.0
      %1186 = vmatpush1.msra.mxu0 0.0
      %1187 = vmatprep.subr.mxu0 0.0
      %1188 = vmatpush1.msra.mxu0 0.0
      %1189 = vmatprep.subr.mxu0 0.0
      %1190 = vmatpush1.msra.mxu0 0.0
      %1191 = vmatprep.subr.mxu0 0.0
      %1192 = vmatpush1.msra.mxu0 0.0
      %1193 = vmatprep.subr.mxu0 0.0
      %1194 = vmatpush1.msra.mxu0 0.0
      %1195 = vmatprep.subr.mxu0 0.0
      %1196 = vmatpush1.msra.mxu0 0.0
      %1197 = vmatprep.subr.mxu0 0.0
      %1198 = vmatpush1.msra.mxu0 0.0
      %1199 = vmatprep.mubr.f32.mxu0 0.0
      %1200 = vmatmul.mubr.f32.gmra.mrb[0].mxu0 %v1109
      %v1201 = vpop.f32.mrb[0].mxu0
      %v1202 = vadd.f32 0.0, %v1201
      %v1203 = vpop.f32.mrb[0].mxu0
      %1204 = vmatprep.mubr.f32.mxu0 0.0
      %1205 = vmatmul.mubr.f32.gmra.mrb[0].mxu0 %v1112
      %v1206 = vpop.f32.mrb[0].mxu0
      %v1207 = vadd.f32 0.0, %v1206
      %v1208 = vpop.f32.mrb[0].mxu0
      %1209 = vmatprep.mubr.f32.mxu0 0.0
      %1210 = vmatmul.mubr.f32.gmra.mrb[0].mxu0 %v1115
      %v1211 = vpop.f32.mrb[0].mxu0
      %v1212 = vadd.f32 0.0, %v1211
      %v1213 = vpop.f32.mrb[0].mxu0
      %1214 = vmatprep.mubr.f32.mxu0 0.0
      %1215 = vmatmul.mubr.f32.gmra.mrb[0].mxu0 %v1118
      %v1216 = vpop.f32.mrb[0].mxu0
      %v1217 = vadd.f32 0.0, %v1216
      %v1218 = vpop.f32.mrb[0].mxu0
      %1219 = vmatprep.mubr.f32.mxu0 0.0
      %1220 = vmatmul.mubr.f32.gmra.mrb[0].mxu0 %v1121
      %v1221 = vpop.f32.mrb[0].mxu0
      %v1222 = vadd.f32 0.0, %v1221
      %v1223 = vpop.f32.mrb[0].mxu0
      %1224 = vmatprep.mubr.f32.mxu0 0.0
      %1225 = vmatmul.mubr.f32.gmra.mrb[0].mxu0 %v1124
      %v1226 = vpop.f32.mrb[0].mxu0
      %v1227 = vadd.f32 0.0, %v1226
      %v1228 = vpop.f32.mrb[0].mxu0
      %1229 = vmatprep.mubr.f32.mxu0 0.0
      %1230 = vmatmul.mubr.f32.gmra.mrb[0].mxu0 %v1127
      %v1231 = vpop.f32.mrb[0].mxu0
      %v1232 = vadd.f32 0.0, %v1231
      %v1233 = vpop.f32.mrb[0].mxu0
      %1234 = vmatprep.mubr.f32.mxu0 0.0
      %1235 = vmatmul.mubr.f32.gmra.mrb[0].mxu0 %v1130
      %v1236 = vpop.f32.mrb[0].mxu0
      %v1237 = vadd.f32 0.0, %v1236
      %v1238 = vpop.f32.mrb[0].mxu0
      %1239 = vdwg.mxu0
      %v1240 = vadd.f32 %v1089, %v1202
      %v1241 = vadd.f32 %v1090, %v1207
      %v1242 = vadd.f32 %v1091, %v1212
      %v1243 = vadd.f32 %v1092, %v1217
      %v1244 = vadd.f32 %v1093, %v1222
      %v1245 = vadd.f32 %v1094, %v1227
      %v1246 = vadd.f32 %v1095, %v1232
      %v1247 = vadd.f32 %v1096, %v1237
      %s1248 = scalar_lea.vmem %s199, 160
      %v1249 = vld [vmem:[%s1248] sm:$0xff]
      %v1250 = vld [vmem:[%s1248 + $0x10] sm:$0xff]
      %v1251 = vld [vmem:[%s1248 + $0x20] sm:$0xff]
      %v1252 = vld [vmem:[%s1248 + $0x30] sm:$0xff]
      %v1253 = vld [vmem:[%s1248 + $0x40] sm:$0xff]
      %v1254 = vld [vmem:[%s1248 + $0x50] sm:$0xff]
      %v1255 = vld [vmem:[%s1248 + $0x60] sm:$0xff]
      %v1256 = vld [vmem:[%s1248 + $0x70] sm:$0xff]
      %s1257 = scalar_lea.vmem %s1, 28
      %v1258 = vld [vmem:[%s1257] sm:$0xf]
      %v1260 = vsel %vm229, %v1249, 0
      %v1263 = vsel %vm229, %v1250, 0
      %v1266 = vsel %vm229, %v1251, 0
      %v1269 = vsel %vm229, %v1252, 0
      %v1272 = vsel %vm229, %v1253, 0
      %v1275 = vsel %vm229, %v1254, 0
      %v1278 = vsel %vm229, %v1255, 0
      %v1281 = vsel %vm229, %v1256, 0
      %v1284 = vsel %vm254, %v1258, 0
      %1286 = vmatprep.subr.mxu0 0.0
      %1287 = vmatpush1.msra.mxu0 %v1284
      %1288 = vmatprep.subr.mxu0 0.0
      %1289 = vmatpush1.msra.mxu0 0.0
      %1290 = vmatprep.subr.mxu0 0.0
      %1291 = vmatpush1.msra.mxu0 0.0
      %1292 = vmatprep.subr.mxu0 0.0
      %1293 = vmatpush1.msra.mxu0 0.0
      %1294 = vmatprep.subr.mxu0 0.0
      %1295 = vmatpush1.msra.mxu0 0.0
      %1296 = vmatprep.subr.mxu0 0.0
      %1297 = vmatpush1.msra.mxu0 0.0
      %1298 = vmatprep.subr.mxu0 0.0
      %1299 = vmatpush1.msra.mxu0 0.0
      %1300 = vmatprep.subr.mxu0 0.0
      %1301 = vmatpush1.msra.mxu0 0.0
      %1302 = vmatprep.subr.mxu0 0.0
      %1303 = vmatpush1.msra.mxu0 0.0
      %1304 = vmatprep.subr.mxu0 0.0
      %1305 = vmatpush1.msra.mxu0 0.0
      %1306 = vmatprep.subr.mxu0 0.0
      %1307 = vmatpush1.msra.mxu0 0.0
      %1308 = vmatprep.subr.mxu0 0.0
      %1309 = vmatpush1.msra.mxu0 0.0
      %1310 = vmatprep.subr.mxu0 0.0
      %1311 = vmatpush1.msra.mxu0 0.0
      %1312 = vmatprep.subr.mxu0 0.0
      %1313 = vmatpush1.msra.mxu0 0.0
      %1314 = vmatprep.subr.mxu0 0.0
      %1315 = vmatpush1.msra.mxu0 0.0
      %1316 = vmatprep.subr.mxu0 0.0
      %1317 = vmatpush1.msra.mxu0 0.0
      %1318 = vmatprep.subr.mxu0 0.0
      %1319 = vmatpush1.msra.mxu0 0.0
      %1320 = vmatprep.subr.mxu0 0.0
      %1321 = vmatpush1.msra.mxu0 0.0
      %1322 = vmatprep.subr.mxu0 0.0
      %1323 = vmatpush1.msra.mxu0 0.0
      %1324 = vmatprep.subr.mxu0 0.0
      %1325 = vmatpush1.msra.mxu0 0.0
      %1326 = vmatprep.subr.mxu0 0.0
      %1327 = vmatpush1.msra.mxu0 0.0
      %1328 = vmatprep.subr.mxu0 0.0
      %1329 = vmatpush1.msra.mxu0 0.0
      %1330 = vmatprep.subr.mxu0 0.0
      %1331 = vmatpush1.msra.mxu0 0.0
      %1332 = vmatprep.subr.mxu0 0.0
      %1333 = vmatpush1.msra.mxu0 0.0
      %1334 = vmatprep.subr.mxu0 0.0
      %1335 = vmatpush1.msra.mxu0 0.0
      %1336 = vmatprep.subr.mxu0 0.0
      %1337 = vmatpush1.msra.mxu0 0.0
      %1338 = vmatprep.subr.mxu0 0.0
      %1339 = vmatpush1.msra.mxu0 0.0
      %1340 = vmatprep.subr.mxu0 0.0
      %1341 = vmatpush1.msra.mxu0 0.0
      %1342 = vmatprep.subr.mxu0 0.0
      %1343 = vmatpush1.msra.mxu0 0.0
      %1344 = vmatprep.subr.mxu0 0.0
      %1345 = vmatpush1.msra.mxu0 0.0
      %1346 = vmatprep.subr.mxu0 0.0
      %1347 = vmatpush1.msra.mxu0 0.0
      %1348 = vmatprep.subr.mxu0 0.0
      %1349 = vmatpush1.msra.mxu0 0.0
      %1350 = vmatprep.mubr.f32.mxu0 0.0
      %1351 = vmatmul.mubr.f32.gmra.mrb[0].mxu0 %v1260
      %v1352 = vpop.f32.mrb[0].mxu0
      %v1353 = vadd.f32 0.0, %v1352
      %v1354 = vpop.f32.mrb[0].mxu0
      %1355 = vmatprep.mubr.f32.mxu0 0.0
      %1356 = vmatmul.mubr.f32.gmra.mrb[0].mxu0 %v1263
      %v1357 = vpop.f32.mrb[0].mxu0
      %v1358 = vadd.f32 0.0, %v1357
      %v1359 = vpop.f32.mrb[0].mxu0
      %1360 = vmatprep.mubr.f32.mxu0 0.0
      %1361 = vmatmul.mubr.f32.gmra.mrb[0].mxu0 %v1266
      %v1362 = vpop.f32.mrb[0].mxu0
      %v1363 = vadd.f32 0.0, %v1362
      %v1364 = vpop.f32.mrb[0].mxu0
      %1365 = vmatprep.mubr.f32.mxu0 0.0
      %1366 = vmatmul.mubr.f32.gmra.mrb[0].mxu0 %v1269
      %v1367 = vpop.f32.mrb[0].mxu0
      %v1368 = vadd.f32 0.0, %v1367
      %v1369 = vpop.f32.mrb[0].mxu0
      %1370 = vmatprep.mubr.f32.mxu0 0.0
      %1371 = vmatmul.mubr.f32.gmra.mrb[0].mxu0 %v1272
      %v1372 = vpop.f32.mrb[0].mxu0
      %v1373 = vadd.f32 0.0, %v1372
      %v1374 = vpop.f32.mrb[0].mxu0
      %1375 = vmatprep.mubr.f32.mxu0 0.0
      %1376 = vmatmul.mubr.f32.gmra.mrb[0].mxu0 %v1275
      %v1377 = vpop.f32.mrb[0].mxu0
      %v1378 = vadd.f32 0.0, %v1377
      %v1379 = vpop.f32.mrb[0].mxu0
      %1380 = vmatprep.mubr.f32.mxu0 0.0
      %1381 = vmatmul.mubr.f32.gmra.mrb[0].mxu0 %v1278
      %v1382 = vpop.f32.mrb[0].mxu0
      %v1383 = vadd.f32 0.0, %v1382
      %v1384 = vpop.f32.mrb[0].mxu0
      %1385 = vmatprep.mubr.f32.mxu0 0.0
      %1386 = vmatmul.mubr.f32.gmra.mrb[0].mxu0 %v1281
      %v1387 = vpop.f32.mrb[0].mxu0
      %v1388 = vadd.f32 0.0, %v1387
      %v1389 = vpop.f32.mrb[0].mxu0
      %1390 = vdwg.mxu0
      %v1391 = vadd.f32 %v1240, %v1353
      %v1392 = vadd.f32 %v1241, %v1358
      %v1393 = vadd.f32 %v1242, %v1363
      %v1394 = vadd.f32 %v1243, %v1368
      %v1395 = vadd.f32 %v1244, %v1373
      %v1396 = vadd.f32 %v1245, %v1378
      %v1397 = vadd.f32 %v1246, %v1383
      %v1398 = vadd.f32 %v1247, %v1388
      %v1399 = vld [vmem:[%s1097 + $0x1] sm:$0xff]
      %v1400 = vld [vmem:[%s1097 + $0x11] sm:$0xff]
      %v1401 = vld [vmem:[%s1097 + $0x21] sm:$0xff]
      %v1402 = vld [vmem:[%s1097 + $0x31] sm:$0xff]
      %v1403 = vld [vmem:[%s1097 + $0x41] sm:$0xff]
      %v1404 = vld [vmem:[%s1097 + $0x51] sm:$0xff]
      %v1405 = vld [vmem:[%s1097 + $0x61] sm:$0xff]
      %v1406 = vld [vmem:[%s1097 + $0x71] sm:$0xff]
      %s1407 = scalar_lea.vmem %s1, 32
      %v1408 = vld [vmem:[%s1407] sm:$0xf]
      %v1410 = vsel %vm229, %v1399, 0
      %v1413 = vsel %vm229, %v1400, 0
      %v1416 = vsel %vm229, %v1401, 0
      %v1419 = vsel %vm229, %v1402, 0
      %v1422 = vsel %vm229, %v1403, 0
      %v1425 = vsel %vm229, %v1404, 0
      %v1428 = vsel %vm229, %v1405, 0
      %v1431 = vsel %vm229, %v1406, 0
      %v1434 = vsel %vm254, %v1408, 0
      %1436 = vmatprep.subr.mxu0 0.0
      %1437 = vmatpush1.msra.mxu0 %v1434
      %1438 = vmatprep.subr.mxu0 0.0
      %1439 = vmatpush1.msra.mxu0 0.0
      %1440 = vmatprep.subr.mxu0 0.0
      %1441 = vmatpush1.msra.mxu0 0.0
      %1442 = vmatprep.subr.mxu0 0.0
      %1443 = vmatpush1.msra.mxu0 0.0
      %1444 = vmatprep.subr.mxu0 0.0
      %1445 = vmatpush1.msra.mxu0 0.0
      %1446 = vmatprep.subr.mxu0 0.0
      %1447 = vmatpush1.msra.mxu0 0.0
      %1448 = vmatprep.subr.mxu0 0.0
      %1449 = vmatpush1.msra.mxu0 0.0
      %1450 = vmatprep.subr.mxu0 0.0
      %1451 = vmatpush1.msra.mxu0 0.0
      %1452 = vmatprep.subr.mxu0 0.0
      %1453 = vmatpush1.msra.mxu0 0.0
      %1454 = vmatprep.subr.mxu0 0.0
      %1455 = vmatpush1.msra.mxu0 0.0
      %1456 = vmatprep.subr.mxu0 0.0
      %1457 = vmatpush1.msra.mxu0 0.0
      %1458 = vmatprep.subr.mxu0 0.0
      %1459 = vmatpush1.msra.mxu0 0.0
      %1460 = vmatprep.subr.mxu0 0.0
      %1461 = vmatpush1.msra.mxu0 0.0
      %1462 = vmatprep.subr.mxu0 0.0
      %1463 = vmatpush1.msra.mxu0 0.0
      %1464 = vmatprep.subr.mxu0 0.0
      %1465 = vmatpush1.msra.mxu0 0.0
      %1466 = vmatprep.subr.mxu0 0.0
      %1467 = vmatpush1.msra.mxu0 0.0
      %1468 = vmatprep.subr.mxu0 0.0
      %1469 = vmatpush1.msra.mxu0 0.0
      %1470 = vmatprep.subr.mxu0 0.0
      %1471 = vmatpush1.msra.mxu0 0.0
      %1472 = vmatprep.subr.mxu0 0.0
      %1473 = vmatpush1.msra.mxu0 0.0
      %1474 = vmatprep.subr.mxu0 0.0
      %1475 = vmatpush1.msra.mxu0 0.0
      %1476 = vmatprep.subr.mxu0 0.0
      %1477 = vmatpush1.msra.mxu0 0.0
      %1478 = vmatprep.subr.mxu0 0.0
      %1479 = vmatpush1.msra.mxu0 0.0
      %1480 = vmatprep.subr.mxu0 0.0
      %1481 = vmatpush1.msra.mxu0 0.0
      %1482 = vmatprep.subr.mxu0 0.0
      %1483 = vmatpush1.msra.mxu0 0.0
      %1484 = vmatprep.subr.mxu0 0.0
      %1485 = vmatpush1.msra.mxu0 0.0
      %1486 = vmatprep.subr.mxu0 0.0
      %1487 = vmatpush1.msra.mxu0 0.0
      %1488 = vmatprep.subr.mxu0 0.0
      %1489 = vmatpush1.msra.mxu0 0.0
      %1490 = vmatprep.subr.mxu0 0.0
      %1491 = vmatpush1.msra.mxu0 0.0
      %1492 = vmatprep.subr.mxu0 0.0
      %1493 = vmatpush1.msra.mxu0 0.0
      %1494 = vmatprep.subr.mxu0 0.0
      %1495 = vmatpush1.msra.mxu0 0.0
      %1496 = vmatprep.subr.mxu0 0.0
      %1497 = vmatpush1.msra.mxu0 0.0
      %1498 = vmatprep.subr.mxu0 0.0
      %1499 = vmatpush1.msra.mxu0 0.0
      %1500 = vmatprep.mubr.f32.mxu0 0.0
      %1501 = vmatmul.mubr.f32.gmra.mrb[0].mxu0 %v1410
      %v1502 = vpop.f32.mrb[0].mxu0
      %v1503 = vadd.f32 0.0, %v1502
      %v1504 = vpop.f32.mrb[0].mxu0
      %1505 = vmatprep.mubr.f32.mxu0 0.0
      %1506 = vmatmul.mubr.f32.gmra.mrb[0].mxu0 %v1413
      %v1507 = vpop.f32.mrb[0].mxu0
      %v1508 = vadd.f32 0.0, %v1507
      %v1509 = vpop.f32.mrb[0].mxu0
      %1510 = vmatprep.mubr.f32.mxu0 0.0
      %1511 = vmatmul.mubr.f32.gmra.mrb[0].mxu0 %v1416
      %v1512 = vpop.f32.mrb[0].mxu0
      %v1513 = vadd.f32 0.0, %v1512
      %v1514 = vpop.f32.mrb[0].mxu0
      %1515 = vmatprep.mubr.f32.mxu0 0.0
      %1516 = vmatmul.mubr.f32.gmra.mrb[0].mxu0 %v1419
      %v1517 = vpop.f32.mrb[0].mxu0
      %v1518 = vadd.f32 0.0, %v1517
      %v1519 = vpop.f32.mrb[0].mxu0
      %1520 = vmatprep.mubr.f32.mxu0 0.0
      %1521 = vmatmul.mubr.f32.gmra.mrb[0].mxu0 %v1422
      %v1522 = vpop.f32.mrb[0].mxu0
      %v1523 = vadd.f32 0.0, %v1522
      %v1524 = vpop.f32.mrb[0].mxu0
      %1525 = vmatprep.mubr.f32.mxu0 0.0
      %1526 = vmatmul.mubr.f32.gmra.mrb[0].mxu0 %v1425
      %v1527 = vpop.f32.mrb[0].mxu0
      %v1528 = vadd.f32 0.0, %v1527
      %v1529 = vpop.f32.mrb[0].mxu0
      %1530 = vmatprep.mubr.f32.mxu0 0.0
      %1531 = vmatmul.mubr.f32.gmra.mrb[0].mxu0 %v1428
      %v1532 = vpop.f32.mrb[0].mxu0
      %v1533 = vadd.f32 0.0, %v1532
      %v1534 = vpop.f32.mrb[0].mxu0
      %1535 = vmatprep.mubr.f32.mxu0 0.0
      %1536 = vmatmul.mubr.f32.gmra.mrb[0].mxu0 %v1431
      %v1537 = vpop.f32.mrb[0].mxu0
      %v1538 = vadd.f32 0.0, %v1537
      %v1539 = vpop.f32.mrb[0].mxu0
      %1540 = vdwg.mxu0
      %v1541 = vadd.f32 %v1391, %v1503
      %v1542 = vadd.f32 %v1392, %v1508
      %v1543 = vadd.f32 %v1393, %v1513
      %v1544 = vadd.f32 %v1394, %v1518
      %v1545 = vadd.f32 %v1395, %v1523
      %v1546 = vadd.f32 %v1396, %v1528
      %v1547 = vadd.f32 %v1397, %v1533
      %v1548 = vadd.f32 %v1398, %v1538
      %v1549 = vld [vmem:[%s2] sm:$0x1]
      %v1551 = vlaneseq
      %v1552 = vshrl.u32 %v1551, 7
      %v1553 = vsub.s32 0, %v1552
      %v1554 = vrot.slane %v1549, %v1553
      %v1556 = vadd.f32 %v1541, %v1554
      %v1557 = vadd.f32 %v1542, %v1554
      %v1558 = vadd.f32 %v1543, %v1554
      %v1559 = vadd.f32 %v1544, %v1554
      %v1560 = vadd.f32 %v1545, %v1554
      %v1561 = vadd.f32 %v1546, %v1554
      %v1562 = vadd.f32 %v1547, %v1554
      %v1563 = vadd.f32 %v1548, %v1554
      %1564 = vst.msk [vmem:[%s204] sm:$0xff] %vm229, %v1556
      %1565 = vst.msk [vmem:[%s204 + $0x8] sm:$0xff] %vm229, %v1557
      %1566 = vst.msk [vmem:[%s204 + $0x10] sm:$0xff] %vm229, %v1558
      %1567 = vst.msk [vmem:[%s204 + $0x18] sm:$0xff] %vm229, %v1559
      %1568 = vst.msk [vmem:[%s204 + $0x20] sm:$0xff] %vm229, %v1560
      %1569 = vst.msk [vmem:[%s204 + $0x28] sm:$0xff] %vm229, %v1561
      %1570 = vst.msk [vmem:[%s204 + $0x30] sm:$0xff] %vm229, %v1562
      %1571 = vst.msk [vmem:[%s204 + $0x38] sm:$0xff] %vm229, %v1563
      %v1572 = vsel %vm229, %v1556, 0.0
      %v1573 = vsel %vm229, %v1557, 0.0
      %v1574 = vadd.f32 %v1572, %v1573
      %v1575 = vsel %vm229, %v1558, 0.0
      %v1576 = vadd.f32 %v1574, %v1575
      %v1577 = vsel %vm229, %v1559, 0.0
      %v1578 = vadd.f32 %v1576, %v1577
      %v1579 = vsel %vm229, %v1560, 0.0
      %v1580 = vadd.f32 %v1578, %v1579
      %v1581 = vsel %vm229, %v1561, 0.0
      %v1582 = vadd.f32 %v1580, %v1581
      %v1583 = vsel %vm229, %v1562, 0.0
      %v1584 = vadd.f32 %v1582, %v1583
      %v1585 = vsel %vm229, %v1563, 0.0
      %v1586 = vadd.f32 %v1584, %v1585
      %v1587 = vrot.slane %v1586, 4
      %v1588 = vadd.f32 %v1586, %v1587
      %v1589 = vrot.slane %v1588, 2
      %v1590 = vadd.f32 %v1588, %v1589
      %v1591 = vrot.slane %v1590, 1
      %v1592 = vadd.f32 %v1590, %v1591
      %vm1593 = vcmask 24576
      %1594 = vst.msk [vmem:[%s208] sm:$0x1] %vm1593, %v1592
      %v1595 = vmul.f32 %v1556, %v1556
      %v1596 = vmul.f32 %v1557, %v1557
      %v1597 = vmul.f32 %v1558, %v1558
      %v1598 = vmul.f32 %v1559, %v1559
      %v1599 = vmul.f32 %v1560, %v1560
      %v1600 = vmul.f32 %v1561, %v1561
      %v1601 = vmul.f32 %v1562, %v1562
      %v1602 = vmul.f32 %v1563, %v1563
      %v1603 = vsel %vm229, %v1595, 0.0
      %v1604 = vsel %vm229, %v1596, 0.0
      %v1605 = vadd.f32 %v1603, %v1604
      %v1606 = vsel %vm229, %v1597, 0.0
      %v1607 = vadd.f32 %v1605, %v1606
      %v1608 = vsel %vm229, %v1598, 0.0
      %v1609 = vadd.f32 %v1607, %v1608
      %v1610 = vsel %vm229, %v1599, 0.0
      %v1611 = vadd.f32 %v1609, %v1610
      %v1612 = vsel %vm229, %v1600, 0.0
      %v1613 = vadd.f32 %v1611, %v1612
      %v1614 = vsel %vm229, %v1601, 0.0
      %v1615 = vadd.f32 %v1613, %v1614
      %v1616 = vsel %vm229, %v1602, 0.0
      %v1617 = vadd.f32 %v1615, %v1616
      %v1618 = vrot.slane %v1617, 4
      %v1619 = vadd.f32 %v1617, %v1618
      %v1620 = vrot.slane %v1619, 2
      %v1621 = vadd.f32 %v1619, %v1620
      %v1622 = vrot.slane %v1621, 1
      %v1623 = vadd.f32 %v1621, %v1622
      %1624 = vst.msk [vmem:[%s208 + $0x1] sm:$0x1] %vm1593, %v1623
      %p1625 = scmp.lt.s32.totalorder %s16, 1
      %s1626 = scalar_select %p1625, %s16, 1
      %s1627 = smul.addr %s1626, 8
      %s1628 = smul.addr %s1627, 8
      %s1629 = scalar_lea.vmem %s3, %s1628
      %p1630 = scmp.lt.s32.totalorder %s16, 1
      %s1631 = scalar_select %p1630, %s16, 1
      %s1632 = smul.addr %s1631, 2
      %s1633 = scalar_lea.vmem %s4, %s1632
      // Predicated region
      $region33: #{resblock_forward.6} parent=31 // pred_check
        %p1634 = pneg %p102
      $region34: #{resblock_forward.6} parent=31 // pred_check_branch
        %1636 = sbr.rel (%p1634) target = $region36
      $region35: #{resblock_forward.6} parent=31 // pred_region
        _
      $region36: #{resblock_forward.6} parent=31 // pred_fallthru
        _
      // Predicated region
      $region37: #{resblock_forward.6} parent=31 // pred_check
        %p1637 = pneg %p128
      $region38: #{resblock_forward.6} parent=31 // pred_check_branch
        %1639 = sbr.rel (%p1637) target = $region40
      $region39: #{resblock_forward.6} parent=31 // pred_region
        _
      $region40: #{resblock_forward.6} parent=31 // pred_fallthru
        _
    $region32: #{resblock_forward.6} parent=5 // pred_fallthru
      _
    %p1640 = scmp.le.s32.totalorder 2, %s11
    // Predicated region
    $region41: #{resblock_forward.6} parent=5 // pred_check
      %p1641 = pneg %p1640
    $region42: #{resblock_forward.6} parent=5 // pred_check_branch
      %1643 = sbr.rel (%p1641) target = $region44
    $region43: #{resblock_forward.6} parent=5 // pred_region
      %s1644 = ssub.s32 %s11, 2
      // Predicated region
      $region45: #{resblock_forward.6} parent=43 // pred_check
        %p1645 = pneg %p108
      $region46: #{resblock_forward.6} parent=43 // pred_check_branch
        %1647 = sbr.rel (%p1645) target = $region48
      $region47: #{resblock_forward.6} parent=43 // pred_region
        %p1648 = scmp.lt.s32.totalorder %s17, 1
        %s1649 = scalar_select %p1648, %s17, 1
        %s1650 = smul.addr %s1649, 8
        %s1651 = smul.addr %s1650, 8
        %s1652 = scalar_lea.vmem %s3, %s1651
      $region48: #{resblock_forward.6} parent=43 // pred_fallthru
        _
      // Predicated region
      $region49: #{resblock_forward.6} parent=43 // pred_check
        %p1653 = pneg %p134
      $region50: #{resblock_forward.6} parent=43 // pred_check_branch
        %1655 = sbr.rel (%p1653) target = $region52
      $region51: #{resblock_forward.6} parent=43 // pred_region
        %p1656 = scmp.lt.s32.totalorder %s17, 1
        %s1657 = scalar_select %p1656, %s17, 1
        %s1658 = smul.addr %s1657, 2
        %s1659 = scalar_lea.vmem %s4, %s1658
      $region52: #{resblock_forward.6} parent=43 // pred_fallthru
        _
    $region44: #{resblock_forward.6} parent=5 // pred_fallthru
      _
  $region6: #{resblock_forward.6} parent=0 // loop_footer
    %s15 = sadd.s32 1, %s11
  $region7: #{resblock_forward.6} parent=0 // loop_footer_branch
    %10 = sbr.rel target = $region3
  $region8: #{resblock_forward.6} parent=0 // loop_exit
    _

// kernel: resblock_forward.9
$region0: #{resblock_forward.9}
  #allocation0 [shape = 'u32[]', space=smem, size = 0x4, offset = 0x4, fixed_abs, tag = 'smem constant byte address 0x4 - core index']
  #allocation1 [shape = 'u32[144,128]{1,0:T(1,128)}', space=vmem, size = 0x12000, scoped, tag = 'internal scratch']
  %s0 = inlined_call_operand.vmem [shape: f32[128,16], index: 0, kind: input, shape index: {}]
  %s1 = inlined_call_operand.vmem [shape: f32[1,16], index: 1, kind: input, shape index: {}]
  %s2 = inlined_call_operand.vmem [shape: f32[1,16], index: 2, kind: input, shape index: {}]
  %s3 = inlined_call_operand.vmem [shape: f32[128,16], index: 3, kind: input, shape index: {}]
  %s4 = inlined_call_operand.vmem [shape: f32[1,16], index: 4, kind: input, shape index: {}]
  %s5 = inlined_call_operand.vmem [shape: f32[1,16], index: 5, kind: input, shape index: {}]
  %s6 = inlined_call_operand.hbm [shape: f32[128,16], index: 6, kind: output, shape index: {}]
  %s7 = sld [smem:[#allocation0]]
  $region34: #{resblock_forward.9} parent=0
    _
  %s9 = ssub.s32 1, %s7
  %s10 = scalar_select 0, %s9, %s7
  $region1: #{resblock_forward.9} parent=0
    #allocation2 [shape = 'u8[65536]{0}', space=vmem, size = 0x10000, scoped, tag = 'output window, operand 0, single buffered']
    #allocation3 [shape = 's32[1]{0}', space=sflag, size = 0x4, scoped, tag = 'scoped memory for resblock_forward.9']
    %11 = vsyncpa [#allocation3], 0
    // Predicated region
    $region2: #{resblock_forward.9} parent=1 // pred_check
      _
    $region3: #{resblock_forward.9} parent=1 // pred_check_branch
      %13 = sbr.rel (0) target = $region5
    $region4: #{resblock_forward.9} parent=1 // pred_region
      _
    $region5: #{resblock_forward.9} parent=1 // pred_fallthru
      _
    // Predicated region
    $region6: #{resblock_forward.9} parent=1 // pred_check
      _
    $region7: #{resblock_forward.9} parent=1 // pred_check_branch
      %15 = sbr.rel (0) target = $region9
    $region8: #{resblock_forward.9} parent=1 // pred_region
      _
    $region9: #{resblock_forward.9} parent=1 // pred_fallthru
      _
    // Predicated region
    $region10: #{resblock_forward.9} parent=1 // pred_check
      _
    $region11: #{resblock_forward.9} parent=1 // pred_check_branch
      %17 = sbr.rel (0) target = $region13
    $region12: #{resblock_forward.9} parent=1 // pred_region
      _
    $region13: #{resblock_forward.9} parent=1 // pred_fallthru
      _
    // Predicated region
    $region14: #{resblock_forward.9} parent=1 // pred_check
      _
    $region15: #{resblock_forward.9} parent=1 // pred_check_branch
      %19 = sbr.rel (0) target = $region17
    $region16: #{resblock_forward.9} parent=1 // pred_region
      _
    $region17: #{resblock_forward.9} parent=1 // pred_fallthru
      _
    // Predicated region
    $region18: #{resblock_forward.9} parent=1 // pred_check
      _
    $region19: #{resblock_forward.9} parent=1 // pred_check_branch
      %21 = sbr.rel (0) target = $region21
    $region20: #{resblock_forward.9} parent=1 // pred_region
      _
    $region21: #{resblock_forward.9} parent=1 // pred_fallthru
      _
    // Predicated region
    $region22: #{resblock_forward.9} parent=1 // pred_check
      _
    $region23: #{resblock_forward.9} parent=1 // pred_check_branch
      %23 = sbr.rel (0) target = $region25
    $region24: #{resblock_forward.9} parent=1 // pred_region
      _
    $region25: #{resblock_forward.9} parent=1 // pred_fallthru
      _
    %v24 = vld [vmem:[%s0] sm:$0xff]
    %v25 = vld [vmem:[%s0 + $0x8] sm:$0xff]
    %v26 = vld [vmem:[%s0 + $0x10] sm:$0xff]
    %v27 = vld [vmem:[%s0 + $0x18] sm:$0xff]
    %v28 = vld [vmem:[%s0 + $0x20] sm:$0xff]
    %v29 = vld [vmem:[%s0 + $0x28] sm:$0xff]
    %v30 = vld [vmem:[%s0 + $0x30] sm:$0xff]
    %v31 = vld [vmem:[%s0 + $0x38] sm:$0xff]
    %v32 = vld [vmem:[%s0 + $0x40] sm:$0xff]
    %v33 = vld [vmem:[%s0 + $0x48] sm:$0xff]
    %v34 = vld [vmem:[%s0 + $0x50] sm:$0xff]
    %v35 = vld [vmem:[%s0 + $0x58] sm:$0xff]
    %v36 = vld [vmem:[%s0 + $0x60] sm:$0xff]
    %v37 = vld [vmem:[%s0 + $0x68] sm:$0xff]
    %v38 = vld [vmem:[%s0 + $0x70] sm:$0xff]
    %v39 = vld [vmem:[%s0 + $0x78] sm:$0xff]
    %v40 = vld [vmem:[%s1] sm:$0x1]
    %v42 = vlaneseq
    %v43 = vshrl.u32 %v42, 7
    %v44 = vsub.s32 0, %v43
    %v45 = vrot.slane %v40, %v44
    %v47 = vmul.f32 %v24, %v45
    %v48 = vmul.f32 %v25, %v45
    %v49 = vmul.f32 %v26, %v45
    %v50 = vmul.f32 %v27, %v45
    %v51 = vmul.f32 %v28, %v45
    %v52 = vmul.f32 %v29, %v45
    %v53 = vmul.f32 %v30, %v45
    %v54 = vmul.f32 %v31, %v45
    %v55 = vmul.f32 %v32, %v45
    %v56 = vmul.f32 %v33, %v45
    %v57 = vmul.f32 %v34, %v45
    %v58 = vmul.f32 %v35, %v45
    %v59 = vmul.f32 %v36, %v45
    %v60 = vmul.f32 %v37, %v45
    %v61 = vmul.f32 %v38, %v45
    %v62 = vmul.f32 %v39, %v45
    %v63 = vld [vmem:[%s2] sm:$0x1]
    %v65 = vlaneseq
    %v66 = vshrl.u32 %v65, 7
    %v67 = vsub.s32 0, %v66
    %v68 = vrot.slane %v63, %v67
    %v70 = vadd.f32 %v47, %v68
    %v71 = vadd.f32 %v48, %v68
    %v72 = vadd.f32 %v49, %v68
    %v73 = vadd.f32 %v50, %v68
    %v74 = vadd.f32 %v51, %v68
    %v75 = vadd.f32 %v52, %v68
    %v76 = vadd.f32 %v53, %v68
    %v77 = vadd.f32 %v54, %v68
    %v78 = vadd.f32 %v55, %v68
    %v79 = vadd.f32 %v56, %v68
    %v80 = vadd.f32 %v57, %v68
    %v81 = vadd.f32 %v58, %v68
    %v82 = vadd.f32 %v59, %v68
    %v83 = vadd.f32 %v60, %v68
    %v84 = vadd.f32 %v61, %v68
    %v85 = vadd.f32 %v62, %v68
    %v86 = vld [vmem:[%s3] sm:$0xff]
    %v87 = vld [vmem:[%s3 + $0x8] sm:$0xff]
    %v88 = vld [vmem:[%s3 + $0x10] sm:$0xff]
    %v89 = vld [vmem:[%s3 + $0x18] sm:$0xff]
    %v90 = vld [vmem:[%s3 + $0x20] sm:$0xff]
    %v91 = vld [vmem:[%s3 + $0x28] sm:$0xff]
    %v92 = vld [vmem:[%s3 + $0x30] sm:$0xff]
    %v93 = vld [vmem:[%s3 + $0x38] sm:$0xff]
    %v94 = vld [vmem:[%s3 + $0x40] sm:$0xff]
    %v95 = vld [vmem:[%s3 + $0x48] sm:$0xff]
    %v96 = vld [vmem:[%s3 + $0x50] sm:$0xff]
    %v97 = vld [vmem:[%s3 + $0x58] sm:$0xff]
    %v98 = vld [vmem:[%s3 + $0x60] sm:$0xff]
    %v99 = vld [vmem:[%s3 + $0x68] sm:$0xff]
    %v100 = vld [vmem:[%s3 + $0x70] sm:$0xff]
    %v101 = vld [vmem:[%s3 + $0x78] sm:$0xff]
    %v102 = vld [vmem:[%s4] sm:$0x1]
    %v104 = vlaneseq
    %v105 = vshrl.u32 %v104, 7
    %v106 = vsub.s32 0, %v105
    %v107 = vrot.slane %v102, %v106
    %v109 = vmul.f32 %v86, %v107
    %v110 = vmul.f32 %v87, %v107
    %v111 = vmul.f32 %v88, %v107
    %v112 = vmul.f32 %v89, %v107
    %v113 = vmul.f32 %v90, %v107
    %v114 = vmul.f32 %v91, %v107
    %v115 = vmul.f32 %v92, %v107
    %v116 = vmul.f32 %v93, %v107
    %v117 = vmul.f32 %v94, %v107
    %v118 = vmul.f32 %v95, %v107
    %v119 = vmul.f32 %v96, %v107
    %v120 = vmul.f32 %v97, %v107
    %v121 = vmul.f32 %v98, %v107
    %v122 = vmul.f32 %v99, %v107
    %v123 = vmul.f32 %v100, %v107
    %v124 = vmul.f32 %v101, %v107
    %v125 = vadd.f32 %v70, %v109
    %v126 = vadd.f32 %v71, %v110
    %v127 = vadd.f32 %v72, %v111
    %v128 = vadd.f32 %v73, %v112
    %v129 = vadd.f32 %v74, %v113
    %v130 = vadd.f32 %v75, %v114
    %v131 = vadd.f32 %v76, %v115
    %v132 = vadd.f32 %v77, %v116
    %v133 = vadd.f32 %v78, %v117
    %v134 = vadd.f32 %v79, %v118
    %v135 = vadd.f32 %v80, %v119
    %v136 = vadd.f32 %v81, %v120
    %v137 = vadd.f32 %v82, %v121
    %v138 = vadd.f32 %v83, %v122
    %v139 = vadd.f32 %v84, %v123
    %v140 = vadd.f32 %v85, %v124
    %v141 = vld [vmem:[%s5] sm:$0x1]
    %v143 = vlaneseq
    %v144 = vshrl.u32 %v143, 7
    %v145 = vsub.s32 0, %v144
    %v146 = vrot.slane %v141, %v145
    %v148 = vadd.f32 %v125, %v146
    %v149 = vadd.f32 %v126, %v146
    %v150 = vadd.f32 %v127, %v146
    %v151 = vadd.f32 %v128, %v146
    %v152 = vadd.f32 %v129, %v146
    %v153 = vadd.f32 %v130, %v146
    %v154 = vadd.f32 %v131, %v146
    %v155 = vadd.f32 %v132, %v146
    %v156 = vadd.f32 %v133, %v146
    %v157 = vadd.f32 %v134, %v146
    %v158 = vadd.f32 %v135, %v146
    %v159 = vadd.f32 %v136, %v146
    %v160 = vadd.f32 %v137, %v146
    %v161 = vadd.f32 %v138, %v146
    %v162 = vadd.f32 %v139, %v146
    %v163 = vadd.f32 %v140, %v146
    %vm164 = vcmp.ge.f32.partialorder %v148, 0.0
    %vm165 = vcmp.ge.f32.partialorder %v149, 0.0
    %vm166 = vcmp.ge.f32.partialorder %v150, 0.0
    %vm167 = vcmp.ge.f32.partialorder %v151, 0.0
    %vm168 = vcmp.ge.f32.partialorder %v152, 0.0
    %vm169 = vcmp.ge.f32.partialorder %v153, 0.0
    %vm170 = vcmp.ge.f32.partialorder %v154, 0.0
    %vm171 = vcmp.ge.f32.partialorder %v155, 0.0
    %vm172 = vcmp.ge.f32.partialorder %v156, 0.0
    %vm173 = vcmp.ge.f32.partialorder %v157, 0.0
    %vm174 = vcmp.ge.f32.partialorder %v158, 0.0
    %vm175 = vcmp.ge.f32.partialorder %v159, 0.0
    %vm176 = vcmp.ge.f32.partialorder %v160, 0.0
    %vm177 = vcmp.ge.f32.partialorder %v161, 0.0
    %vm178 = vcmp.ge.f32.partialorder %v162, 0.0
    %vm179 = vcmp.ge.f32.partialorder %v163, 0.0
    %v180 = vmul.f32 %v148, 0.01
    %v181 = vmul.f32 %v149, 0.01
    %v182 = vmul.f32 %v150, 0.01
    %v183 = vmul.f32 %v151, 0.01
    %v184 = vmul.f32 %v152, 0.01
    %v185 = vmul.f32 %v153, 0.01
    %v186 = vmul.f32 %v154, 0.01
    %v187 = vmul.f32 %v155, 0.01
    %v188 = vmul.f32 %v156, 0.01
    %v189 = vmul.f32 %v157, 0.01
    %v190 = vmul.f32 %v158, 0.01
    %v191 = vmul.f32 %v159, 0.01
    %v192 = vmul.f32 %v160, 0.01
    %v193 = vmul.f32 %v161, 0.01
    %v194 = vmul.f32 %v162, 0.01
    %v195 = vmul.f32 %v163, 0.01
    %v196 = vsel %vm164, %v148, %v180
    %v197 = vsel %vm165, %v149, %v181
    %v198 = vsel %vm166, %v150, %v182
    %v199 = vsel %vm167, %v151, %v183
    %v200 = vsel %vm168, %v152, %v184
    %v201 = vsel %vm169, %v153, %v185
    %v202 = vsel %vm170, %v154, %v186
    %v203 = vsel %vm171, %v155, %v187
    %v204 = vsel %vm172, %v156, %v188
    %v205 = vsel %vm173, %v157, %v189
    %v206 = vsel %vm174, %v158, %v190
    %v207 = vsel %vm175, %v159, %v191
    %v208 = vsel %vm176, %v160, %v192
    %v209 = vsel %vm177, %v161, %v193
    %v210 = vsel %vm178, %v162, %v194
    %v211 = vsel %vm179, %v163, %v195
    %vm212 = vcmask 130048
    %213 = vst.msk [vmem:[#allocation2] sm:$0xff] %vm212, %v196
    %214 = vst.msk [vmem:[#allocation2 + $0x8] sm:$0xff] %vm212, %v197
    %215 = vst.msk [vmem:[#allocation2 + $0x10] sm:$0xff] %vm212, %v198
    %216 = vst.msk [vmem:[#allocation2 + $0x18] sm:$0xff] %vm212, %v199
    %217 = vst.msk [vmem:[#allocation2 + $0x20] sm:$0xff] %vm212, %v200
    %218 = vst.msk [vmem:[#allocation2 + $0x28] sm:$0xff] %vm212, %v201
    %219 = vst.msk [vmem:[#allocation2 + $0x30] sm:$0xff] %vm212, %v202
    %220 = vst.msk [vmem:[#allocation2 + $0x38] sm:$0xff] %vm212, %v203
    %221 = vst.msk [vmem:[#allocation2 + $0x40] sm:$0xff] %vm212, %v204
    %222 = vst.msk [vmem:[#allocation2 + $0x48] sm:$0xff] %vm212, %v205
    %223 = vst.msk [vmem:[#allocation2 + $0x50] sm:$0xff] %vm212, %v206
    %224 = vst.msk [vmem:[#allocation2 + $0x58] sm:$0xff] %vm212, %v207
    %225 = vst.msk [vmem:[#allocation2 + $0x60] sm:$0xff] %vm212, %v208
    %226 = vst.msk [vmem:[#allocation2 + $0x68] sm:$0xff] %vm212, %v209
    %227 = vst.msk [vmem:[#allocation2 + $0x70] sm:$0xff] %vm212, %v210
    %228 = vst.msk [vmem:[#allocation2 + $0x78] sm:$0xff] %vm212, %v211
    // Predicated region
    $region26: #{resblock_forward.9} parent=1 // pred_check
      _
    $region27: #{resblock_forward.9} parent=1 // pred_check_branch
      %230 = sbr.rel (0) target = $region29
    $region28: #{resblock_forward.9} parent=1 // pred_region
      %s232 = ssub.s32 2048, 2048
      %233 = vsyncadd [#allocation3], %s232
      %s234 = sshll.u32 [#allocation2], 4
      %s235 = int_to_ptr.vmem [resolvable:$true] %s234
      %240 = dma.vmem_to_hbm [thread:$0]  %s235, 2048, %s6, [#allocation3], 128, 128, 8
    $region29: #{resblock_forward.9} parent=1 // pred_fallthru
      _
    // Predicated region
    $region30: #{resblock_forward.9} parent=1 // pred_check
      _
    $region31: #{resblock_forward.9} parent=1 // pred_check_branch
      %242 = sbr.rel (0) target = $region33
    $region32: #{resblock_forward.9} parent=1 // pred_region
      %243 = dma.done [#allocation3], 2048
    $region33: #{resblock_forward.9} parent=1 // pred_fallthru
      _
    %244 = vsyncpa [#allocation3], 1

// kernel: resblock_forward.8
$region0: #{resblock_forward.8}
  #allocation0 [shape = 'u32[]', space=smem, size = 0x4, offset = 0x4, fixed_abs, tag = 'smem constant byte address 0x4 - core index']
  #allocation1 [shape = 'u32[144,128]{1,0:T(1,128)}', space=vmem, size = 0x12000, scoped, tag = 'internal scratch']
  %s0 = inlined_call_operand.vmem [shape: f32[128,4], index: 0, kind: input, shape index: {}]
  %s1 = inlined_call_operand.vmem [shape: f32[4,16], index: 1, kind: input, shape index: {}]
  %s2 = inlined_call_operand.vmem [shape: f32[1,16], index: 2, kind: input, shape index: {}]
  %s3 = inlined_call_operand.vmem [shape: f32[1,4], index: 3, kind: input, shape index: {}]
  %s4 = inlined_call_operand.vmem [shape: f32[1,4], index: 4, kind: input, shape index: {}]
  %s5 = inlined_call_operand.vmem [shape: f32[128,16], index: 5, kind: output, shape index: {0}]
  %s6 = inlined_call_operand.vmem [shape: f32[1,2,16], index: 6, kind: output, shape index: {1}]
  %7 = xla_tuple %s5, %s6
  %s8 = sld [smem:[#allocation0]]
  $region38: #{resblock_forward.8} parent=0
    _
  %s10 = ssub.s32 1, %s8
  %s11 = scalar_select 0, %s10, %s8
  // Predicated region
  $region2: #{resblock_forward.8} parent=0 // pred_check
    _
  $region3: #{resblock_forward.8} parent=0 // pred_check_branch
    %13 = sbr.rel (0) target = $region5
  $region4: #{resblock_forward.8} parent=0 // pred_region
    _
  $region5: #{resblock_forward.8} parent=0 // pred_fallthru
    _
  // Predicated region
  $region6: #{resblock_forward.8} parent=0 // pred_check
    _
  $region7: #{resblock_forward.8} parent=0 // pred_check_branch
    %15 = sbr.rel (0) target = $region9
  $region8: #{resblock_forward.8} parent=0 // pred_region
    _
  $region9: #{resblock_forward.8} parent=0 // pred_fallthru
    _
  // Predicated region
  $region10: #{resblock_forward.8} parent=0 // pred_check
    _
  $region11: #{resblock_forward.8} parent=0 // pred_check_branch
    %17 = sbr.rel (0) target = $region13
  $region12: #{resblock_forward.8} parent=0 // pred_region
    _
  $region13: #{resblock_forward.8} parent=0 // pred_fallthru
    _
  // Predicated region
  $region14: #{resblock_forward.8} parent=0 // pred_check
    _
  $region15: #{resblock_forward.8} parent=0 // pred_check_branch
    %19 = sbr.rel (0) target = $region17
  $region16: #{resblock_forward.8} parent=0 // pred_region
    _
  $region17: #{resblock_forward.8} parent=0 // pred_fallthru
    _
  // Predicated region
  $region18: #{resblock_forward.8} parent=0 // pred_check
    _
  $region19: #{resblock_forward.8} parent=0 // pred_check_branch
    %21 = sbr.rel (0) target = $region21
  $region20: #{resblock_forward.8} parent=0 // pred_region
    _
  $region21: #{resblock_forward.8} parent=0 // pred_fallthru
    _
  %v22 = vld [vmem:[%s0] sm:$0xff]
  %v23 = vld [vmem:[%s0 + $0x8] sm:$0xff]
  %v24 = vld [vmem:[%s0 + $0x10] sm:$0xff]
  %v25 = vld [vmem:[%s0 + $0x18] sm:$0xff]
  %v26 = vld [vmem:[%s0 + $0x20] sm:$0xff]
  %v27 = vld [vmem:[%s0 + $0x28] sm:$0xff]
  %v28 = vld [vmem:[%s0 + $0x30] sm:$0xff]
  %v29 = vld [vmem:[%s0 + $0x38] sm:$0xff]
  %v30 = vld [vmem:[%s0 + $0x40] sm:$0xff]
  %v31 = vld [vmem:[%s0 + $0x48] sm:$0xff]
  %v32 = vld [vmem:[%s0 + $0x50] sm:$0xff]
  %v33 = vld [vmem:[%s0 + $0x58] sm:$0xff]
  %v34 = vld [vmem:[%s0 + $0x60] sm:$0xff]
  %v35 = vld [vmem:[%s0 + $0x68] sm:$0xff]
  %v36 = vld [vmem:[%s0 + $0x70] sm:$0xff]
  %v37 = vld [vmem:[%s0 + $0x78] sm:$0xff]
  %v38 = vld [vmem:[%s3] sm:$0x1]
  %v40 = vlaneseq
  %v41 = vshrl.u32 %v40, 7
  %v42 = vsub.s32 0, %v41
  %v43 = vrot.slane %v38, %v42
  %v45 = vmul.f32 %v22, %v43
  %v46 = vmul.f32 %v23, %v43
  %v47 = vmul.f32 %v24, %v43
  %v48 = vmul.f32 %v25, %v43
  %v49 = vmul.f32 %v26, %v43
  %v50 = vmul.f32 %v27, %v43
  %v51 = vmul.f32 %v28, %v43
  %v52 = vmul.f32 %v29, %v43
  %v53 = vmul.f32 %v30, %v43
  %v54 = vmul.f32 %v31, %v43
  %v55 = vmul.f32 %v32, %v43
  %v56 = vmul.f32 %v33, %v43
  %v57 = vmul.f32 %v34, %v43
  %v58 = vmul.f32 %v35, %v43
  %v59 = vmul.f32 %v36, %v43
  %v60 = vmul.f32 %v37, %v43
  %v61 = vld [vmem:[%s4] sm:$0x1]
  %v63 = vlaneseq
  %v64 = vshrl.u32 %v63, 7
  %v65 = vsub.s32 0, %v64
  %v66 = vrot.slane %v61, %v65
  %v68 = vadd.f32 %v45, %v66
  %v69 = vadd.f32 %v46, %v66
  %v70 = vadd.f32 %v47, %v66
  %v71 = vadd.f32 %v48, %v66
  %v72 = vadd.f32 %v49, %v66
  %v73 = vadd.f32 %v50, %v66
  %v74 = vadd.f32 %v51, %v66
  %v75 = vadd.f32 %v52, %v66
  %v76 = vadd.f32 %v53, %v66
  %v77 = vadd.f32 %v54, %v66
  %v78 = vadd.f32 %v55, %v66
  %v79 = vadd.f32 %v56, %v66
  %v80 = vadd.f32 %v57, %v66
  %v81 = vadd.f32 %v58, %v66
  %v82 = vadd.f32 %v59, %v66
  %v83 = vadd.f32 %v60, %v66
  %v84 = vld [vmem:[%s1] sm:$0xf]
  %v85 = vld [vmem:[%s2] sm:$0x1]
  %v87 = vlaneseq
  %v88 = vshrl.u32 %v87, 7
  %v89 = vsub.s32 0, %v88
  %v90 = vrot.slane %v85, %v89
  %vm92 = vcmask 31744
  %v94 = vsel %vm92, %v68, 0
  %v97 = vsel %vm92, %v69, 0
  %v100 = vsel %vm92, %v70, 0
  %v103 = vsel %vm92, %v71, 0
  %v106 = vsel %vm92, %v72, 0
  %v109 = vsel %vm92, %v73, 0
  %v112 = vsel %vm92, %v74, 0
  %v115 = vsel %vm92, %v75, 0
  %v118 = vsel %vm92, %v76, 0
  %v121 = vsel %vm92, %v77, 0
  %v124 = vsel %vm92, %v78, 0
  %v127 = vsel %vm92, %v79, 0
  %v130 = vsel %vm92, %v80, 0
  %v133 = vsel %vm92, %v81, 0
  %v136 = vsel %vm92, %v82, 0
  %v139 = vsel %vm92, %v83, 0
  %vm141 = vcmask 1043456
  %v143 = vsel %vm141, %v84, 0
  %145 = vmatprep.subr.mxu0 0.0
  %146 = vmatpush1.msra.mxu0 %v143
  %147 = vmatprep.subr.mxu0 0.0
  %148 = vmatpush1.msra.mxu0 0.0
  %149 = vmatprep.subr.mxu0 0.0
  %150 = vmatpush1.msra.mxu0 0.0
  %151 = vmatprep.subr.mxu0 0.0
  %152 = vmatpush1.msra.mxu0 0.0
  %153 = vmatprep.subr.mxu0 0.0
  %154 = vmatpush1.msra.mxu0 0.0
  %155 = vmatprep.subr.mxu0 0.0
  %156 = vmatpush1.msra.mxu0 0.0
  %157 = vmatprep.subr.mxu0 0.0
  %158 = vmatpush1.msra.mxu0 0.0
  %159 = vmatprep.subr.mxu0 0.0
  %160 = vmatpush1.msra.mxu0 0.0
  %161 = vmatprep.subr.mxu0 0.0
  %162 = vmatpush1.msra.mxu0 0.0
  %163 = vmatprep.subr.mxu0 0.0
  %164 = vmatpush1.msra.mxu0 0.0
  %165 = vmatprep.subr.mxu0 0.0
  %166 = vmatpush1.msra.mxu0 0.0
  %167 = vmatprep.subr.mxu0 0.0
  %168 = vmatpush1.msra.mxu0 0.0
  %169 = vmatprep.subr.mxu0 0.0
  %170 = vmatpush1.msra.mxu0 0.0
  %171 = vmatprep.subr.mxu0 0.0
  %172 = vmatpush1.msra.mxu0 0.0
  %173 = vmatprep.subr.mxu0 0.0
  %174 = vmatpush1.msra.mxu0 0.0
  %175 = vmatprep.subr.mxu0 0.0
  %176 = vmatpush1.msra.mxu0 0.0
  %177 = vmatprep.subr.mxu0 0.0
  %178 = vmatpush1.msra.mxu0 0.0
  %179 = vmatprep.subr.mxu0 0.0
  %180 = vmatpush1.msra.mxu0 0.0
  %181 = vmatprep.subr.mxu0 0.0
  %182 = vmatpush1.msra.mxu0 0.0
  %183 = vmatprep.subr.mxu0 0.0
  %184 = vmatpush1.msra.mxu0 0.0
  %185 = vmatprep.subr.mxu0 0.0
  %186 = vmatpush1.msra.mxu0 0.0
  %187 = vmatprep.subr.mxu0 0.0
  %188 = vmatpush1.msra.mxu0 0.0
  %189 = vmatprep.subr.mxu0 0.0
  %190 = vmatpush1.msra.mxu0 0.0
  %191 = vmatprep.subr.mxu0 0.0
  %192 = vmatpush1.msra.mxu0 0.0
  %193 = vmatprep.subr.mxu0 0.0
  %194 = vmatpush1.msra.mxu0 0.0
  %195 = vmatprep.subr.mxu0 0.0
  %196 = vmatpush1.msra.mxu0 0.0
  %197 = vmatprep.subr.mxu0 0.0
  %198 = vmatpush1.msra.mxu0 0.0
  %199 = vmatprep.subr.mxu0 0.0
  %200 = vmatpush1.msra.mxu0 0.0
  %201 = vmatprep.subr.mxu0 0.0
  %202 = vmatpush1.msra.mxu0 0.0
  %203 = vmatprep.subr.mxu0 0.0
  %204 = vmatpush1.msra.mxu0 0.0
  %205 = vmatprep.subr.mxu0 0.0
  %206 = vmatpush1.msra.mxu0 0.0
  %207 = vmatprep.subr.mxu0 0.0
  %208 = vmatpush1.msra.mxu0 0.0
  %209 = vmatprep.mubr.f32.mxu0 0.0
  %210 = vmatmul.mubr.f32.gmra.mrb[0].mxu0 %v94
  %v211 = vpop.f32.mrb[0].mxu0
  %v212 = vadd.f32 %v90, %v211
  %v213 = vpop.f32.mrb[0].mxu0
  %214 = vmatprep.mubr.f32.mxu0 0.0
  %215 = vmatmul.mubr.f32.gmra.mrb[0].mxu0 %v97
  %v216 = vpop.f32.mrb[0].mxu0
  %v217 = vadd.f32 %v90, %v216
  %v218 = vpop.f32.mrb[0].mxu0
  %219 = vmatprep.mubr.f32.mxu0 0.0
  %220 = vmatmul.mubr.f32.gmra.mrb[0].mxu0 %v100
  %v221 = vpop.f32.mrb[0].mxu0
  %v222 = vadd.f32 %v90, %v221
  %v223 = vpop.f32.mrb[0].mxu0
  %224 = vmatprep.mubr.f32.mxu0 0.0
  %225 = vmatmul.mubr.f32.gmra.mrb[0].mxu0 %v103
  %v226 = vpop.f32.mrb[0].mxu0
  %v227 = vadd.f32 %v90, %v226
  %v228 = vpop.f32.mrb[0].mxu0
  %229 = vmatprep.mubr.f32.mxu0 0.0
  %230 = vmatmul.mubr.f32.gmra.mrb[0].mxu0 %v106
  %v231 = vpop.f32.mrb[0].mxu0
  %v232 = vadd.f32 %v90, %v231
  %v233 = vpop.f32.mrb[0].mxu0
  %234 = vmatprep.mubr.f32.mxu0 0.0
  %235 = vmatmul.mubr.f32.gmra.mrb[0].mxu0 %v109
  %v236 = vpop.f32.mrb[0].mxu0
  %v237 = vadd.f32 %v90, %v236
  %v238 = vpop.f32.mrb[0].mxu0
  %239 = vmatprep.mubr.f32.mxu0 0.0
  %240 = vmatmul.mubr.f32.gmra.mrb[0].mxu0 %v112
  %v241 = vpop.f32.mrb[0].mxu0
  %v242 = vadd.f32 %v90, %v241
  %v243 = vpop.f32.mrb[0].mxu0
  %244 = vmatprep.mubr.f32.mxu0 0.0
  %245 = vmatmul.mubr.f32.gmra.mrb[0].mxu0 %v115
  %v246 = vpop.f32.mrb[0].mxu0
  %v247 = vadd.f32 %v90, %v246
  %v248 = vpop.f32.mrb[0].mxu0
  %249 = vmatprep.mubr.f32.mxu0 0.0
  %250 = vmatmul.mubr.f32.gmra.mrb[0].mxu0 %v118
  %v251 = vpop.f32.mrb[0].mxu0
  %v252 = vadd.f32 %v90, %v251
  %v253 = vpop.f32.mrb[0].mxu0
  %254 = vmatprep.mubr.f32.mxu0 0.0
  %255 = vmatmul.mubr.f32.gmra.mrb[0].mxu0 %v121
  %v256 = vpop.f32.mrb[0].mxu0
  %v257 = vadd.f32 %v90, %v256
  %v258 = vpop.f32.mrb[0].mxu0
  %259 = vmatprep.mubr.f32.mxu0 0.0
  %260 = vmatmul.mubr.f32.gmra.mrb[0].mxu0 %v124
  %v261 = vpop.f32.mrb[0].mxu0
  %v262 = vadd.f32 %v90, %v261
  %v263 = vpop.f32.mrb[0].mxu0
  %264 = vmatprep.mubr.f32.mxu0 0.0
  %265 = vmatmul.mubr.f32.gmra.mrb[0].mxu0 %v127
  %v266 = vpop.f32.mrb[0].mxu0
  %v267 = vadd.f32 %v90, %v266
  %v268 = vpop.f32.mrb[0].mxu0
  %269 = vmatprep.mubr.f32.mxu0 0.0
  %270 = vmatmul.mubr.f32.gmra.mrb[0].mxu0 %v130
  %v271 = vpop.f32.mrb[0].mxu0
  %v272 = vadd.f32 %v90, %v271
  %v273 = vpop.f32.mrb[0].mxu0
  %274 = vmatprep.mubr.f32.mxu0 0.0
  %275 = vmatmul.mubr.f32.gmra.mrb[0].mxu0 %v133
  %v276 = vpop.f32.mrb[0].mxu0
  %v277 = vadd.f32 %v90, %v276
  %v278 = vpop.f32.mrb[0].mxu0
  %279 = vmatprep.mubr.f32.mxu0 0.0
  %280 = vmatmul.mubr.f32.gmra.mrb[0].mxu0 %v136
  %v281 = vpop.f32.mrb[0].mxu0
  %v282 = vadd.f32 %v90, %v281
  %v283 = vpop.f32.mrb[0].mxu0
  %284 = vmatprep.mubr.f32.mxu0 0.0
  %285 = vmatmul.mubr.f32.gmra.mrb[0].mxu0 %v139
  %v286 = vpop.f32.mrb[0].mxu0
  %v287 = vadd.f32 %v90, %v286
  %v288 = vpop.f32.mrb[0].mxu0
  %289 = vdwg.mxu0
  %vm290 = vcmask 130048
  %291 = vst.msk [vmem:[%s5] sm:$0xff] %vm290, %v212
  %292 = vst.msk [vmem:[%s5 + $0x8] sm:$0xff] %vm290, %v217
  %293 = vst.msk [vmem:[%s5 + $0x10] sm:$0xff] %vm290, %v222
  %294 = vst.msk [vmem:[%s5 + $0x18] sm:$0xff] %vm290, %v227
  %295 = vst.msk [vmem:[%s5 + $0x20] sm:$0xff] %vm290, %v232
  %296 = vst.msk [vmem:[%s5 + $0x28] sm:$0xff] %vm290, %v237
  %297 = vst.msk [vmem:[%s5 + $0x30] sm:$0xff] %vm290, %v242
  %298 = vst.msk [vmem:[%s5 + $0x38] sm:$0xff] %vm290, %v247
  %299 = vst.msk [vmem:[%s5 + $0x40] sm:$0xff] %vm290, %v252
  %300 = vst.msk [vmem:[%s5 + $0x48] sm:$0xff] %vm290, %v257
  %301 = vst.msk [vmem:[%s5 + $0x50] sm:$0xff] %vm290, %v262
  %302 = vst.msk [vmem:[%s5 + $0x58] sm:$0xff] %vm290, %v267
  %303 = vst.msk [vmem:[%s5 + $0x60] sm:$0xff] %vm290, %v272
  %304 = vst.msk [vmem:[%s5 + $0x68] sm:$0xff] %vm290, %v277
  %305 = vst.msk [vmem:[%s5 + $0x70] sm:$0xff] %vm290, %v282
  %306 = vst.msk [vmem:[%s5 + $0x78] sm:$0xff] %vm290, %v287
  %s307 = smul.u32 0, 128
  %v308 = vlaneseq
  %v309 = vshrl.u32 %v308, 7
  %v310 = vadd.s32 %v309, 8
  %v311 = vadd.s32 %v309, 16
  %v312 = vadd.s32 %v309, 24
  %v313 = vadd.s32 %v309, 32
  %v314 = vadd.s32 %v309, 40
  %v315 = vadd.s32 %v309, 48
  %v316 = vadd.s32 %v309, 56
  %v317 = vadd.s32 %v309, 64
  %v318 = vadd.s32 %v309, 72
  %v319 = vadd.s32 %v309, 80
  %v320 = vadd.s32 %v309, 88
  %v321 = vadd.s32 %v309, 96
  %v322 = vadd.s32 %v309, 104
  %v323 = vadd.s32 %v309, 112
  %v324 = vadd.s32 %v309, 120
  %v325 = vstv %s307
  %v326 = vadd.s32 %v325, %v309
  %v327 = vadd.s32 %v325, %v310
  %v328 = vadd.s32 %v325, %v311
  %v329 = vadd.s32 %v325, %v312
  %v330 = vadd.s32 %v325, %v313
  %v331 = vadd.s32 %v325, %v314
  %v332 = vadd.s32 %v325, %v315
  %v333 = vadd.s32 %v325, %v316
  %v334 = vadd.s32 %v325, %v317
  %v335 = vadd.s32 %v325, %v318
  %v336 = vadd.s32 %v325, %v319
  %v337 = vadd.s32 %v325, %v320
  %v338 = vadd.s32 %v325, %v321
  %v339 = vadd.s32 %v325, %v322
  %v340 = vadd.s32 %v325, %v323
  %v341 = vadd.s32 %v325, %v324
  %vm342 = vcmp.lt.s32.totalorder %v326, 128
  %vm343 = vcmp.lt.s32.totalorder %v327, 128
  %vm344 = vcmp.lt.s32.totalorder %v328, 128
  %vm345 = vcmp.lt.s32.totalorder %v329, 128
  %vm346 = vcmp.lt.s32.totalorder %v330, 128
  %vm347 = vcmp.lt.s32.totalorder %v331, 128
  %vm348 = vcmp.lt.s32.totalorder %v332, 128
  %vm349 = vcmp.lt.s32.totalorder %v333, 128
  %vm350 = vcmp.lt.s32.totalorder %v334, 128
  %vm351 = vcmp.lt.s32.totalorder %v335, 128
  %vm352 = vcmp.lt.s32.totalorder %v336, 128
  %vm353 = vcmp.lt.s32.totalorder %v337, 128
  %vm354 = vcmp.lt.s32.totalorder %v338, 128
  %vm355 = vcmp.lt.s32.totalorder %v339, 128
  %vm356 = vcmp.lt.s32.totalorder %v340, 128
  %vm357 = vcmp.lt.s32.totalorder %v341, 128
  %v358 = vsel %vm342, 1, 0
  %v359 = vsel %vm343, 1, 0
  %v360 = vsel %vm344, 1, 0
  %v361 = vsel %vm345, 1, 0
  %v362 = vsel %vm346, 1, 0
  %v363 = vsel %vm347, 1, 0
  %v364 = vsel %vm348, 1, 0
  %v365 = vsel %vm349, 1, 0
  %v366 = vsel %vm350, 1, 0
  %v367 = vsel %vm351, 1, 0
  %v368 = vsel %vm352, 1, 0
  %v369 = vsel %vm353, 1, 0
  %v370 = vsel %vm354, 1, 0
  %v371 = vsel %vm355, 1, 0
  %v372 = vsel %vm356, 1, 0
  %v373 = vsel %vm357, 1, 0
  %vm374 = vcmp.eq.s32.totalorder %v358, 1
  %vm375 = vcmp.eq.s32.totalorder %v359, 1
  %vm376 = vcmp.eq.s32.totalorder %v360, 1
  %vm377 = vcmp.eq.s32.totalorder %v361, 1
  %vm378 = vcmp.eq.s32.totalorder %v362, 1
  %vm379 = vcmp.eq.s32.totalorder %v363, 1
  %vm380 = vcmp.eq.s32.totalorder %v364, 1
  %vm381 = vcmp.eq.s32.totalorder %v365, 1
  %vm382 = vcmp.eq.s32.totalorder %v366, 1
  %vm383 = vcmp.eq.s32.totalorder %v367, 1
  %vm384 = vcmp.eq.s32.totalorder %v368, 1
  %vm385 = vcmp.eq.s32.totalorder %v369, 1
  %vm386 = vcmp.eq.s32.totalorder %v370, 1
  %vm387 = vcmp.eq.s32.totalorder %v371, 1
  %vm388 = vcmp.eq.s32.totalorder %v372, 1
  %vm389 = vcmp.eq.s32.totalorder %v373, 1
  %v390 = vsel %vm374, %v212, 0.0
  %v391 = vsel %vm375, %v217, 0.0
  %v392 = vsel %vm376, %v222, 0.0
  %v393 = vsel %vm377, %v227, 0.0
  %v394 = vsel %vm378, %v232, 0.0
  %v395 = vsel %vm379, %v237, 0.0
  %v396 = vsel %vm380, %v242, 0.0
  %v397 = vsel %vm381, %v247, 0.0
  %v398 = vsel %vm382, %v252, 0.0
  %v399 = vsel %vm383, %v257, 0.0
  %v400 = vsel %vm384, %v262, 0.0
  %v401 = vsel %vm385, %v267, 0.0
  %v402 = vsel %vm386, %v272, 0.0
  %v403 = vsel %vm387, %v277, 0.0
  %v404 = vsel %vm388, %v282, 0.0
  %v405 = vsel %vm389, %v287, 0.0
  %v406 = vsel %vm290, %v390, 0.0
  %v407 = vsel %vm290, %v391, 0.0
  %v408 = vadd.f32 %v406, %v407
  %v409 = vsel %vm290, %v392, 0.0
  %v410 = vadd.f32 %v408, %v409
  %v411 = vsel %vm290, %v393, 0.0
  %v412 = vadd.f32 %v410, %v411
  %v413 = vsel %vm290, %v394, 0.0
  %v414 = vadd.f32 %v412, %v413
  %v415 = vsel %vm290, %v395, 0.0
  %v416 = vadd.f32 %v414, %v415
  %v417 = vsel %vm290, %v396, 0.0
  %v418 = vadd.f32 %v416, %v417
  %v419 = vsel %vm290, %v397, 0.0
  %v420 = vadd.f32 %v418, %v419
  %v421 = vsel %vm290, %v398, 0.0
  %v422 = vadd.f32 %v420, %v421
  %v423 = vsel %vm290, %v399, 0.0
  %v424 = vadd.f32 %v422, %v423
  %v425 = vsel %vm290, %v400, 0.0
  %v426 = vadd.f32 %v424, %v425
  %v427 = vsel %vm290, %v401, 0.0
  %v428 = vadd.f32 %v426, %v427
  %v429 = vsel %vm290, %v402, 0.0
  %v430 = vadd.f32 %v428, %v429
  %v431 = vsel %vm290, %v403, 0.0
  %v432 = vadd.f32 %v430, %v431
  %v433 = vsel %vm290, %v404, 0.0
  %v434 = vadd.f32 %v432, %v433
  %v435 = vsel %vm290, %v405, 0.0
  %v436 = vadd.f32 %v434, %v435
  %v437 = vrot.slane %v436, 4
  %v438 = vadd.f32 %v436, %v437
  %v439 = vrot.slane %v438, 2
  %v440 = vadd.f32 %v438, %v439
  %v441 = vrot.slane %v440, 1
  %v442 = vadd.f32 %v440, %v441
  %vm443 = vcmask 122880
  %444 = vst.msk [vmem:[%s6] sm:$0x1] %vm443, %v442
  %v445 = vmul.f32 %v390, %v390
  %v446 = vmul.f32 %v391, %v391
  %v447 = vmul.f32 %v392, %v392
  %v448 = vmul.f32 %v393, %v393
  %v449 = vmul.f32 %v394, %v394
  %v450 = vmul.f32 %v395, %v395
  %v451 = vmul.f32 %v396, %v396
  %v452 = vmul.f32 %v397, %v397
  %v453 = vmul.f32 %v398, %v398
  %v454 = vmul.f32 %v399, %v399
  %v455 = vmul.f32 %v400, %v400
  %v456 = vmul.f32 %v401, %v401
  %v457 = vmul.f32 %v402, %v402
  %v458 = vmul.f32 %v403, %v403
  %v459 = vmul.f32 %v404, %v404
  %v460 = vmul.f32 %v405, %v405
  %v461 = vsel %vm290, %v445, 0.0
  %v462 = vsel %vm290, %v446, 0.0
  %v463 = vadd.f32 %v461, %v462
  %v464 = vsel %vm290, %v447, 0.0
  %v465 = vadd.f32 %v463, %v464
  %v466 = vsel %vm290, %v448, 0.0
  %v467 = vadd.f32 %v465, %v466
  %v468 = vsel %vm290, %v449, 0.0
  %v469 = vadd.f32 %v467, %v468
  %v470 = vsel %vm290, %v450, 0.0
  %v471 = vadd.f32 %v469, %v470
  %v472 = vsel %vm290, %v451, 0.0
  %v473 = vadd.f32 %v471, %v472
  %v474 = vsel %vm290, %v452, 0.0
  %v475 = vadd.f32 %v473, %v474
  %v476 = vsel %vm290, %v453, 0.0
  %v477 = vadd.f32 %v475, %v476
  %v478 = vsel %vm290, %v454, 0.0
  %v479 = vadd.f32 %v477, %v478
  %v480 = vsel %vm290, %v455, 0.0
  %v481 = vadd.f32 %v479, %v480
  %v482 = vsel %vm290, %v456, 0.0
  %v483 = vadd.f32 %v481, %v482
  %v484 = vsel %vm290, %v457, 0.0
  %v485 = vadd.f32 %v483, %v484
  %v486 = vsel %vm290, %v458, 0.0
  %v487 = vadd.f32 %v485, %v486
  %v488 = vsel %vm290, %v459, 0.0
  %v489 = vadd.f32 %v487, %v488
  %v490 = vsel %vm290, %v460, 0.0
  %v491 = vadd.f32 %v489, %v490
  %v492 = vrot.slane %v491, 4
  %v493 = vadd.f32 %v491, %v492
  %v494 = vrot.slane %v493, 2
  %v495 = vadd.f32 %v493, %v494
  %v496 = vrot.slane %v495, 1
  %v497 = vadd.f32 %v495, %v496
  %498 = vst.msk [vmem:[%s6 + $0x1] sm:$0x1] %vm443, %v497
  // Predicated region
  $region22: #{resblock_forward.8} parent=0 // pred_check
    _
  $region23: #{resblock_forward.8} parent=0 // pred_check_branch
    %500 = sbr.rel (0) target = $region25
  $region24: #{resblock_forward.8} parent=0 // pred_region
    _
  $region25: #{resblock_forward.8} parent=0 // pred_fallthru
    _
  // Predicated region
  $region26: #{resblock_forward.8} parent=0 // pred_check
    _
  $region27: #{resblock_forward.8} parent=0 // pred_check_branch
    %502 = sbr.rel (0) target = $region29
  $region28: #{resblock_forward.8} parent=0 // pred_region
    _
  $region29: #{resblock_forward.8} parent=0 // pred_fallthru
    _
  // Predicated region
  $region30: #{resblock_forward.8} parent=0 // pred_check
    _
  $region31: #{resblock_forward.8} parent=0 // pred_check_branch
    %504 = sbr.rel (0) target = $region33
  $region32: #{resblock_forward.8} parent=0 // pred_region
    _
  $region33: #{resblock_forward.8} parent=0 // pred_fallthru
    _
  // Predicated region
  $region34: #{resblock_forward.8} parent=0 // pred_check
    _
  $region35: #{resblock_forward.8} parent=0 // pred_check_branch
    %506 = sbr.rel (0) target = $region37
  $region36: #{resblock_forward.8} parent=0 // pred_region
    _
  $region37: #{resblock_forward.8} parent=0 // pred_fallthru
    _

</llo_original>
